<compile_context>
chip_gen: v7x
topology: tpu7x:2x2x1
jax: 0.10.0
libtpu: 0.0.40
codegen_flags: <defaults>
</compile_context>

<pallas_src>
import functools

import jax
import jax.numpy as jnp
from jax import lax
from jax.experimental import pallas as pl
from jax.experimental.pallas import tpu as pltpu

NEG_SLOPE = 0.01                 # F.leaky_relu default
MXU_DTYPE = jnp.float32          # bf16 on v6e/v7x when batch is scaled

CONFIG = {
    "conv1": {"out_channels": 8, "kernel_size": 3, "stride": 1, "padding": 1},
    "conv2": {"in_channels": 8, "out_channels": 16, "kernel_size": 3,
              "stride": 1, "padding": 1},
    "conv3": {"in_channels": 16, "out_channels": 16, "kernel_size": 3,
              "stride": 1, "padding": 1},
}
STATE_CHANNELS = 1
ACTION_NUMS = 4
SPATIAL = 16
FC_IN = CONFIG["conv3"]["out_channels"] * SPATIAL * SPATIAL   # 4096
C1_PAD = 8                       # conv1 input channels padded to f32 sublane tile

# 3x3 taps in (kh, kw) order -> offsets (di, dj) = (kh-1, kw-1); p = kh*3 + kw.
_TAPS = tuple((di, dj) for di in (-1, 0, 1) for dj in (-1, 0, 1))

_VMEM = pl.BlockSpec(memory_space=pltpu.MemorySpace.VMEM)


# ----------------------------------------------------------------------------
# Fused kernel: conv1 -> conv2 -> conv3 -> dueling head
# ----------------------------------------------------------------------------
def _fused_forward_kernel(x_ref, mask_ref, w1_ref, b1_ref, w2_ref, b2_ref,
                          w3_ref, b3_ref, wt_ref, bh_ref, sel_ref,
                          o_ref, a3_scr, *, width):
    total = x_ref.shape[-1]      # N * H * W (lane-dense, multiple of 128)

    def conv3x3_lrelu(act, w_ref, b_ref):
        """act: (C_in, total) -> leaky_relu(conv3x3(act) + b): (C_out, total)."""
        pieces = []
        for p, (di, dj) in enumerate(_TAPS):
            delta = di * width + dj
            if delta == 0:
                pieces.append(act)                       # centre tap: no shift/mask
            else:
                # In-register lane rotation (XLU); wrapped / cross-image lanes
                # are exactly the lanes zeroed by the precomputed 0/1 mask.
                shifted = pltpu.roll(act, (-delta) % total, 1)
                pieces.append(shifted * mask_ref[pl.ds(p, 1), :])
        # One fused im2col matmul per layer (K = 9 * C_in).
        slab = jnp.concatenate(pieces, axis=0)           # (9*C_in, total)
        acc = jnp.dot(w_ref[...].astype(MXU_DTYPE), slab.astype(MXU_DTYPE),
                      preferred_element_type=jnp.float32)
        acc = acc + b_ref[...]                           # (C_out, 1) bias
        return jnp.maximum(acc, NEG_SLOPE * acc)         # leaky_relu

    a1 = conv3x3_lrelu(x_ref[...], w1_ref, b1_ref)       # (8,  total)
    a2 = conv3x3_lrelu(a1, w2_ref, b2_ref)               # (16, total)
    a3 = conv3x3_lrelu(a2, w3_ref, b3_ref)               # (16, total)

    # ---- dueling head (fc1 advantage + val merged; one selector matmul) ----
    a3_scr[...] = a3                                     # (C3, total) row source
    c3 = a3_scr.shape[0]
    heads = wt_ref.shape[1]                              # action_nums + 1
    p_acc = jnp.zeros((heads, total), jnp.float32)
    for c in range(c3):                                  # per-lane C3 contraction
        p_acc = p_acc + wt_ref[c] * a3_scr[pl.ds(c, 1), :]
    # Reduce lanes + separate batches with one matmul vs block-diag ones.
    q = jnp.dot(p_acc, sel_ref[...], preferred_element_type=jnp.float32)
    q = q + bh_ref[...]                                  # (heads, N)

    a_num = heads - 1
    n_batch = q.shape[1]
    adv = q[:a_num, :]                                   # (A, N)
    val = q[a_num:heads, :]                              # (1, N)
    # PyTorch: advantage_function.mean() is a global mean over batch+actions.
    mean_adv = jnp.sum(adv) / (a_num * n_batch)
    o_ref[...] = val + adv - mean_adv                    # (A, N); .T in wrapper


# ----------------------------------------------------------------------------
# Parameter init (xavier_normal weights, zero biases) + host-side repacking
# ----------------------------------------------------------------------------
def xavier_normal(key, shape, fan_in, fan_out):
    std = (2.0 / (fan_in + fan_out)) ** 0.5
    return std * jax.random.normal(key, shape, dtype=jnp.float32)


def init_params(key):
    keys = jax.random.split(key, 5)
    p = {}
    c1o, k1 = CONFIG["conv1"]["out_channels"], CONFIG["conv1"]["kernel_size"]
    p["w1"] = xavier_normal(keys[0], (c1o, STATE_CHANNELS, k1, k1),
                            STATE_CHANNELS * k1 * k1, c1o * k1 * k1)
    p["b1"] = jnp.zeros((c1o,), jnp.float32)
    c2i, c2o, k2 = (CONFIG["conv2"]["in_channels"],
                    CONFIG["conv2"]["out_channels"],
                    CONFIG["conv2"]["kernel_size"])
    p["w2"] = xavier_normal(keys[1], (c2o, c2i, k2, k2),
                            c2i * k2 * k2, c2o * k2 * k2)
    p["b2"] = jnp.zeros((c2o,), jnp.float32)
    c3i, c3o, k3 = (CONFIG["conv3"]["in_channels"],
                    CONFIG["conv3"]["out_channels"],
                    CONFIG["conv3"]["kernel_size"])
    p["w3"] = xavier_normal(keys[2], (c3o, c3i, k3, k3),
                            c3i * k3 * k3, c3o * k3 * k3)
    p["b3"] = jnp.zeros((c3o,), jnp.float32)
    p["w_fc1"] = xavier_normal(keys[3], (FC_IN, ACTION_NUMS), FC_IN, ACTION_NUMS)
    p["b_fc1"] = jnp.zeros((ACTION_NUMS,), jnp.float32)
    p["w_val"] = xavier_normal(keys[4], (FC_IN, 1), FC_IN, 1)
    p["b_val"] = jnp.zeros((1,), jnp.float32)
    return p


def prepare_params(params):
    """One-time host-side repack into the layouts the fused kernel consumes."""
    def conv_w(w, c_in_pad):
        # (O, I, 3, 3) -> (O, 9*I_pad), column index = (kh*3+kw)*I_pad + i.
        o, i, kh, kw = w.shape
        if i < c_in_pad:
            w = jnp.concatenate(
                [w, jnp.zeros((o, c_in_pad - i, kh, kw), w.dtype)], axis=1)
        return jnp.transpose(w, (0, 2, 3, 1)).reshape(o, kh * kw * c_in_pad)

    c3 = CONFIG["conv3"]["out_channels"]
    hw = SPATIAL * SPATIAL
    heads = ACTION_NUMS + 1
    # fc1 (advantage) + val merged; (C3, H*W) flattening matches x3.view(N,-1).
    w_head = jnp.concatenate([params["w_fc1"], params["w_val"]], axis=1)
    w_head = w_head.reshape(c3, hw, heads).transpose(0, 2, 1)   # (C3, heads, hw)
    b_head = jnp.concatenate([params["b_fc1"], params["b_val"]]).reshape(heads, 1)
    return {
        "w1": conv_w(params["w1"], C1_PAD),
        "b1": params["b1"].reshape(-1, 1),
        "w2": conv_w(params["w2"], CONFIG["conv2"]["in_channels"]),
        "b2": params["b2"].reshape(-1, 1),
        "w3": conv_w(params["w3"], CONFIG["conv3"]["in_channels"]),
        "b3": params["b3"].reshape(-1, 1),
        "w_head": w_head, "b_head": b_head,
    }


# ----------------------------------------------------------------------------
# Forward pass (single fused pallas_call) and pure-JAX reference
# ----------------------------------------------------------------------------
@jax.jit
def extrinsic_forward(prep, x):
    n, c0, hh, ww = x.shape
    assert c0 == STATE_CHANNELS and hh == SPATIAL and ww == SPATIAL
    hw = hh * ww
    total = n * hw
    # Lane-dense layout assumptions (rec: assert instead of silently degrading).
    assert total % 128 == 0, "N*H*W must be a multiple of 128 (lane-dense layout)"

    # (N, C, H, W) -> channels-major (C_pad, N*H*W); conv1 channels padded to 8.
    x0 = jnp.transpose(x, (1, 0, 2, 3)).reshape(c0, total)
    x0 = jnp.concatenate(
        [x0, jnp.zeros((C1_PAD - c0, total), x0.dtype)], axis=0)

    # Per-tap validity masks (padding=1 + image/batch boundaries), shared by
    # all three conv layers; computed once here, consumed as a (9, total) input.
    m = jnp.arange(total, dtype=jnp.int32)[None, :]
    row = (m // ww) % hh
    col = m % ww
    masks = []
    for di, dj in _TAPS:
        valid = ((row + di >= 0) & (row + di < hh) &
                 (col + dj >= 0) & (col + dj < ww))
        masks.append(valid.astype(jnp.float32))
    tap_mask = jnp.concatenate(masks, axis=0)                    # (9, total)

    # Head weight tiled across the batch + block-diagonal batch selector.
    wt = jnp.tile(prep["w_head"], (1, 1, n))                     # (C3, heads, total)
    sel = (m[0][:, None] // hw == jnp.arange(n)[None, :]).astype(jnp.float32)

    c3 = prep["w_head"].shape[0]
    kernel = functools.partial(_fused_forward_kernel, width=ww)
    out = pl.pallas_call(
        kernel,
        out_shape=jax.ShapeDtypeStruct((ACTION_NUMS, n), jnp.float32),
        in_specs=[_VMEM] * 11,
        out_specs=_VMEM,
        scratch_shapes=[pltpu.VMEM((c3, total), jnp.float32)],
    )(x0, tap_mask, prep["w1"], prep["b1"], prep["w2"], prep["b2"],
      prep["w3"], prep["b3"], wt, prep["b_head"], sel)
    return out.T                                                 # (N, A)


def extrinsic_forward_ref(params, x):
    """Pure-JAX reference using lax.conv, for correctness checking."""
    def conv(h, w, b, padding):
        y = lax.conv_general_dilated(
            h, w, window_strides=(1, 1),
            padding=[(padding, padding), (padding, padding)],
            dimension_numbers=("NCHW", "OIHW", "NCHW"))
        return y + b[None, :, None, None]

    def lrelu(v):
        return jnp.where(v >= 0, v, NEG_SLOPE * v)

    x1 = lrelu(conv(x, params["w1"], params["b1"], CONFIG["conv1"]["padding"]))
    x2 = lrelu(conv(x1, params["w2"], params["b2"], CONFIG["conv2"]["padding"]))
    x3 = lrelu(conv(x2, params["w3"], params["b3"], CONFIG["conv3"]["padding"]))
    flat = x3.reshape(x.shape[0], -1)
    adv = flat @ params["w_fc1"] + params["b_fc1"]
    val = flat @ params["w_val"] + params["b_val"]
    return val + (adv - adv.mean())


if __name__ == "__main__":
    key = jax.random.PRNGKey(0)
    k_param, k_x = jax.random.split(key)
    params = init_params(k_param)
    prep = prepare_params(params)
    x = jax.random.normal(k_x, (2, STATE_CHANNELS, SPATIAL, SPATIAL),
                          dtype=jnp.float32)

    out = jax.block_until_ready(extrinsic_forward(prep, x))
    ref = jax.block_until_ready(extrinsic_forward_ref(params, x))

    assert out.shape == (2, ACTION_NUMS), out.shape
    max_err = float(jnp.max(jnp.abs(out - ref)))
    assert jnp.allclose(out, ref, atol=3e-3, rtol=3e-3), f"max err {max_err}"

    print("KERNEL_OK")
</pallas_src>

<mosaic_0001>
module attributes {stable_mosaic.version = 11 : i64} {
  func.func @_fused_forward_kernel(%arg0: memref<8x512xf32, #tpu.memory_space<vmem>>, %arg1: memref<9x512xf32, #tpu.memory_space<vmem>>, %arg2: memref<8x72xf32, #tpu.memory_space<vmem>>, %arg3: memref<8x1xf32, #tpu.memory_space<vmem>>, %arg4: memref<16x72xf32, #tpu.memory_space<vmem>>, %arg5: memref<16x1xf32, #tpu.memory_space<vmem>>, %arg6: memref<16x144xf32, #tpu.memory_space<vmem>>, %arg7: memref<16x1xf32, #tpu.memory_space<vmem>>, %arg8: memref<16x5x512xf32, #tpu.memory_space<vmem>>, %arg9: memref<5x1xf32, #tpu.memory_space<vmem>>, %arg10: memref<512x2xf32, #tpu.memory_space<vmem>>, %arg11: memref<4x2xf32, #tpu.memory_space<vmem>>, %arg12: memref<16x512xf32, #tpu.memory_space<vmem>>) attributes {dimension_semantics = [], scalar_prefetch = 0 : i64, scratch_operands = 1 : i64, tpu.core_type = #tpu.core_type<tc>} {
    %c0 = arith.constant 0 : index
    %c0_0 = arith.constant 0 : index
    %0 = vector.load %arg0[%c0, %c0_0] : memref<8x512xf32, #tpu.memory_space<vmem>>, vector<8x512xf32>
    %c17_i32 = arith.constant 17 : i32
    %1 = tpu.dynamic_rotate %0 by %c17_i32 dim 1 : vector<8x512xf32>, i32 -> vector<8x512xf32>
    %c0_1 = arith.constant 0 : index
    %c0_2 = arith.constant 0 : index
    %2 = vector.load %arg1[%c0_1, %c0_2] : memref<9x512xf32, #tpu.memory_space<vmem>>, vector<1x512xf32>
    %3 = vector.broadcast %2 : vector<1x512xf32> to vector<8x512xf32>
    %4 = arith.mulf %1, %3 : vector<8x512xf32>
    %c16_i32 = arith.constant 16 : i32
    %5 = tpu.dynamic_rotate %0 by %c16_i32 dim 1 : vector<8x512xf32>, i32 -> vector<8x512xf32>
    %c1 = arith.constant 1 : index
    %c0_3 = arith.constant 0 : index
    %6 = vector.load %arg1[%c1, %c0_3] : memref<9x512xf32, #tpu.memory_space<vmem>>, vector<1x512xf32>
    %7 = vector.broadcast %6 : vector<1x512xf32> to vector<8x512xf32>
    %8 = arith.mulf %5, %7 : vector<8x512xf32>
    %c15_i32 = arith.constant 15 : i32
    %9 = tpu.dynamic_rotate %0 by %c15_i32 dim 1 : vector<8x512xf32>, i32 -> vector<8x512xf32>
    %c2 = arith.constant 2 : index
    %c0_4 = arith.constant 0 : index
    %10 = vector.load %arg1[%c2, %c0_4] : memref<9x512xf32, #tpu.memory_space<vmem>>, vector<1x512xf32>
    %11 = vector.broadcast %10 : vector<1x512xf32> to vector<8x512xf32>
    %12 = arith.mulf %9, %11 : vector<8x512xf32>
    %c1_i32 = arith.constant 1 : i32
    %13 = tpu.dynamic_rotate %0 by %c1_i32 dim 1 : vector<8x512xf32>, i32 -> vector<8x512xf32>
    %c3 = arith.constant 3 : index
    %c0_5 = arith.constant 0 : index
    %14 = vector.load %arg1[%c3, %c0_5] : memref<9x512xf32, #tpu.memory_space<vmem>>, vector<1x512xf32>
    %15 = vector.broadcast %14 : vector<1x512xf32> to vector<8x512xf32>
    %16 = arith.mulf %13, %15 : vector<8x512xf32>
    %c511_i32 = arith.constant 511 : i32
    %17 = tpu.dynamic_rotate %0 by %c511_i32 dim 1 : vector<8x512xf32>, i32 -> vector<8x512xf32>
    %c5 = arith.constant 5 : index
    %c0_6 = arith.constant 0 : index
    %18 = vector.load %arg1[%c5, %c0_6] : memref<9x512xf32, #tpu.memory_space<vmem>>, vector<1x512xf32>
    %19 = vector.broadcast %18 : vector<1x512xf32> to vector<8x512xf32>
    %20 = arith.mulf %17, %19 : vector<8x512xf32>
    %c497_i32 = arith.constant 497 : i32
    %21 = tpu.dynamic_rotate %0 by %c497_i32 dim 1 : vector<8x512xf32>, i32 -> vector<8x512xf32>
    %c6 = arith.constant 6 : index
    %c0_7 = arith.constant 0 : index
    %22 = vector.load %arg1[%c6, %c0_7] : memref<9x512xf32, #tpu.memory_space<vmem>>, vector<1x512xf32>
    %23 = vector.broadcast %22 : vector<1x512xf32> to vector<8x512xf32>
    %24 = arith.mulf %21, %23 : vector<8x512xf32>
    %c496_i32 = arith.constant 496 : i32
    %25 = tpu.dynamic_rotate %0 by %c496_i32 dim 1 : vector<8x512xf32>, i32 -> vector<8x512xf32>
    %c7 = arith.constant 7 : index
    %c0_8 = arith.constant 0 : index
    %26 = vector.load %arg1[%c7, %c0_8] : memref<9x512xf32, #tpu.memory_space<vmem>>, vector<1x512xf32>
    %27 = vector.broadcast %26 : vector<1x512xf32> to vector<8x512xf32>
    %28 = arith.mulf %25, %27 : vector<8x512xf32>
    %c495_i32 = arith.constant 495 : i32
    %29 = tpu.dynamic_rotate %0 by %c495_i32 dim 1 : vector<8x512xf32>, i32 -> vector<8x512xf32>
    %c8 = arith.constant 8 : index
    %c0_9 = arith.constant 0 : index
    %30 = vector.load %arg1[%c8, %c0_9] : memref<9x512xf32, #tpu.memory_space<vmem>>, vector<1x512xf32>
    %31 = vector.broadcast %30 : vector<1x512xf32> to vector<8x512xf32>
    %32 = arith.mulf %29, %31 : vector<8x512xf32>
    %33 = tpu.concatenate %4, %8, %12, %16, %0, %20, %24, %28, %32 in 0 : vector<8x512xf32>, vector<8x512xf32>, vector<8x512xf32>, vector<8x512xf32>, vector<8x512xf32>, vector<8x512xf32>, vector<8x512xf32>, vector<8x512xf32>, vector<8x512xf32> -> vector<72x512xf32>
    %c0_10 = arith.constant 0 : index
    %c0_11 = arith.constant 0 : index
    %34 = vector.load %arg2[%c0_10, %c0_11] : memref<8x72xf32, #tpu.memory_space<vmem>>, vector<8x72xf32>
    %cst = arith.constant dense<0.000000e+00> : vector<8x512xf32>
    %35 = tpu.matmul %34, %33, %cst {dimension_numbers = #tpu.dot_dimension_numbers<[1], [0], [0], [1], [0, 0, 1, 1], [], []>} : vector<8x72xf32>, vector<72x512xf32>, vector<8x512xf32> -> vector<8x512xf32>
    %c0_12 = arith.constant 0 : index
    %c0_13 = arith.constant 0 : index
    %36 = vector.load %arg3[%c0_12, %c0_13] : memref<8x1xf32, #tpu.memory_space<vmem>>, vector<8x1xf32>
    %37 = vector.broadcast %36 : vector<8x1xf32> to vector<8x512xf32>
    %38 = arith.addf %35, %37 : vector<8x512xf32>
    %cst_14 = arith.constant 0.00999999977 : f32
    %39 = vector.broadcast %cst_14 : f32 to vector<8x512xf32>
    %40 = arith.mulf %39, %38 : vector<8x512xf32>
    %41 = arith.maximumf %38, %40 : vector<8x512xf32>
    %c17_i32_15 = arith.constant 17 : i32
    %42 = tpu.dynamic_rotate %41 by %c17_i32_15 dim 1 : vector<8x512xf32>, i32 -> vector<8x512xf32>
    %c0_16 = arith.constant 0 : index
    %c0_17 = arith.constant 0 : index
    %43 = vector.load %arg1[%c0_16, %c0_17] : memref<9x512xf32, #tpu.memory_space<vmem>>, vector<1x512xf32>
    %44 = vector.broadcast %43 : vector<1x512xf32> to vector<8x512xf32>
    %45 = arith.mulf %42, %44 : vector<8x512xf32>
    %c16_i32_18 = arith.constant 16 : i32
    %46 = tpu.dynamic_rotate %41 by %c16_i32_18 dim 1 : vector<8x512xf32>, i32 -> vector<8x512xf32>
    %c1_19 = arith.constant 1 : index
    %c0_20 = arith.constant 0 : index
    %47 = vector.load %arg1[%c1_19, %c0_20] : memref<9x512xf32, #tpu.memory_space<vmem>>, vector<1x512xf32>
    %48 = vector.broadcast %47 : vector<1x512xf32> to vector<8x512xf32>
    %49 = arith.mulf %46, %48 : vector<8x512xf32>
    %c15_i32_21 = arith.constant 15 : i32
    %50 = tpu.dynamic_rotate %41 by %c15_i32_21 dim 1 : vector<8x512xf32>, i32 -> vector<8x512xf32>
    %c2_22 = arith.constant 2 : index
    %c0_23 = arith.constant 0 : index
    %51 = vector.load %arg1[%c2_22, %c0_23] : memref<9x512xf32, #tpu.memory_space<vmem>>, vector<1x512xf32>
    %52 = vector.broadcast %51 : vector<1x512xf32> to vector<8x512xf32>
    %53 = arith.mulf %50, %52 : vector<8x512xf32>
    %c1_i32_24 = arith.constant 1 : i32
    %54 = tpu.dynamic_rotate %41 by %c1_i32_24 dim 1 : vector<8x512xf32>, i32 -> vector<8x512xf32>
    %c3_25 = arith.constant 3 : index
    %c0_26 = arith.constant 0 : index
    %55 = vector.load %arg1[%c3_25, %c0_26] : memref<9x512xf32, #tpu.memory_space<vmem>>, vector<1x512xf32>
    %56 = vector.broadcast %55 : vector<1x512xf32> to vector<8x512xf32>
    %57 = arith.mulf %54, %56 : vector<8x512xf32>
    %c511_i32_27 = arith.constant 511 : i32
    %58 = tpu.dynamic_rotate %41 by %c511_i32_27 dim 1 : vector<8x512xf32>, i32 -> vector<8x512xf32>
    %c5_28 = arith.constant 5 : index
    %c0_29 = arith.constant 0 : index
    %59 = vector.load %arg1[%c5_28, %c0_29] : memref<9x512xf32, #tpu.memory_space<vmem>>, vector<1x512xf32>
    %60 = vector.broadcast %59 : vector<1x512xf32> to vector<8x512xf32>
    %61 = arith.mulf %58, %60 : vector<8x512xf32>
    %c497_i32_30 = arith.constant 497 : i32
    %62 = tpu.dynamic_rotate %41 by %c497_i32_30 dim 1 : vector<8x512xf32>, i32 -> vector<8x512xf32>
    %c6_31 = arith.constant 6 : index
    %c0_32 = arith.constant 0 : index
    %63 = vector.load %arg1[%c6_31, %c0_32] : memref<9x512xf32, #tpu.memory_space<vmem>>, vector<1x512xf32>
    %64 = vector.broadcast %63 : vector<1x512xf32> to vector<8x512xf32>
    %65 = arith.mulf %62, %64 : vector<8x512xf32>
    %c496_i32_33 = arith.constant 496 : i32
    %66 = tpu.dynamic_rotate %41 by %c496_i32_33 dim 1 : vector<8x512xf32>, i32 -> vector<8x512xf32>
    %c7_34 = arith.constant 7 : index
    %c0_35 = arith.constant 0 : index
    %67 = vector.load %arg1[%c7_34, %c0_35] : memref<9x512xf32, #tpu.memory_space<vmem>>, vector<1x512xf32>
    %68 = vector.broadcast %67 : vector<1x512xf32> to vector<8x512xf32>
    %69 = arith.mulf %66, %68 : vector<8x512xf32>
    %c495_i32_36 = arith.constant 495 : i32
    %70 = tpu.dynamic_rotate %41 by %c495_i32_36 dim 1 : vector<8x512xf32>, i32 -> vector<8x512xf32>
    %c8_37 = arith.constant 8 : index
    %c0_38 = arith.constant 0 : index
    %71 = vector.load %arg1[%c8_37, %c0_38] : memref<9x512xf32, #tpu.memory_space<vmem>>, vector<1x512xf32>
    %72 = vector.broadcast %71 : vector<1x512xf32> to vector<8x512xf32>
    %73 = arith.mulf %70, %72 : vector<8x512xf32>
    %74 = tpu.concatenate %45, %49, %53, %57, %41, %61, %65, %69, %73 in 0 : vector<8x512xf32>, vector<8x512xf32>, vector<8x512xf32>, vector<8x512xf32>, vector<8x512xf32>, vector<8x512xf32>, vector<8x512xf32>, vector<8x512xf32>, vector<8x512xf32> -> vector<72x512xf32>
    %c0_39 = arith.constant 0 : index
    %c0_40 = arith.constant 0 : index
    %75 = vector.load %arg4[%c0_39, %c0_40] : memref<16x72xf32, #tpu.memory_space<vmem>>, vector<16x72xf32>
    %cst_41 = arith.constant dense<0.000000e+00> : vector<16x512xf32>
    %76 = tpu.matmul %75, %74, %cst_41 {dimension_numbers = #tpu.dot_dimension_numbers<[1], [0], [0], [1], [0, 0, 1, 1], [], []>} : vector<16x72xf32>, vector<72x512xf32>, vector<16x512xf32> -> vector<16x512xf32>
    %c0_42 = arith.constant 0 : index
    %c0_43 = arith.constant 0 : index
    %77 = vector.load %arg5[%c0_42, %c0_43] : memref<16x1xf32, #tpu.memory_space<vmem>>, vector<16x1xf32>
    %78 = vector.broadcast %77 : vector<16x1xf32> to vector<16x512xf32>
    %79 = arith.addf %76, %78 : vector<16x512xf32>
    %cst_44 = arith.constant 0.00999999977 : f32
    %80 = vector.broadcast %cst_44 : f32 to vector<16x512xf32>
    %81 = arith.mulf %80, %79 : vector<16x512xf32>
    %82 = arith.maximumf %79, %81 : vector<16x512xf32>
    %c17_i32_45 = arith.constant 17 : i32
    %83 = tpu.dynamic_rotate %82 by %c17_i32_45 dim 1 : vector<16x512xf32>, i32 -> vector<16x512xf32>
    %c0_46 = arith.constant 0 : index
    %c0_47 = arith.constant 0 : index
    %84 = vector.load %arg1[%c0_46, %c0_47] : memref<9x512xf32, #tpu.memory_space<vmem>>, vector<1x512xf32>
    %85 = vector.broadcast %84 : vector<1x512xf32> to vector<16x512xf32>
    %86 = arith.mulf %83, %85 : vector<16x512xf32>
    %c16_i32_48 = arith.constant 16 : i32
    %87 = tpu.dynamic_rotate %82 by %c16_i32_48 dim 1 : vector<16x512xf32>, i32 -> vector<16x512xf32>
    %c1_49 = arith.constant 1 : index
    %c0_50 = arith.constant 0 : index
    %88 = vector.load %arg1[%c1_49, %c0_50] : memref<9x512xf32, #tpu.memory_space<vmem>>, vector<1x512xf32>
    %89 = vector.broadcast %88 : vector<1x512xf32> to vector<16x512xf32>
    %90 = arith.mulf %87, %89 : vector<16x512xf32>
    %c15_i32_51 = arith.constant 15 : i32
    %91 = tpu.dynamic_rotate %82 by %c15_i32_51 dim 1 : vector<16x512xf32>, i32 -> vector<16x512xf32>
    %c2_52 = arith.constant 2 : index
    %c0_53 = arith.constant 0 : index
    %92 = vector.load %arg1[%c2_52, %c0_53] : memref<9x512xf32, #tpu.memory_space<vmem>>, vector<1x512xf32>
    %93 = vector.broadcast %92 : vector<1x512xf32> to vector<16x512xf32>
    %94 = arith.mulf %91, %93 : vector<16x512xf32>
    %c1_i32_54 = arith.constant 1 : i32
    %95 = tpu.dynamic_rotate %82 by %c1_i32_54 dim 1 : vector<16x512xf32>, i32 -> vector<16x512xf32>
    %c3_55 = arith.constant 3 : index
    %c0_56 = arith.constant 0 : index
    %96 = vector.load %arg1[%c3_55, %c0_56] : memref<9x512xf32, #tpu.memory_space<vmem>>, vector<1x512xf32>
    %97 = vector.broadcast %96 : vector<1x512xf32> to vector<16x512xf32>
    %98 = arith.mulf %95, %97 : vector<16x512xf32>
    %c511_i32_57 = arith.constant 511 : i32
    %99 = tpu.dynamic_rotate %82 by %c511_i32_57 dim 1 : vector<16x512xf32>, i32 -> vector<16x512xf32>
    %c5_58 = arith.constant 5 : index
    %c0_59 = arith.constant 0 : index
    %100 = vector.load %arg1[%c5_58, %c0_59] : memref<9x512xf32, #tpu.memory_space<vmem>>, vector<1x512xf32>
    %101 = vector.broadcast %100 : vector<1x512xf32> to vector<16x512xf32>
    %102 = arith.mulf %99, %101 : vector<16x512xf32>
    %c497_i32_60 = arith.constant 497 : i32
    %103 = tpu.dynamic_rotate %82 by %c497_i32_60 dim 1 : vector<16x512xf32>, i32 -> vector<16x512xf32>
    %c6_61 = arith.constant 6 : index
    %c0_62 = arith.constant 0 : index
    %104 = vector.load %arg1[%c6_61, %c0_62] : memref<9x512xf32, #tpu.memory_space<vmem>>, vector<1x512xf32>
    %105 = vector.broadcast %104 : vector<1x512xf32> to vector<16x512xf32>
    %106 = arith.mulf %103, %105 : vector<16x512xf32>
    %c496_i32_63 = arith.constant 496 : i32
    %107 = tpu.dynamic_rotate %82 by %c496_i32_63 dim 1 : vector<16x512xf32>, i32 -> vector<16x512xf32>
    %c7_64 = arith.constant 7 : index
    %c0_65 = arith.constant 0 : index
    %108 = vector.load %arg1[%c7_64, %c0_65] : memref<9x512xf32, #tpu.memory_space<vmem>>, vector<1x512xf32>
    %109 = vector.broadcast %108 : vector<1x512xf32> to vector<16x512xf32>
    %110 = arith.mulf %107, %109 : vector<16x512xf32>
    %c495_i32_66 = arith.constant 495 : i32
    %111 = tpu.dynamic_rotate %82 by %c495_i32_66 dim 1 : vector<16x512xf32>, i32 -> vector<16x512xf32>
    %c8_67 = arith.constant 8 : index
    %c0_68 = arith.constant 0 : index
    %112 = vector.load %arg1[%c8_67, %c0_68] : memref<9x512xf32, #tpu.memory_space<vmem>>, vector<1x512xf32>
    %113 = vector.broadcast %112 : vector<1x512xf32> to vector<16x512xf32>
    %114 = arith.mulf %111, %113 : vector<16x512xf32>
    %115 = tpu.concatenate %86, %90, %94, %98, %82, %102, %106, %110, %114 in 0 : vector<16x512xf32>, vector<16x512xf32>, vector<16x512xf32>, vector<16x512xf32>, vector<16x512xf32>, vector<16x512xf32>, vector<16x512xf32>, vector<16x512xf32>, vector<16x512xf32> -> vector<144x512xf32>
    %c0_69 = arith.constant 0 : index
    %c0_70 = arith.constant 0 : index
    %116 = vector.load %arg6[%c0_69, %c0_70] : memref<16x144xf32, #tpu.memory_space<vmem>>, vector<16x144xf32>
    %cst_71 = arith.constant dense<0.000000e+00> : vector<16x512xf32>
    %117 = tpu.matmul %116, %115, %cst_71 {dimension_numbers = #tpu.dot_dimension_numbers<[1], [0], [0], [1], [0, 0, 1, 1], [], []>} : vector<16x144xf32>, vector<144x512xf32>, vector<16x512xf32> -> vector<16x512xf32>
    %c0_72 = arith.constant 0 : index
    %c0_73 = arith.constant 0 : index
    %118 = vector.load %arg7[%c0_72, %c0_73] : memref<16x1xf32, #tpu.memory_space<vmem>>, vector<16x1xf32>
    %119 = vector.broadcast %118 : vector<16x1xf32> to vector<16x512xf32>
    %120 = arith.addf %117, %119 : vector<16x512xf32>
    %cst_74 = arith.constant 0.00999999977 : f32
    %121 = vector.broadcast %cst_74 : f32 to vector<16x512xf32>
    %122 = arith.mulf %121, %120 : vector<16x512xf32>
    %123 = arith.maximumf %120, %122 : vector<16x512xf32>
    %c0_75 = arith.constant 0 : index
    %c0_76 = arith.constant 0 : index
    %124 = vector.load %arg12[%c0_75, %c0_76] : memref<16x512xf32, #tpu.memory_space<vmem>>, vector<16x512xf32>
    tpu.vector_store %arg12[%c0_75, %c0_76], %123 {strides = array<i32>} : memref<16x512xf32, #tpu.memory_space<vmem>>, vector<16x512xf32>,
    %cst_77 = arith.constant 0.000000e+00 : f32
    %125 = vector.broadcast %cst_77 : f32 to vector<5x512xf32>
    %c0_78 = arith.constant 0 : index
    %c0_79 = arith.constant 0 : index
    %c0_80 = arith.constant 0 : index
    %126 = vector.load %arg8[%c0_78, %c0_79, %c0_80] : memref<16x5x512xf32, #tpu.memory_space<vmem>>, vector<1x5x512xf32>
    %127 = vector.shape_cast %126 : vector<1x5x512xf32> to vector<5x512xf32>
    %c0_81 = arith.constant 0 : index
    %c0_82 = arith.constant 0 : index
    %128 = vector.load %arg12[%c0_81, %c0_82] : memref<16x512xf32, #tpu.memory_space<vmem>>, vector<1x512xf32>
    %129 = vector.broadcast %128 : vector<1x512xf32> to vector<5x512xf32>
    %130 = arith.mulf %127, %129 : vector<5x512xf32>
    %131 = arith.addf %125, %130 : vector<5x512xf32>
    %c1_83 = arith.constant 1 : index
    %c0_84 = arith.constant 0 : index
    %c0_85 = arith.constant 0 : index
    %132 = vector.load %arg8[%c1_83, %c0_84, %c0_85] : memref<16x5x512xf32, #tpu.memory_space<vmem>>, vector<1x5x512xf32>
    %133 = vector.shape_cast %132 : vector<1x5x512xf32> to vector<5x512xf32>
    %c1_86 = arith.constant 1 : index
    %c0_87 = arith.constant 0 : index
    %134 = vector.load %arg12[%c1_86, %c0_87] : memref<16x512xf32, #tpu.memory_space<vmem>>, vector<1x512xf32>
    %135 = vector.broadcast %134 : vector<1x512xf32> to vector<5x512xf32>
    %136 = arith.mulf %133, %135 : vector<5x512xf32>
    %137 = arith.addf %131, %136 : vector<5x512xf32>
    %c2_88 = arith.constant 2 : index
    %c0_89 = arith.constant 0 : index
    %c0_90 = arith.constant 0 : index
    %138 = vector.load %arg8[%c2_88, %c0_89, %c0_90] : memref<16x5x512xf32, #tpu.memory_space<vmem>>, vector<1x5x512xf32>
    %139 = vector.shape_cast %138 : vector<1x5x512xf32> to vector<5x512xf32>
    %c2_91 = arith.constant 2 : index
    %c0_92 = arith.constant 0 : index
    %140 = vector.load %arg12[%c2_91, %c0_92] : memref<16x512xf32, #tpu.memory_space<vmem>>, vector<1x512xf32>
    %141 = vector.broadcast %140 : vector<1x512xf32> to vector<5x512xf32>
    %142 = arith.mulf %139, %141 : vector<5x512xf32>
    %143 = arith.addf %137, %142 : vector<5x512xf32>
    %c3_93 = arith.constant 3 : index
    %c0_94 = arith.constant 0 : index
    %c0_95 = arith.constant 0 : index
    %144 = vector.load %arg8[%c3_93, %c0_94, %c0_95] : memref<16x5x512xf32, #tpu.memory_space<vmem>>, vector<1x5x512xf32>
    %145 = vector.shape_cast %144 : vector<1x5x512xf32> to vector<5x512xf32>
    %c3_96 = arith.constant 3 : index
    %c0_97 = arith.constant 0 : index
    %146 = vector.load %arg12[%c3_96, %c0_97] : memref<16x512xf32, #tpu.memory_space<vmem>>, vector<1x512xf32>
    %147 = vector.broadcast %146 : vector<1x512xf32> to vector<5x512xf32>
    %148 = arith.mulf %145, %147 : vector<5x512xf32>
    %149 = arith.addf %143, %148 : vector<5x512xf32>
    %c4 = arith.constant 4 : index
    %c0_98 = arith.constant 0 : index
    %c0_99 = arith.constant 0 : index
    %150 = vector.load %arg8[%c4, %c0_98, %c0_99] : memref<16x5x512xf32, #tpu.memory_space<vmem>>, vector<1x5x512xf32>
    %151 = vector.shape_cast %150 : vector<1x5x512xf32> to vector<5x512xf32>
    %c4_100 = arith.constant 4 : index
    %c0_101 = arith.constant 0 : index
    %152 = vector.load %arg12[%c4_100, %c0_101] : memref<16x512xf32, #tpu.memory_space<vmem>>, vector<1x512xf32>
    %153 = vector.broadcast %152 : vector<1x512xf32> to vector<5x512xf32>
    %154 = arith.mulf %151, %153 : vector<5x512xf32>
    %155 = arith.addf %149, %154 : vector<5x512xf32>
    %c5_102 = arith.constant 5 : index
    %c0_103 = arith.constant 0 : index
    %c0_104 = arith.constant 0 : index
    %156 = vector.load %arg8[%c5_102, %c0_103, %c0_104] : memref<16x5x512xf32, #tpu.memory_space<vmem>>, vector<1x5x512xf32>
    %157 = vector.shape_cast %156 : vector<1x5x512xf32> to vector<5x512xf32>
    %c5_105 = arith.constant 5 : index
    %c0_106 = arith.constant 0 : index
    %158 = vector.load %arg12[%c5_105, %c0_106] : memref<16x512xf32, #tpu.memory_space<vmem>>, vector<1x512xf32>
    %159 = vector.broadcast %158 : vector<1x512xf32> to vector<5x512xf32>
    %160 = arith.mulf %157, %159 : vector<5x512xf32>
    %161 = arith.addf %155, %160 : vector<5x512xf32>
    %c6_107 = arith.constant 6 : index
    %c0_108 = arith.constant 0 : index
    %c0_109 = arith.constant 0 : index
    %162 = vector.load %arg8[%c6_107, %c0_108, %c0_109] : memref<16x5x512xf32, #tpu.memory_space<vmem>>, vector<1x5x512xf32>
    %163 = vector.shape_cast %162 : vector<1x5x512xf32> to vector<5x512xf32>
    %c6_110 = arith.constant 6 : index
    %c0_111 = arith.constant 0 : index
    %164 = vector.load %arg12[%c6_110, %c0_111] : memref<16x512xf32, #tpu.memory_space<vmem>>, vector<1x512xf32>
    %165 = vector.broadcast %164 : vector<1x512xf32> to vector<5x512xf32>
    %166 = arith.mulf %163, %165 : vector<5x512xf32>
    %167 = arith.addf %161, %166 : vector<5x512xf32>
    %c7_112 = arith.constant 7 : index
    %c0_113 = arith.constant 0 : index
    %c0_114 = arith.constant 0 : index
    %168 = vector.load %arg8[%c7_112, %c0_113, %c0_114] : memref<16x5x512xf32, #tpu.memory_space<vmem>>, vector<1x5x512xf32>
    %169 = vector.shape_cast %168 : vector<1x5x512xf32> to vector<5x512xf32>
    %c7_115 = arith.constant 7 : index
    %c0_116 = arith.constant 0 : index
    %170 = vector.load %arg12[%c7_115, %c0_116] : memref<16x512xf32, #tpu.memory_space<vmem>>, vector<1x512xf32>
    %171 = vector.broadcast %170 : vector<1x512xf32> to vector<5x512xf32>
    %172 = arith.mulf %169, %171 : vector<5x512xf32>
    %173 = arith.addf %167, %172 : vector<5x512xf32>
    %c8_117 = arith.constant 8 : index
    %c0_118 = arith.constant 0 : index
    %c0_119 = arith.constant 0 : index
    %174 = vector.load %arg8[%c8_117, %c0_118, %c0_119] : memref<16x5x512xf32, #tpu.memory_space<vmem>>, vector<1x5x512xf32>
    %175 = vector.shape_cast %174 : vector<1x5x512xf32> to vector<5x512xf32>
    %c8_120 = arith.constant 8 : index
    %c0_121 = arith.constant 0 : index
    %176 = vector.load %arg12[%c8_120, %c0_121] : memref<16x512xf32, #tpu.memory_space<vmem>>, vector<1x512xf32>
    %177 = vector.broadcast %176 : vector<1x512xf32> to vector<5x512xf32>
    %178 = arith.mulf %175, %177 : vector<5x512xf32>
    %179 = arith.addf %173, %178 : vector<5x512xf32>
    %c9 = arith.constant 9 : index
    %c0_122 = arith.constant 0 : index
    %c0_123 = arith.constant 0 : index
    %180 = vector.load %arg8[%c9, %c0_122, %c0_123] : memref<16x5x512xf32, #tpu.memory_space<vmem>>, vector<1x5x512xf32>
    %181 = vector.shape_cast %180 : vector<1x5x512xf32> to vector<5x512xf32>
    %c9_124 = arith.constant 9 : index
    %c0_125 = arith.constant 0 : index
    %182 = vector.load %arg12[%c9_124, %c0_125] : memref<16x512xf32, #tpu.memory_space<vmem>>, vector<1x512xf32>
    %183 = vector.broadcast %182 : vector<1x512xf32> to vector<5x512xf32>
    %184 = arith.mulf %181, %183 : vector<5x512xf32>
    %185 = arith.addf %179, %184 : vector<5x512xf32>
    %c10 = arith.constant 10 : index
    %c0_126 = arith.constant 0 : index
    %c0_127 = arith.constant 0 : index
    %186 = vector.load %arg8[%c10, %c0_126, %c0_127] : memref<16x5x512xf32, #tpu.memory_space<vmem>>, vector<1x5x512xf32>
    %187 = vector.shape_cast %186 : vector<1x5x512xf32> to vector<5x512xf32>
    %c10_128 = arith.constant 10 : index
    %c0_129 = arith.constant 0 : index
    %188 = vector.load %arg12[%c10_128, %c0_129] : memref<16x512xf32, #tpu.memory_space<vmem>>, vector<1x512xf32>
    %189 = vector.broadcast %188 : vector<1x512xf32> to vector<5x512xf32>
    %190 = arith.mulf %187, %189 : vector<5x512xf32>
    %191 = arith.addf %185, %190 : vector<5x512xf32>
    %c11 = arith.constant 11 : index
    %c0_130 = arith.constant 0 : index
    %c0_131 = arith.constant 0 : index
    %192 = vector.load %arg8[%c11, %c0_130, %c0_131] : memref<16x5x512xf32, #tpu.memory_space<vmem>>, vector<1x5x512xf32>
    %193 = vector.shape_cast %192 : vector<1x5x512xf32> to vector<5x512xf32>
    %c11_132 = arith.constant 11 : index
    %c0_133 = arith.constant 0 : index
    %194 = vector.load %arg12[%c11_132, %c0_133] : memref<16x512xf32, #tpu.memory_space<vmem>>, vector<1x512xf32>
    %195 = vector.broadcast %194 : vector<1x512xf32> to vector<5x512xf32>
    %196 = arith.mulf %193, %195 : vector<5x512xf32>
    %197 = arith.addf %191, %196 : vector<5x512xf32>
    %c12 = arith.constant 12 : index
    %c0_134 = arith.constant 0 : index
    %c0_135 = arith.constant 0 : index
    %198 = vector.load %arg8[%c12, %c0_134, %c0_135] : memref<16x5x512xf32, #tpu.memory_space<vmem>>, vector<1x5x512xf32>
    %199 = vector.shape_cast %198 : vector<1x5x512xf32> to vector<5x512xf32>
    %c12_136 = arith.constant 12 : index
    %c0_137 = arith.constant 0 : index
    %200 = vector.load %arg12[%c12_136, %c0_137] : memref<16x512xf32, #tpu.memory_space<vmem>>, vector<1x512xf32>
    %201 = vector.broadcast %200 : vector<1x512xf32> to vector<5x512xf32>
    %202 = arith.mulf %199, %201 : vector<5x512xf32>
    %203 = arith.addf %197, %202 : vector<5x512xf32>
    %c13 = arith.constant 13 : index
    %c0_138 = arith.constant 0 : index
    %c0_139 = arith.constant 0 : index
    %204 = vector.load %arg8[%c13, %c0_138, %c0_139] : memref<16x5x512xf32, #tpu.memory_space<vmem>>, vector<1x5x512xf32>
    %205 = vector.shape_cast %204 : vector<1x5x512xf32> to vector<5x512xf32>
    %c13_140 = arith.constant 13 : index
    %c0_141 = arith.constant 0 : index
    %206 = vector.load %arg12[%c13_140, %c0_141] : memref<16x512xf32, #tpu.memory_space<vmem>>, vector<1x512xf32>
    %207 = vector.broadcast %206 : vector<1x512xf32> to vector<5x512xf32>
    %208 = arith.mulf %205, %207 : vector<5x512xf32>
    %209 = arith.addf %203, %208 : vector<5x512xf32>
    %c14 = arith.constant 14 : index
    %c0_142 = arith.constant 0 : index
    %c0_143 = arith.constant 0 : index
    %210 = vector.load %arg8[%c14, %c0_142, %c0_143] : memref<16x5x512xf32, #tpu.memory_space<vmem>>, vector<1x5x512xf32>
    %211 = vector.shape_cast %210 : vector<1x5x512xf32> to vector<5x512xf32>
    %c14_144 = arith.constant 14 : index
    %c0_145 = arith.constant 0 : index
    %212 = vector.load %arg12[%c14_144, %c0_145] : memref<16x512xf32, #tpu.memory_space<vmem>>, vector<1x512xf32>
    %213 = vector.broadcast %212 : vector<1x512xf32> to vector<5x512xf32>
    %214 = arith.mulf %211, %213 : vector<5x512xf32>
    %215 = arith.addf %209, %214 : vector<5x512xf32>
    %c15 = arith.constant 15 : index
    %c0_146 = arith.constant 0 : index
    %c0_147 = arith.constant 0 : index
    %216 = vector.load %arg8[%c15, %c0_146, %c0_147] : memref<16x5x512xf32, #tpu.memory_space<vmem>>, vector<1x5x512xf32>
    %217 = vector.shape_cast %216 : vector<1x5x512xf32> to vector<5x512xf32>
    %c15_148 = arith.constant 15 : index
    %c0_149 = arith.constant 0 : index
    %218 = vector.load %arg12[%c15_148, %c0_149] : memref<16x512xf32, #tpu.memory_space<vmem>>, vector<1x512xf32>
    %219 = vector.broadcast %218 : vector<1x512xf32> to vector<5x512xf32>
    %220 = arith.mulf %217, %219 : vector<5x512xf32>
    %221 = arith.addf %215, %220 : vector<5x512xf32>
    %c0_150 = arith.constant 0 : index
    %c0_151 = arith.constant 0 : index
    %222 = vector.load %arg10[%c0_150, %c0_151] : memref<512x2xf32, #tpu.memory_space<vmem>>, vector<512x2xf32>
    %cst_152 = arith.constant dense<0.000000e+00> : vector<5x2xf32>
    %223 = tpu.matmul %221, %222, %cst_152 {dimension_numbers = #tpu.dot_dimension_numbers<[1], [0], [0], [1], [0, 0, 1, 1], [], []>} : vector<5x512xf32>, vector<512x2xf32>, vector<5x2xf32> -> vector<5x2xf32>
    %c0_153 = arith.constant 0 : index
    %c0_154 = arith.constant 0 : index
    %224 = vector.load %arg9[%c0_153, %c0_154] : memref<5x1xf32, #tpu.memory_space<vmem>>, vector<5x1xf32>
    %225 = vector.broadcast %224 : vector<5x1xf32> to vector<5x2xf32>
    %226 = arith.addf %223, %225 : vector<5x2xf32>
    %227 = vector.extract_strided_slice %226 {offsets = [0, 0], sizes = [4, 2], strides = [1, 1]} : vector<5x2xf32> to vector<4x2xf32>
    %228 = vector.extract_strided_slice %226 {offsets = [4, 0], sizes = [1, 2], strides = [1, 1]} : vector<5x2xf32> to vector<1x2xf32>
    %229 = vector.shape_cast %227 : vector<4x2xf32> to vector<1x4x2xf32>
    %cst_155 = arith.constant dense<0.000000e+00> : vector<1xf32>
    %230 = vector.multi_reduction <add>, %229, %cst_155 [1, 2] : vector<1x4x2xf32> to vector<1xf32>
    %231 = vector.shape_cast %230 : vector<1xf32> to vector<1x1x1xf32>
    %232 = vector.extract %231[0, 0, 0] : f32 from vector<1x1x1xf32>
    %cst_156 = arith.constant 8.000000e+00 : f32
    %233 = arith.divf %232, %cst_156 : f32
    %234 = vector.broadcast %228 : vector<1x2xf32> to vector<4x2xf32>
    %235 = arith.addf %234, %227 : vector<4x2xf32>
    %236 = vector.broadcast %233 : f32 to vector<4x2xf32>
    %237 = arith.subf %235, %236 : vector<4x2xf32>
    %c0_157 = arith.constant 0 : index
    %c0_158 = arith.constant 0 : index
    %238 = vector.load %arg11[%c0_157, %c0_158] : memref<4x2xf32, #tpu.memory_space<vmem>>, vector<4x2xf32>
    tpu.vector_store %arg11[%c0_157, %c0_158], %237 {strides = array<i32>} : memref<4x2xf32, #tpu.memory_space<vmem>>, vector<4x2xf32>,
    return
  }
}

</mosaic_0001>

<llo_original>
// kernel: tile.9
$region0: #{tile.9}
  %s0 = inlined_call_operand.vmem [shape: f32[16,5,2,256], index: 0, kind: input, shape index: {}]
  %s1 = inlined_call_operand.vmem [shape: f32[16,5,512], index: 1, kind: output, shape index: {}]
  $region1: #{tile.9} parent=0
    #allocation0 [shape = 'u8[655360]{0}', space=vmem, size = 0xa0000, scoped, tag = 'scoped mem for input reshape']
    %s3 = sshllo.u32 0, 2
    %s4 = smul.addr 2, 159
    %s5 = scalar_lea.vmem %s0, %s4
    %v6 = vld [vmem:[%s5] sm:%s3]
    %s7 = scalar_lea.vmem [#allocation0], 1272
    %8 = vst [vmem:[%s7] sm:%s3] %v6
    %s9 = smul.addr 2, 158
    %s10 = scalar_lea.vmem %s0, %s9
    %v11 = vld [vmem:[%s10] sm:%s3]
    %s12 = scalar_lea.vmem [#allocation0], 1264
    %13 = vst [vmem:[%s12] sm:%s3] %v11
    %s14 = smul.addr 2, 157
    %s15 = scalar_lea.vmem %s0, %s14
    %v16 = vld [vmem:[%s15] sm:%s3]
    %s17 = scalar_lea.vmem [#allocation0], 1256
    %18 = vst [vmem:[%s17] sm:%s3] %v16
    %s19 = smul.addr 2, 156
    %s20 = scalar_lea.vmem %s0, %s19
    %v21 = vld [vmem:[%s20] sm:%s3]
    %s22 = scalar_lea.vmem [#allocation0], 1248
    %23 = vst [vmem:[%s22] sm:%s3] %v21
    %s24 = smul.addr 2, 155
    %s25 = scalar_lea.vmem %s0, %s24
    %v26 = vld [vmem:[%s25] sm:%s3]
    %s27 = scalar_lea.vmem [#allocation0], 1240
    %28 = vst [vmem:[%s27] sm:%s3] %v26
    %s29 = smul.addr 2, 154
    %s30 = scalar_lea.vmem %s0, %s29
    %v31 = vld [vmem:[%s30] sm:%s3]
    %s32 = scalar_lea.vmem [#allocation0], 1232
    %33 = vst [vmem:[%s32] sm:%s3] %v31
    %s34 = smul.addr 2, 153
    %s35 = scalar_lea.vmem %s0, %s34
    %v36 = vld [vmem:[%s35] sm:%s3]
    %s37 = scalar_lea.vmem [#allocation0], 1224
    %38 = vst [vmem:[%s37] sm:%s3] %v36
    %s39 = smul.addr 2, 152
    %s40 = scalar_lea.vmem %s0, %s39
    %v41 = vld [vmem:[%s40] sm:%s3]
    %s42 = scalar_lea.vmem [#allocation0], 1216
    %43 = vst [vmem:[%s42] sm:%s3] %v41
    %s44 = smul.addr 2, 151
    %s45 = scalar_lea.vmem %s0, %s44
    %v46 = vld [vmem:[%s45] sm:%s3]
    %s47 = scalar_lea.vmem [#allocation0], 1208
    %48 = vst [vmem:[%s47] sm:%s3] %v46
    %s49 = smul.addr 2, 150
    %s50 = scalar_lea.vmem %s0, %s49
    %v51 = vld [vmem:[%s50] sm:%s3]
    %s52 = scalar_lea.vmem [#allocation0], 1200
    %53 = vst [vmem:[%s52] sm:%s3] %v51
    %s54 = smul.addr 2, 149
    %s55 = scalar_lea.vmem %s0, %s54
    %v56 = vld [vmem:[%s55] sm:%s3]
    %s57 = scalar_lea.vmem [#allocation0], 1192
    %58 = vst [vmem:[%s57] sm:%s3] %v56
    %s59 = smul.addr 2, 148
    %s60 = scalar_lea.vmem %s0, %s59
    %v61 = vld [vmem:[%s60] sm:%s3]
    %s62 = scalar_lea.vmem [#allocation0], 1184
    %63 = vst [vmem:[%s62] sm:%s3] %v61
    %s64 = smul.addr 2, 147
    %s65 = scalar_lea.vmem %s0, %s64
    %v66 = vld [vmem:[%s65] sm:%s3]
    %s67 = scalar_lea.vmem [#allocation0], 1176
    %68 = vst [vmem:[%s67] sm:%s3] %v66
    %s69 = smul.addr 2, 146
    %s70 = scalar_lea.vmem %s0, %s69
    %v71 = vld [vmem:[%s70] sm:%s3]
    %s72 = scalar_lea.vmem [#allocation0], 1168
    %73 = vst [vmem:[%s72] sm:%s3] %v71
    %s74 = smul.addr 2, 145
    %s75 = scalar_lea.vmem %s0, %s74
    %v76 = vld [vmem:[%s75] sm:%s3]
    %s77 = scalar_lea.vmem [#allocation0], 1160
    %78 = vst [vmem:[%s77] sm:%s3] %v76
    %s79 = smul.addr 2, 144
    %s80 = scalar_lea.vmem %s0, %s79
    %v81 = vld [vmem:[%s80] sm:%s3]
    %s82 = scalar_lea.vmem [#allocation0], 1152
    %83 = vst [vmem:[%s82] sm:%s3] %v81
    %s84 = smul.addr 2, 143
    %s85 = scalar_lea.vmem %s0, %s84
    %v86 = vld [vmem:[%s85] sm:%s3]
    %s87 = scalar_lea.vmem [#allocation0], 1144
    %88 = vst [vmem:[%s87] sm:%s3] %v86
    %s89 = smul.addr 2, 142
    %s90 = scalar_lea.vmem %s0, %s89
    %v91 = vld [vmem:[%s90] sm:%s3]
    %s92 = scalar_lea.vmem [#allocation0], 1136
    %93 = vst [vmem:[%s92] sm:%s3] %v91
    %s94 = smul.addr 2, 141
    %s95 = scalar_lea.vmem %s0, %s94
    %v96 = vld [vmem:[%s95] sm:%s3]
    %s97 = scalar_lea.vmem [#allocation0], 1128
    %98 = vst [vmem:[%s97] sm:%s3] %v96
    %s99 = smul.addr 2, 140
    %s100 = scalar_lea.vmem %s0, %s99
    %v101 = vld [vmem:[%s100] sm:%s3]
    %s102 = scalar_lea.vmem [#allocation0], 1120
    %103 = vst [vmem:[%s102] sm:%s3] %v101
    %s104 = smul.addr 2, 139
    %s105 = scalar_lea.vmem %s0, %s104
    %v106 = vld [vmem:[%s105] sm:%s3]
    %s107 = scalar_lea.vmem [#allocation0], 1112
    %108 = vst [vmem:[%s107] sm:%s3] %v106
    %s109 = smul.addr 2, 138
    %s110 = scalar_lea.vmem %s0, %s109
    %v111 = vld [vmem:[%s110] sm:%s3]
    %s112 = scalar_lea.vmem [#allocation0], 1104
    %113 = vst [vmem:[%s112] sm:%s3] %v111
    %s114 = smul.addr 2, 137
    %s115 = scalar_lea.vmem %s0, %s114
    %v116 = vld [vmem:[%s115] sm:%s3]
    %s117 = scalar_lea.vmem [#allocation0], 1096
    %118 = vst [vmem:[%s117] sm:%s3] %v116
    %s119 = smul.addr 2, 136
    %s120 = scalar_lea.vmem %s0, %s119
    %v121 = vld [vmem:[%s120] sm:%s3]
    %s122 = scalar_lea.vmem [#allocation0], 1088
    %123 = vst [vmem:[%s122] sm:%s3] %v121
    %s124 = smul.addr 2, 135
    %s125 = scalar_lea.vmem %s0, %s124
    %v126 = vld [vmem:[%s125] sm:%s3]
    %s127 = scalar_lea.vmem [#allocation0], 1080
    %128 = vst [vmem:[%s127] sm:%s3] %v126
    %s129 = smul.addr 2, 134
    %s130 = scalar_lea.vmem %s0, %s129
    %v131 = vld [vmem:[%s130] sm:%s3]
    %s132 = scalar_lea.vmem [#allocation0], 1072
    %133 = vst [vmem:[%s132] sm:%s3] %v131
    %s134 = smul.addr 2, 133
    %s135 = scalar_lea.vmem %s0, %s134
    %v136 = vld [vmem:[%s135] sm:%s3]
    %s137 = scalar_lea.vmem [#allocation0], 1064
    %138 = vst [vmem:[%s137] sm:%s3] %v136
    %s139 = smul.addr 2, 132
    %s140 = scalar_lea.vmem %s0, %s139
    %v141 = vld [vmem:[%s140] sm:%s3]
    %s142 = scalar_lea.vmem [#allocation0], 1056
    %143 = vst [vmem:[%s142] sm:%s3] %v141
    %s144 = smul.addr 2, 131
    %s145 = scalar_lea.vmem %s0, %s144
    %v146 = vld [vmem:[%s145] sm:%s3]
    %s147 = scalar_lea.vmem [#allocation0], 1048
    %148 = vst [vmem:[%s147] sm:%s3] %v146
    %s149 = smul.addr 2, 130
    %s150 = scalar_lea.vmem %s0, %s149
    %v151 = vld [vmem:[%s150] sm:%s3]
    %s152 = scalar_lea.vmem [#allocation0], 1040
    %153 = vst [vmem:[%s152] sm:%s3] %v151
    %s154 = smul.addr 2, 129
    %s155 = scalar_lea.vmem %s0, %s154
    %v156 = vld [vmem:[%s155] sm:%s3]
    %s157 = scalar_lea.vmem [#allocation0], 1032
    %158 = vst [vmem:[%s157] sm:%s3] %v156
    %s159 = smul.addr 2, 128
    %s160 = scalar_lea.vmem %s0, %s159
    %v161 = vld [vmem:[%s160] sm:%s3]
    %s162 = scalar_lea.vmem [#allocation0], 1024
    %163 = vst [vmem:[%s162] sm:%s3] %v161
    %s164 = smul.addr 2, 127
    %s165 = scalar_lea.vmem %s0, %s164
    %v166 = vld [vmem:[%s165] sm:%s3]
    %s167 = scalar_lea.vmem [#allocation0], 1016
    %168 = vst [vmem:[%s167] sm:%s3] %v166
    %s169 = smul.addr 2, 126
    %s170 = scalar_lea.vmem %s0, %s169
    %v171 = vld [vmem:[%s170] sm:%s3]
    %s172 = scalar_lea.vmem [#allocation0], 1008
    %173 = vst [vmem:[%s172] sm:%s3] %v171
    %s174 = smul.addr 2, 125
    %s175 = scalar_lea.vmem %s0, %s174
    %v176 = vld [vmem:[%s175] sm:%s3]
    %s177 = scalar_lea.vmem [#allocation0], 1000
    %178 = vst [vmem:[%s177] sm:%s3] %v176
    %s179 = smul.addr 2, 124
    %s180 = scalar_lea.vmem %s0, %s179
    %v181 = vld [vmem:[%s180] sm:%s3]
    %s182 = scalar_lea.vmem [#allocation0], 992
    %183 = vst [vmem:[%s182] sm:%s3] %v181
    %s184 = smul.addr 2, 123
    %s185 = scalar_lea.vmem %s0, %s184
    %v186 = vld [vmem:[%s185] sm:%s3]
    %s187 = scalar_lea.vmem [#allocation0], 984
    %188 = vst [vmem:[%s187] sm:%s3] %v186
    %s189 = smul.addr 2, 122
    %s190 = scalar_lea.vmem %s0, %s189
    %v191 = vld [vmem:[%s190] sm:%s3]
    %s192 = scalar_lea.vmem [#allocation0], 976
    %193 = vst [vmem:[%s192] sm:%s3] %v191
    %s194 = smul.addr 2, 121
    %s195 = scalar_lea.vmem %s0, %s194
    %v196 = vld [vmem:[%s195] sm:%s3]
    %s197 = scalar_lea.vmem [#allocation0], 968
    %198 = vst [vmem:[%s197] sm:%s3] %v196
    %s199 = smul.addr 2, 120
    %s200 = scalar_lea.vmem %s0, %s199
    %v201 = vld [vmem:[%s200] sm:%s3]
    %s202 = scalar_lea.vmem [#allocation0], 960
    %203 = vst [vmem:[%s202] sm:%s3] %v201
    %s204 = smul.addr 2, 119
    %s205 = scalar_lea.vmem %s0, %s204
    %v206 = vld [vmem:[%s205] sm:%s3]
    %s207 = scalar_lea.vmem [#allocation0], 952
    %208 = vst [vmem:[%s207] sm:%s3] %v206
    %s209 = smul.addr 2, 118
    %s210 = scalar_lea.vmem %s0, %s209
    %v211 = vld [vmem:[%s210] sm:%s3]
    %s212 = scalar_lea.vmem [#allocation0], 944
    %213 = vst [vmem:[%s212] sm:%s3] %v211
    %s214 = smul.addr 2, 117
    %s215 = scalar_lea.vmem %s0, %s214
    %v216 = vld [vmem:[%s215] sm:%s3]
    %s217 = scalar_lea.vmem [#allocation0], 936
    %218 = vst [vmem:[%s217] sm:%s3] %v216
    %s219 = smul.addr 2, 116
    %s220 = scalar_lea.vmem %s0, %s219
    %v221 = vld [vmem:[%s220] sm:%s3]
    %s222 = scalar_lea.vmem [#allocation0], 928
    %223 = vst [vmem:[%s222] sm:%s3] %v221
    %s224 = smul.addr 2, 115
    %s225 = scalar_lea.vmem %s0, %s224
    %v226 = vld [vmem:[%s225] sm:%s3]
    %s227 = scalar_lea.vmem [#allocation0], 920
    %228 = vst [vmem:[%s227] sm:%s3] %v226
    %s229 = smul.addr 2, 114
    %s230 = scalar_lea.vmem %s0, %s229
    %v231 = vld [vmem:[%s230] sm:%s3]
    %s232 = scalar_lea.vmem [#allocation0], 912
    %233 = vst [vmem:[%s232] sm:%s3] %v231
    %s234 = smul.addr 2, 113
    %s235 = scalar_lea.vmem %s0, %s234
    %v236 = vld [vmem:[%s235] sm:%s3]
    %s237 = scalar_lea.vmem [#allocation0], 904
    %238 = vst [vmem:[%s237] sm:%s3] %v236
    %s239 = smul.addr 2, 112
    %s240 = scalar_lea.vmem %s0, %s239
    %v241 = vld [vmem:[%s240] sm:%s3]
    %s242 = scalar_lea.vmem [#allocation0], 896
    %243 = vst [vmem:[%s242] sm:%s3] %v241
    %s244 = smul.addr 2, 111
    %s245 = scalar_lea.vmem %s0, %s244
    %v246 = vld [vmem:[%s245] sm:%s3]
    %s247 = scalar_lea.vmem [#allocation0], 888
    %248 = vst [vmem:[%s247] sm:%s3] %v246
    %s249 = smul.addr 2, 110
    %s250 = scalar_lea.vmem %s0, %s249
    %v251 = vld [vmem:[%s250] sm:%s3]
    %s252 = scalar_lea.vmem [#allocation0], 880
    %253 = vst [vmem:[%s252] sm:%s3] %v251
    %s254 = smul.addr 2, 109
    %s255 = scalar_lea.vmem %s0, %s254
    %v256 = vld [vmem:[%s255] sm:%s3]
    %s257 = scalar_lea.vmem [#allocation0], 872
    %258 = vst [vmem:[%s257] sm:%s3] %v256
    %s259 = smul.addr 2, 108
    %s260 = scalar_lea.vmem %s0, %s259
    %v261 = vld [vmem:[%s260] sm:%s3]
    %s262 = scalar_lea.vmem [#allocation0], 864
    %263 = vst [vmem:[%s262] sm:%s3] %v261
    %s264 = smul.addr 2, 107
    %s265 = scalar_lea.vmem %s0, %s264
    %v266 = vld [vmem:[%s265] sm:%s3]
    %s267 = scalar_lea.vmem [#allocation0], 856
    %268 = vst [vmem:[%s267] sm:%s3] %v266
    %s269 = smul.addr 2, 106
    %s270 = scalar_lea.vmem %s0, %s269
    %v271 = vld [vmem:[%s270] sm:%s3]
    %s272 = scalar_lea.vmem [#allocation0], 848
    %273 = vst [vmem:[%s272] sm:%s3] %v271
    %s274 = smul.addr 2, 105
    %s275 = scalar_lea.vmem %s0, %s274
    %v276 = vld [vmem:[%s275] sm:%s3]
    %s277 = scalar_lea.vmem [#allocation0], 840
    %278 = vst [vmem:[%s277] sm:%s3] %v276
    %s279 = smul.addr 2, 104
    %s280 = scalar_lea.vmem %s0, %s279
    %v281 = vld [vmem:[%s280] sm:%s3]
    %s282 = scalar_lea.vmem [#allocation0], 832
    %283 = vst [vmem:[%s282] sm:%s3] %v281
    %s284 = smul.addr 2, 103
    %s285 = scalar_lea.vmem %s0, %s284
    %v286 = vld [vmem:[%s285] sm:%s3]
    %s287 = scalar_lea.vmem [#allocation0], 824
    %288 = vst [vmem:[%s287] sm:%s3] %v286
    %s289 = smul.addr 2, 102
    %s290 = scalar_lea.vmem %s0, %s289
    %v291 = vld [vmem:[%s290] sm:%s3]
    %s292 = scalar_lea.vmem [#allocation0], 816
    %293 = vst [vmem:[%s292] sm:%s3] %v291
    %s294 = smul.addr 2, 101
    %s295 = scalar_lea.vmem %s0, %s294
    %v296 = vld [vmem:[%s295] sm:%s3]
    %s297 = scalar_lea.vmem [#allocation0], 808
    %298 = vst [vmem:[%s297] sm:%s3] %v296
    %s299 = smul.addr 2, 100
    %s300 = scalar_lea.vmem %s0, %s299
    %v301 = vld [vmem:[%s300] sm:%s3]
    %s302 = scalar_lea.vmem [#allocation0], 800
    %303 = vst [vmem:[%s302] sm:%s3] %v301
    %s304 = smul.addr 2, 99
    %s305 = scalar_lea.vmem %s0, %s304
    %v306 = vld [vmem:[%s305] sm:%s3]
    %s307 = scalar_lea.vmem [#allocation0], 792
    %308 = vst [vmem:[%s307] sm:%s3] %v306
    %s309 = smul.addr 2, 98
    %s310 = scalar_lea.vmem %s0, %s309
    %v311 = vld [vmem:[%s310] sm:%s3]
    %s312 = scalar_lea.vmem [#allocation0], 784
    %313 = vst [vmem:[%s312] sm:%s3] %v311
    %s314 = smul.addr 2, 97
    %s315 = scalar_lea.vmem %s0, %s314
    %v316 = vld [vmem:[%s315] sm:%s3]
    %s317 = scalar_lea.vmem [#allocation0], 776
    %318 = vst [vmem:[%s317] sm:%s3] %v316
    %s319 = smul.addr 2, 96
    %s320 = scalar_lea.vmem %s0, %s319
    %v321 = vld [vmem:[%s320] sm:%s3]
    %s322 = scalar_lea.vmem [#allocation0], 768
    %323 = vst [vmem:[%s322] sm:%s3] %v321
    %s324 = smul.addr 2, 95
    %s325 = scalar_lea.vmem %s0, %s324
    %v326 = vld [vmem:[%s325] sm:%s3]
    %s327 = scalar_lea.vmem [#allocation0], 760
    %328 = vst [vmem:[%s327] sm:%s3] %v326
    %s329 = smul.addr 2, 94
    %s330 = scalar_lea.vmem %s0, %s329
    %v331 = vld [vmem:[%s330] sm:%s3]
    %s332 = scalar_lea.vmem [#allocation0], 752
    %333 = vst [vmem:[%s332] sm:%s3] %v331
    %s334 = smul.addr 2, 93
    %s335 = scalar_lea.vmem %s0, %s334
    %v336 = vld [vmem:[%s335] sm:%s3]
    %s337 = scalar_lea.vmem [#allocation0], 744
    %338 = vst [vmem:[%s337] sm:%s3] %v336
    %s339 = smul.addr 2, 92
    %s340 = scalar_lea.vmem %s0, %s339
    %v341 = vld [vmem:[%s340] sm:%s3]
    %s342 = scalar_lea.vmem [#allocation0], 736
    %343 = vst [vmem:[%s342] sm:%s3] %v341
    %s344 = smul.addr 2, 91
    %s345 = scalar_lea.vmem %s0, %s344
    %v346 = vld [vmem:[%s345] sm:%s3]
    %s347 = scalar_lea.vmem [#allocation0], 728
    %348 = vst [vmem:[%s347] sm:%s3] %v346
    %s349 = smul.addr 2, 90
    %s350 = scalar_lea.vmem %s0, %s349
    %v351 = vld [vmem:[%s350] sm:%s3]
    %s352 = scalar_lea.vmem [#allocation0], 720
    %353 = vst [vmem:[%s352] sm:%s3] %v351
    %s354 = smul.addr 2, 89
    %s355 = scalar_lea.vmem %s0, %s354
    %v356 = vld [vmem:[%s355] sm:%s3]
    %s357 = scalar_lea.vmem [#allocation0], 712
    %358 = vst [vmem:[%s357] sm:%s3] %v356
    %s359 = smul.addr 2, 88
    %s360 = scalar_lea.vmem %s0, %s359
    %v361 = vld [vmem:[%s360] sm:%s3]
    %s362 = scalar_lea.vmem [#allocation0], 704
    %363 = vst [vmem:[%s362] sm:%s3] %v361
    %s364 = smul.addr 2, 87
    %s365 = scalar_lea.vmem %s0, %s364
    %v366 = vld [vmem:[%s365] sm:%s3]
    %s367 = scalar_lea.vmem [#allocation0], 696
    %368 = vst [vmem:[%s367] sm:%s3] %v366
    %s369 = smul.addr 2, 86
    %s370 = scalar_lea.vmem %s0, %s369
    %v371 = vld [vmem:[%s370] sm:%s3]
    %s372 = scalar_lea.vmem [#allocation0], 688
    %373 = vst [vmem:[%s372] sm:%s3] %v371
    %s374 = smul.addr 2, 85
    %s375 = scalar_lea.vmem %s0, %s374
    %v376 = vld [vmem:[%s375] sm:%s3]
    %s377 = scalar_lea.vmem [#allocation0], 680
    %378 = vst [vmem:[%s377] sm:%s3] %v376
    %s379 = smul.addr 2, 84
    %s380 = scalar_lea.vmem %s0, %s379
    %v381 = vld [vmem:[%s380] sm:%s3]
    %s382 = scalar_lea.vmem [#allocation0], 672
    %383 = vst [vmem:[%s382] sm:%s3] %v381
    %s384 = smul.addr 2, 83
    %s385 = scalar_lea.vmem %s0, %s384
    %v386 = vld [vmem:[%s385] sm:%s3]
    %s387 = scalar_lea.vmem [#allocation0], 664
    %388 = vst [vmem:[%s387] sm:%s3] %v386
    %s389 = smul.addr 2, 82
    %s390 = scalar_lea.vmem %s0, %s389
    %v391 = vld [vmem:[%s390] sm:%s3]
    %s392 = scalar_lea.vmem [#allocation0], 656
    %393 = vst [vmem:[%s392] sm:%s3] %v391
    %s394 = smul.addr 2, 81
    %s395 = scalar_lea.vmem %s0, %s394
    %v396 = vld [vmem:[%s395] sm:%s3]
    %s397 = scalar_lea.vmem [#allocation0], 648
    %398 = vst [vmem:[%s397] sm:%s3] %v396
    %s399 = smul.addr 2, 80
    %s400 = scalar_lea.vmem %s0, %s399
    %v401 = vld [vmem:[%s400] sm:%s3]
    %s402 = scalar_lea.vmem [#allocation0], 640
    %403 = vst [vmem:[%s402] sm:%s3] %v401
    %s404 = smul.addr 2, 79
    %s405 = scalar_lea.vmem %s0, %s404
    %v406 = vld [vmem:[%s405] sm:%s3]
    %s407 = scalar_lea.vmem [#allocation0], 632
    %408 = vst [vmem:[%s407] sm:%s3] %v406
    %s409 = smul.addr 2, 78
    %s410 = scalar_lea.vmem %s0, %s409
    %v411 = vld [vmem:[%s410] sm:%s3]
    %s412 = scalar_lea.vmem [#allocation0], 624
    %413 = vst [vmem:[%s412] sm:%s3] %v411
    %s414 = smul.addr 2, 77
    %s415 = scalar_lea.vmem %s0, %s414
    %v416 = vld [vmem:[%s415] sm:%s3]
    %s417 = scalar_lea.vmem [#allocation0], 616
    %418 = vst [vmem:[%s417] sm:%s3] %v416
    %s419 = smul.addr 2, 76
    %s420 = scalar_lea.vmem %s0, %s419
    %v421 = vld [vmem:[%s420] sm:%s3]
    %s422 = scalar_lea.vmem [#allocation0], 608
    %423 = vst [vmem:[%s422] sm:%s3] %v421
    %s424 = smul.addr 2, 75
    %s425 = scalar_lea.vmem %s0, %s424
    %v426 = vld [vmem:[%s425] sm:%s3]
    %s427 = scalar_lea.vmem [#allocation0], 600
    %428 = vst [vmem:[%s427] sm:%s3] %v426
    %s429 = smul.addr 2, 74
    %s430 = scalar_lea.vmem %s0, %s429
    %v431 = vld [vmem:[%s430] sm:%s3]
    %s432 = scalar_lea.vmem [#allocation0], 592
    %433 = vst [vmem:[%s432] sm:%s3] %v431
    %s434 = smul.addr 2, 73
    %s435 = scalar_lea.vmem %s0, %s434
    %v436 = vld [vmem:[%s435] sm:%s3]
    %s437 = scalar_lea.vmem [#allocation0], 584
    %438 = vst [vmem:[%s437] sm:%s3] %v436
    %s439 = smul.addr 2, 72
    %s440 = scalar_lea.vmem %s0, %s439
    %v441 = vld [vmem:[%s440] sm:%s3]
    %s442 = scalar_lea.vmem [#allocation0], 576
    %443 = vst [vmem:[%s442] sm:%s3] %v441
    %s444 = smul.addr 2, 71
    %s445 = scalar_lea.vmem %s0, %s444
    %v446 = vld [vmem:[%s445] sm:%s3]
    %s447 = scalar_lea.vmem [#allocation0], 568
    %448 = vst [vmem:[%s447] sm:%s3] %v446
    %s449 = smul.addr 2, 70
    %s450 = scalar_lea.vmem %s0, %s449
    %v451 = vld [vmem:[%s450] sm:%s3]
    %s452 = scalar_lea.vmem [#allocation0], 560
    %453 = vst [vmem:[%s452] sm:%s3] %v451
    %s454 = smul.addr 2, 69
    %s455 = scalar_lea.vmem %s0, %s454
    %v456 = vld [vmem:[%s455] sm:%s3]
    %s457 = scalar_lea.vmem [#allocation0], 552
    %458 = vst [vmem:[%s457] sm:%s3] %v456
    %s459 = smul.addr 2, 68
    %s460 = scalar_lea.vmem %s0, %s459
    %v461 = vld [vmem:[%s460] sm:%s3]
    %s462 = scalar_lea.vmem [#allocation0], 544
    %463 = vst [vmem:[%s462] sm:%s3] %v461
    %s464 = smul.addr 2, 67
    %s465 = scalar_lea.vmem %s0, %s464
    %v466 = vld [vmem:[%s465] sm:%s3]
    %s467 = scalar_lea.vmem [#allocation0], 536
    %468 = vst [vmem:[%s467] sm:%s3] %v466
    %s469 = smul.addr 2, 66
    %s470 = scalar_lea.vmem %s0, %s469
    %v471 = vld [vmem:[%s470] sm:%s3]
    %s472 = scalar_lea.vmem [#allocation0], 528
    %473 = vst [vmem:[%s472] sm:%s3] %v471
    %s474 = smul.addr 2, 65
    %s475 = scalar_lea.vmem %s0, %s474
    %v476 = vld [vmem:[%s475] sm:%s3]
    %s477 = scalar_lea.vmem [#allocation0], 520
    %478 = vst [vmem:[%s477] sm:%s3] %v476
    %s479 = smul.addr 2, 64
    %s480 = scalar_lea.vmem %s0, %s479
    %v481 = vld [vmem:[%s480] sm:%s3]
    %s482 = scalar_lea.vmem [#allocation0], 512
    %483 = vst [vmem:[%s482] sm:%s3] %v481
    %s484 = smul.addr 2, 63
    %s485 = scalar_lea.vmem %s0, %s484
    %v486 = vld [vmem:[%s485] sm:%s3]
    %s487 = scalar_lea.vmem [#allocation0], 504
    %488 = vst [vmem:[%s487] sm:%s3] %v486
    %s489 = smul.addr 2, 62
    %s490 = scalar_lea.vmem %s0, %s489
    %v491 = vld [vmem:[%s490] sm:%s3]
    %s492 = scalar_lea.vmem [#allocation0], 496
    %493 = vst [vmem:[%s492] sm:%s3] %v491
    %s494 = smul.addr 2, 61
    %s495 = scalar_lea.vmem %s0, %s494
    %v496 = vld [vmem:[%s495] sm:%s3]
    %s497 = scalar_lea.vmem [#allocation0], 488
    %498 = vst [vmem:[%s497] sm:%s3] %v496
    %s499 = smul.addr 2, 60
    %s500 = scalar_lea.vmem %s0, %s499
    %v501 = vld [vmem:[%s500] sm:%s3]
    %s502 = scalar_lea.vmem [#allocation0], 480
    %503 = vst [vmem:[%s502] sm:%s3] %v501
    %s504 = smul.addr 2, 59
    %s505 = scalar_lea.vmem %s0, %s504
    %v506 = vld [vmem:[%s505] sm:%s3]
    %s507 = scalar_lea.vmem [#allocation0], 472
    %508 = vst [vmem:[%s507] sm:%s3] %v506
    %s509 = smul.addr 2, 58
    %s510 = scalar_lea.vmem %s0, %s509
    %v511 = vld [vmem:[%s510] sm:%s3]
    %s512 = scalar_lea.vmem [#allocation0], 464
    %513 = vst [vmem:[%s512] sm:%s3] %v511
    %s514 = smul.addr 2, 57
    %s515 = scalar_lea.vmem %s0, %s514
    %v516 = vld [vmem:[%s515] sm:%s3]
    %s517 = scalar_lea.vmem [#allocation0], 456
    %518 = vst [vmem:[%s517] sm:%s3] %v516
    %s519 = smul.addr 2, 56
    %s520 = scalar_lea.vmem %s0, %s519
    %v521 = vld [vmem:[%s520] sm:%s3]
    %s522 = scalar_lea.vmem [#allocation0], 448
    %523 = vst [vmem:[%s522] sm:%s3] %v521
    %s524 = smul.addr 2, 55
    %s525 = scalar_lea.vmem %s0, %s524
    %v526 = vld [vmem:[%s525] sm:%s3]
    %s527 = scalar_lea.vmem [#allocation0], 440
    %528 = vst [vmem:[%s527] sm:%s3] %v526
    %s529 = smul.addr 2, 54
    %s530 = scalar_lea.vmem %s0, %s529
    %v531 = vld [vmem:[%s530] sm:%s3]
    %s532 = scalar_lea.vmem [#allocation0], 432
    %533 = vst [vmem:[%s532] sm:%s3] %v531
    %s534 = smul.addr 2, 53
    %s535 = scalar_lea.vmem %s0, %s534
    %v536 = vld [vmem:[%s535] sm:%s3]
    %s537 = scalar_lea.vmem [#allocation0], 424
    %538 = vst [vmem:[%s537] sm:%s3] %v536
    %s539 = smul.addr 2, 52
    %s540 = scalar_lea.vmem %s0, %s539
    %v541 = vld [vmem:[%s540] sm:%s3]
    %s542 = scalar_lea.vmem [#allocation0], 416
    %543 = vst [vmem:[%s542] sm:%s3] %v541
    %s544 = smul.addr 2, 51
    %s545 = scalar_lea.vmem %s0, %s544
    %v546 = vld [vmem:[%s545] sm:%s3]
    %s547 = scalar_lea.vmem [#allocation0], 408
    %548 = vst [vmem:[%s547] sm:%s3] %v546
    %s549 = smul.addr 2, 50
    %s550 = scalar_lea.vmem %s0, %s549
    %v551 = vld [vmem:[%s550] sm:%s3]
    %s552 = scalar_lea.vmem [#allocation0], 400
    %553 = vst [vmem:[%s552] sm:%s3] %v551
    %s554 = smul.addr 2, 49
    %s555 = scalar_lea.vmem %s0, %s554
    %v556 = vld [vmem:[%s555] sm:%s3]
    %s557 = scalar_lea.vmem [#allocation0], 392
    %558 = vst [vmem:[%s557] sm:%s3] %v556
    %s559 = smul.addr 2, 48
    %s560 = scalar_lea.vmem %s0, %s559
    %v561 = vld [vmem:[%s560] sm:%s3]
    %s562 = scalar_lea.vmem [#allocation0], 384
    %563 = vst [vmem:[%s562] sm:%s3] %v561
    %s564 = smul.addr 2, 47
    %s565 = scalar_lea.vmem %s0, %s564
    %v566 = vld [vmem:[%s565] sm:%s3]
    %s567 = scalar_lea.vmem [#allocation0], 376
    %568 = vst [vmem:[%s567] sm:%s3] %v566
    %s569 = smul.addr 2, 46
    %s570 = scalar_lea.vmem %s0, %s569
    %v571 = vld [vmem:[%s570] sm:%s3]
    %s572 = scalar_lea.vmem [#allocation0], 368
    %573 = vst [vmem:[%s572] sm:%s3] %v571
    %s574 = smul.addr 2, 45
    %s575 = scalar_lea.vmem %s0, %s574
    %v576 = vld [vmem:[%s575] sm:%s3]
    %s577 = scalar_lea.vmem [#allocation0], 360
    %578 = vst [vmem:[%s577] sm:%s3] %v576
    %s579 = smul.addr 2, 44
    %s580 = scalar_lea.vmem %s0, %s579
    %v581 = vld [vmem:[%s580] sm:%s3]
    %s582 = scalar_lea.vmem [#allocation0], 352
    %583 = vst [vmem:[%s582] sm:%s3] %v581
    %s584 = smul.addr 2, 43
    %s585 = scalar_lea.vmem %s0, %s584
    %v586 = vld [vmem:[%s585] sm:%s3]
    %s587 = scalar_lea.vmem [#allocation0], 344
    %588 = vst [vmem:[%s587] sm:%s3] %v586
    %s589 = smul.addr 2, 42
    %s590 = scalar_lea.vmem %s0, %s589
    %v591 = vld [vmem:[%s590] sm:%s3]
    %s592 = scalar_lea.vmem [#allocation0], 336
    %593 = vst [vmem:[%s592] sm:%s3] %v591
    %s594 = smul.addr 2, 41
    %s595 = scalar_lea.vmem %s0, %s594
    %v596 = vld [vmem:[%s595] sm:%s3]
    %s597 = scalar_lea.vmem [#allocation0], 328
    %598 = vst [vmem:[%s597] sm:%s3] %v596
    %s599 = smul.addr 2, 40
    %s600 = scalar_lea.vmem %s0, %s599
    %v601 = vld [vmem:[%s600] sm:%s3]
    %s602 = scalar_lea.vmem [#allocation0], 320
    %603 = vst [vmem:[%s602] sm:%s3] %v601
    %s604 = smul.addr 2, 39
    %s605 = scalar_lea.vmem %s0, %s604
    %v606 = vld [vmem:[%s605] sm:%s3]
    %s607 = scalar_lea.vmem [#allocation0], 312
    %608 = vst [vmem:[%s607] sm:%s3] %v606
    %s609 = smul.addr 2, 38
    %s610 = scalar_lea.vmem %s0, %s609
    %v611 = vld [vmem:[%s610] sm:%s3]
    %s612 = scalar_lea.vmem [#allocation0], 304
    %613 = vst [vmem:[%s612] sm:%s3] %v611
    %s614 = smul.addr 2, 37
    %s615 = scalar_lea.vmem %s0, %s614
    %v616 = vld [vmem:[%s615] sm:%s3]
    %s617 = scalar_lea.vmem [#allocation0], 296
    %618 = vst [vmem:[%s617] sm:%s3] %v616
    %s619 = smul.addr 2, 36
    %s620 = scalar_lea.vmem %s0, %s619
    %v621 = vld [vmem:[%s620] sm:%s3]
    %s622 = scalar_lea.vmem [#allocation0], 288
    %623 = vst [vmem:[%s622] sm:%s3] %v621
    %s624 = smul.addr 2, 35
    %s625 = scalar_lea.vmem %s0, %s624
    %v626 = vld [vmem:[%s625] sm:%s3]
    %s627 = scalar_lea.vmem [#allocation0], 280
    %628 = vst [vmem:[%s627] sm:%s3] %v626
    %s629 = smul.addr 2, 34
    %s630 = scalar_lea.vmem %s0, %s629
    %v631 = vld [vmem:[%s630] sm:%s3]
    %s632 = scalar_lea.vmem [#allocation0], 272
    %633 = vst [vmem:[%s632] sm:%s3] %v631
    %s634 = smul.addr 2, 33
    %s635 = scalar_lea.vmem %s0, %s634
    %v636 = vld [vmem:[%s635] sm:%s3]
    %s637 = scalar_lea.vmem [#allocation0], 264
    %638 = vst [vmem:[%s637] sm:%s3] %v636
    %s639 = smul.addr 2, 32
    %s640 = scalar_lea.vmem %s0, %s639
    %v641 = vld [vmem:[%s640] sm:%s3]
    %s642 = scalar_lea.vmem [#allocation0], 256
    %643 = vst [vmem:[%s642] sm:%s3] %v641
    %s644 = smul.addr 2, 31
    %s645 = scalar_lea.vmem %s0, %s644
    %v646 = vld [vmem:[%s645] sm:%s3]
    %s647 = scalar_lea.vmem [#allocation0], 248
    %648 = vst [vmem:[%s647] sm:%s3] %v646
    %s649 = smul.addr 2, 30
    %s650 = scalar_lea.vmem %s0, %s649
    %v651 = vld [vmem:[%s650] sm:%s3]
    %s652 = scalar_lea.vmem [#allocation0], 240
    %653 = vst [vmem:[%s652] sm:%s3] %v651
    %s654 = smul.addr 2, 29
    %s655 = scalar_lea.vmem %s0, %s654
    %v656 = vld [vmem:[%s655] sm:%s3]
    %s657 = scalar_lea.vmem [#allocation0], 232
    %658 = vst [vmem:[%s657] sm:%s3] %v656
    %s659 = smul.addr 2, 28
    %s660 = scalar_lea.vmem %s0, %s659
    %v661 = vld [vmem:[%s660] sm:%s3]
    %s662 = scalar_lea.vmem [#allocation0], 224
    %663 = vst [vmem:[%s662] sm:%s3] %v661
    %s664 = smul.addr 2, 27
    %s665 = scalar_lea.vmem %s0, %s664
    %v666 = vld [vmem:[%s665] sm:%s3]
    %s667 = scalar_lea.vmem [#allocation0], 216
    %668 = vst [vmem:[%s667] sm:%s3] %v666
    %s669 = smul.addr 2, 26
    %s670 = scalar_lea.vmem %s0, %s669
    %v671 = vld [vmem:[%s670] sm:%s3]
    %s672 = scalar_lea.vmem [#allocation0], 208
    %673 = vst [vmem:[%s672] sm:%s3] %v671
    %s674 = smul.addr 2, 25
    %s675 = scalar_lea.vmem %s0, %s674
    %v676 = vld [vmem:[%s675] sm:%s3]
    %s677 = scalar_lea.vmem [#allocation0], 200
    %678 = vst [vmem:[%s677] sm:%s3] %v676
    %s679 = smul.addr 2, 24
    %s680 = scalar_lea.vmem %s0, %s679
    %v681 = vld [vmem:[%s680] sm:%s3]
    %s682 = scalar_lea.vmem [#allocation0], 192
    %683 = vst [vmem:[%s682] sm:%s3] %v681
    %s684 = smul.addr 2, 23
    %s685 = scalar_lea.vmem %s0, %s684
    %v686 = vld [vmem:[%s685] sm:%s3]
    %s687 = scalar_lea.vmem [#allocation0], 184
    %688 = vst [vmem:[%s687] sm:%s3] %v686
    %s689 = smul.addr 2, 22
    %s690 = scalar_lea.vmem %s0, %s689
    %v691 = vld [vmem:[%s690] sm:%s3]
    %s692 = scalar_lea.vmem [#allocation0], 176
    %693 = vst [vmem:[%s692] sm:%s3] %v691
    %s694 = smul.addr 2, 21
    %s695 = scalar_lea.vmem %s0, %s694
    %v696 = vld [vmem:[%s695] sm:%s3]
    %s697 = scalar_lea.vmem [#allocation0], 168
    %698 = vst [vmem:[%s697] sm:%s3] %v696
    %s699 = smul.addr 2, 20
    %s700 = scalar_lea.vmem %s0, %s699
    %v701 = vld [vmem:[%s700] sm:%s3]
    %s702 = scalar_lea.vmem [#allocation0], 160
    %703 = vst [vmem:[%s702] sm:%s3] %v701
    %s704 = smul.addr 2, 19
    %s705 = scalar_lea.vmem %s0, %s704
    %v706 = vld [vmem:[%s705] sm:%s3]
    %s707 = scalar_lea.vmem [#allocation0], 152
    %708 = vst [vmem:[%s707] sm:%s3] %v706
    %s709 = smul.addr 2, 18
    %s710 = scalar_lea.vmem %s0, %s709
    %v711 = vld [vmem:[%s710] sm:%s3]
    %s712 = scalar_lea.vmem [#allocation0], 144
    %713 = vst [vmem:[%s712] sm:%s3] %v711
    %s714 = smul.addr 2, 17
    %s715 = scalar_lea.vmem %s0, %s714
    %v716 = vld [vmem:[%s715] sm:%s3]
    %s717 = scalar_lea.vmem [#allocation0], 136
    %718 = vst [vmem:[%s717] sm:%s3] %v716
    %s719 = smul.addr 2, 16
    %s720 = scalar_lea.vmem %s0, %s719
    %v721 = vld [vmem:[%s720] sm:%s3]
    %s722 = scalar_lea.vmem [#allocation0], 128
    %723 = vst [vmem:[%s722] sm:%s3] %v721
    %s724 = smul.addr 2, 15
    %s725 = scalar_lea.vmem %s0, %s724
    %v726 = vld [vmem:[%s725] sm:%s3]
    %s727 = scalar_lea.vmem [#allocation0], 120
    %728 = vst [vmem:[%s727] sm:%s3] %v726
    %s729 = smul.addr 2, 14
    %s730 = scalar_lea.vmem %s0, %s729
    %v731 = vld [vmem:[%s730] sm:%s3]
    %s732 = scalar_lea.vmem [#allocation0], 112
    %733 = vst [vmem:[%s732] sm:%s3] %v731
    %s734 = smul.addr 2, 13
    %s735 = scalar_lea.vmem %s0, %s734
    %v736 = vld [vmem:[%s735] sm:%s3]
    %s737 = scalar_lea.vmem [#allocation0], 104
    %738 = vst [vmem:[%s737] sm:%s3] %v736
    %s739 = smul.addr 2, 12
    %s740 = scalar_lea.vmem %s0, %s739
    %v741 = vld [vmem:[%s740] sm:%s3]
    %s742 = scalar_lea.vmem [#allocation0], 96
    %743 = vst [vmem:[%s742] sm:%s3] %v741
    %s744 = smul.addr 2, 11
    %s745 = scalar_lea.vmem %s0, %s744
    %v746 = vld [vmem:[%s745] sm:%s3]
    %s747 = scalar_lea.vmem [#allocation0], 88
    %748 = vst [vmem:[%s747] sm:%s3] %v746
    %s749 = smul.addr 2, 10
    %s750 = scalar_lea.vmem %s0, %s749
    %v751 = vld [vmem:[%s750] sm:%s3]
    %s752 = scalar_lea.vmem [#allocation0], 80
    %753 = vst [vmem:[%s752] sm:%s3] %v751
    %s754 = smul.addr 2, 9
    %s755 = scalar_lea.vmem %s0, %s754
    %v756 = vld [vmem:[%s755] sm:%s3]
    %s757 = scalar_lea.vmem [#allocation0], 72
    %758 = vst [vmem:[%s757] sm:%s3] %v756
    %s759 = smul.addr 2, 8
    %s760 = scalar_lea.vmem %s0, %s759
    %v761 = vld [vmem:[%s760] sm:%s3]
    %s762 = scalar_lea.vmem [#allocation0], 64
    %763 = vst [vmem:[%s762] sm:%s3] %v761
    %s764 = smul.addr 2, 7
    %s765 = scalar_lea.vmem %s0, %s764
    %v766 = vld [vmem:[%s765] sm:%s3]
    %s767 = scalar_lea.vmem [#allocation0], 56
    %768 = vst [vmem:[%s767] sm:%s3] %v766
    %s769 = smul.addr 2, 6
    %s770 = scalar_lea.vmem %s0, %s769
    %v771 = vld [vmem:[%s770] sm:%s3]
    %s772 = scalar_lea.vmem [#allocation0], 48
    %773 = vst [vmem:[%s772] sm:%s3] %v771
    %s774 = smul.addr 2, 5
    %s775 = scalar_lea.vmem %s0, %s774
    %v776 = vld [vmem:[%s775] sm:%s3]
    %s777 = scalar_lea.vmem [#allocation0], 40
    %778 = vst [vmem:[%s777] sm:%s3] %v776
    %s779 = smul.addr 2, 4
    %s780 = scalar_lea.vmem %s0, %s779
    %v781 = vld [vmem:[%s780] sm:%s3]
    %s782 = scalar_lea.vmem [#allocation0], 32
    %783 = vst [vmem:[%s782] sm:%s3] %v781
    %s784 = smul.addr 2, 3
    %s785 = scalar_lea.vmem %s0, %s784
    %v786 = vld [vmem:[%s785] sm:%s3]
    %s787 = scalar_lea.vmem [#allocation0], 24
    %788 = vst [vmem:[%s787] sm:%s3] %v786
    %s789 = smul.addr 2, 2
    %s790 = scalar_lea.vmem %s0, %s789
    %v791 = vld [vmem:[%s790] sm:%s3]
    %s792 = scalar_lea.vmem [#allocation0], 16
    %793 = vst [vmem:[%s792] sm:%s3] %v791
    %s794 = scalar_lea.vmem %s0, 2
    %v795 = vld [vmem:[%s794] sm:%s3]
    %s796 = scalar_lea.vmem [#allocation0], 8
    %797 = vst [vmem:[%s796] sm:%s3] %v795
    %v798 = vld [vmem:[%s0] sm:%s3]
    %799 = vst [vmem:[#allocation0] sm:%s3] %v798
    %v800 = vld [vmem:[#allocation0] sm:$0x3]
    %801 = vst [vmem:[%s1] ss:$16 sm:$0x3] %v800
    %s802 = scalar_lea.vmem [#allocation0], 8
    %v803 = vld [vmem:[%s802] sm:$0x3]
    %s804 = scalar_lea.vmem %s1, 8
    %805 = vst [vmem:[%s804] ss:$16 sm:$0x3] %v803
    %s806 = scalar_lea.vmem [#allocation0], 16
    %v807 = vld [vmem:[%s806] sm:$0x3]
    %s808 = scalar_lea.vmem %s1, 1
    %809 = vst [vmem:[%s808] ss:$16 sm:$0x3] %v807
    %s810 = scalar_lea.vmem [#allocation0], 24
    %v811 = vld [vmem:[%s810] sm:$0x3]
    %s812 = scalar_lea.vmem %s1, 9
    %813 = vst [vmem:[%s812] ss:$16 sm:$0x3] %v811
    %s814 = scalar_lea.vmem [#allocation0], 32
    %v815 = vld [vmem:[%s814] sm:$0x3]
    %s816 = scalar_lea.vmem %s1, 2
    %817 = vst [vmem:[%s816] ss:$16 sm:$0x3] %v815
    %s818 = scalar_lea.vmem [#allocation0], 40
    %v819 = vld [vmem:[%s818] sm:$0x3]
    %s820 = scalar_lea.vmem %s1, 10
    %821 = vst [vmem:[%s820] ss:$16 sm:$0x3] %v819
    %s822 = scalar_lea.vmem [#allocation0], 48
    %v823 = vld [vmem:[%s822] sm:$0x3]
    %s824 = scalar_lea.vmem %s1, 3
    %825 = vst [vmem:[%s824] ss:$16 sm:$0x3] %v823
    %s826 = scalar_lea.vmem [#allocation0], 56
    %v827 = vld [vmem:[%s826] sm:$0x3]
    %s828 = scalar_lea.vmem %s1, 11
    %829 = vst [vmem:[%s828] ss:$16 sm:$0x3] %v827
    %s830 = scalar_lea.vmem [#allocation0], 64
    %v831 = vld [vmem:[%s830] sm:$0x3]
    %s832 = scalar_lea.vmem %s1, 4
    %833 = vst [vmem:[%s832] ss:$16 sm:$0x3] %v831
    %s834 = scalar_lea.vmem [#allocation0], 72
    %v835 = vld [vmem:[%s834] sm:$0x3]
    %s836 = scalar_lea.vmem %s1, 12
    %837 = vst [vmem:[%s836] ss:$16 sm:$0x3] %v835
    %s838 = scalar_lea.vmem [#allocation0], 80
    %v839 = vld [vmem:[%s838] sm:$0x3]
    %s840 = scalar_lea.vmem %s1, 5
    %841 = vst [vmem:[%s840] ss:$16 sm:$0x3] %v839
    %s842 = scalar_lea.vmem [#allocation0], 88
    %v843 = vld [vmem:[%s842] sm:$0x3]
    %s844 = scalar_lea.vmem %s1, 13
    %845 = vst [vmem:[%s844] ss:$16 sm:$0x3] %v843
    %s846 = scalar_lea.vmem [#allocation0], 96
    %v847 = vld [vmem:[%s846] sm:$0x3]
    %s848 = scalar_lea.vmem %s1, 6
    %849 = vst [vmem:[%s848] ss:$16 sm:$0x3] %v847
    %s850 = scalar_lea.vmem [#allocation0], 104
    %v851 = vld [vmem:[%s850] sm:$0x3]
    %s852 = scalar_lea.vmem %s1, 14
    %853 = vst [vmem:[%s852] ss:$16 sm:$0x3] %v851
    %s854 = scalar_lea.vmem [#allocation0], 112
    %v855 = vld [vmem:[%s854] sm:$0x3]
    %s856 = scalar_lea.vmem %s1, 7
    %857 = vst [vmem:[%s856] ss:$16 sm:$0x3] %v855
    %s858 = scalar_lea.vmem [#allocation0], 120
    %v859 = vld [vmem:[%s858] sm:$0x3]
    %s860 = scalar_lea.vmem %s1, 15
    %861 = vst [vmem:[%s860] ss:$16 sm:$0x3] %v859
    %s862 = scalar_lea.vmem [#allocation0], 128
    %v863 = vld [vmem:[%s862] sm:$0x3]
    %s864 = scalar_lea.vmem %s1, 32
    %865 = vst [vmem:[%s864] ss:$16 sm:$0x3] %v863
    %s866 = scalar_lea.vmem [#allocation0], 136
    %v867 = vld [vmem:[%s866] sm:$0x3]
    %s868 = scalar_lea.vmem %s1, 40
    %869 = vst [vmem:[%s868] ss:$16 sm:$0x3] %v867
    %s870 = scalar_lea.vmem [#allocation0], 144
    %v871 = vld [vmem:[%s870] sm:$0x3]
    %s872 = scalar_lea.vmem %s1, 33
    %873 = vst [vmem:[%s872] ss:$16 sm:$0x3] %v871
    %s874 = scalar_lea.vmem [#allocation0], 152
    %v875 = vld [vmem:[%s874] sm:$0x3]
    %s876 = scalar_lea.vmem %s1, 41
    %877 = vst [vmem:[%s876] ss:$16 sm:$0x3] %v875
    %s878 = scalar_lea.vmem [#allocation0], 160
    %v879 = vld [vmem:[%s878] sm:$0x3]
    %s880 = scalar_lea.vmem %s1, 34
    %881 = vst [vmem:[%s880] ss:$16 sm:$0x3] %v879
    %s882 = scalar_lea.vmem [#allocation0], 168
    %v883 = vld [vmem:[%s882] sm:$0x3]
    %s884 = scalar_lea.vmem %s1, 42
    %885 = vst [vmem:[%s884] ss:$16 sm:$0x3] %v883
    %s886 = scalar_lea.vmem [#allocation0], 176
    %v887 = vld [vmem:[%s886] sm:$0x3]
    %s888 = scalar_lea.vmem %s1, 35
    %889 = vst [vmem:[%s888] ss:$16 sm:$0x3] %v887
    %s890 = scalar_lea.vmem [#allocation0], 184
    %v891 = vld [vmem:[%s890] sm:$0x3]
    %s892 = scalar_lea.vmem %s1, 43
    %893 = vst [vmem:[%s892] ss:$16 sm:$0x3] %v891
    %s894 = scalar_lea.vmem [#allocation0], 192
    %v895 = vld [vmem:[%s894] sm:$0x3]
    %s896 = scalar_lea.vmem %s1, 36
    %897 = vst [vmem:[%s896] ss:$16 sm:$0x3] %v895
    %s898 = scalar_lea.vmem [#allocation0], 200
    %v899 = vld [vmem:[%s898] sm:$0x3]
    %s900 = scalar_lea.vmem %s1, 44
    %901 = vst [vmem:[%s900] ss:$16 sm:$0x3] %v899
    %s902 = scalar_lea.vmem [#allocation0], 208
    %v903 = vld [vmem:[%s902] sm:$0x3]
    %s904 = scalar_lea.vmem %s1, 37
    %905 = vst [vmem:[%s904] ss:$16 sm:$0x3] %v903
    %s906 = scalar_lea.vmem [#allocation0], 216
    %v907 = vld [vmem:[%s906] sm:$0x3]
    %s908 = scalar_lea.vmem %s1, 45
    %909 = vst [vmem:[%s908] ss:$16 sm:$0x3] %v907
    %s910 = scalar_lea.vmem [#allocation0], 224
    %v911 = vld [vmem:[%s910] sm:$0x3]
    %s912 = scalar_lea.vmem %s1, 38
    %913 = vst [vmem:[%s912] ss:$16 sm:$0x3] %v911
    %s914 = scalar_lea.vmem [#allocation0], 232
    %v915 = vld [vmem:[%s914] sm:$0x3]
    %s916 = scalar_lea.vmem %s1, 46
    %917 = vst [vmem:[%s916] ss:$16 sm:$0x3] %v915
    %s918 = scalar_lea.vmem [#allocation0], 240
    %v919 = vld [vmem:[%s918] sm:$0x3]
    %s920 = scalar_lea.vmem %s1, 39
    %921 = vst [vmem:[%s920] ss:$16 sm:$0x3] %v919
    %s922 = scalar_lea.vmem [#allocation0], 248
    %v923 = vld [vmem:[%s922] sm:$0x3]
    %s924 = scalar_lea.vmem %s1, 47
    %925 = vst [vmem:[%s924] ss:$16 sm:$0x3] %v923
    %s926 = scalar_lea.vmem [#allocation0], 256
    %v927 = vld [vmem:[%s926] sm:$0x3]
    %s928 = scalar_lea.vmem %s1, 64
    %929 = vst [vmem:[%s928] ss:$16 sm:$0x3] %v927
    %s930 = scalar_lea.vmem [#allocation0], 264
    %v931 = vld [vmem:[%s930] sm:$0x3]
    %s932 = scalar_lea.vmem %s1, 72
    %933 = vst [vmem:[%s932] ss:$16 sm:$0x3] %v931
    %s934 = scalar_lea.vmem [#allocation0], 272
    %v935 = vld [vmem:[%s934] sm:$0x3]
    %s936 = scalar_lea.vmem %s1, 65
    %937 = vst [vmem:[%s936] ss:$16 sm:$0x3] %v935
    %s938 = scalar_lea.vmem [#allocation0], 280
    %v939 = vld [vmem:[%s938] sm:$0x3]
    %s940 = scalar_lea.vmem %s1, 73
    %941 = vst [vmem:[%s940] ss:$16 sm:$0x3] %v939
    %s942 = scalar_lea.vmem [#allocation0], 288
    %v943 = vld [vmem:[%s942] sm:$0x3]
    %s944 = scalar_lea.vmem %s1, 66
    %945 = vst [vmem:[%s944] ss:$16 sm:$0x3] %v943
    %s946 = scalar_lea.vmem [#allocation0], 296
    %v947 = vld [vmem:[%s946] sm:$0x3]
    %s948 = scalar_lea.vmem %s1, 74
    %949 = vst [vmem:[%s948] ss:$16 sm:$0x3] %v947
    %s950 = scalar_lea.vmem [#allocation0], 304
    %v951 = vld [vmem:[%s950] sm:$0x3]
    %s952 = scalar_lea.vmem %s1, 67
    %953 = vst [vmem:[%s952] ss:$16 sm:$0x3] %v951
    %s954 = scalar_lea.vmem [#allocation0], 312
    %v955 = vld [vmem:[%s954] sm:$0x3]
    %s956 = scalar_lea.vmem %s1, 75
    %957 = vst [vmem:[%s956] ss:$16 sm:$0x3] %v955
    %s958 = scalar_lea.vmem [#allocation0], 320
    %v959 = vld [vmem:[%s958] sm:$0x3]
    %s960 = scalar_lea.vmem %s1, 68
    %961 = vst [vmem:[%s960] ss:$16 sm:$0x3] %v959
    %s962 = scalar_lea.vmem [#allocation0], 328
    %v963 = vld [vmem:[%s962] sm:$0x3]
    %s964 = scalar_lea.vmem %s1, 76
    %965 = vst [vmem:[%s964] ss:$16 sm:$0x3] %v963
    %s966 = scalar_lea.vmem [#allocation0], 336
    %v967 = vld [vmem:[%s966] sm:$0x3]
    %s968 = scalar_lea.vmem %s1, 69
    %969 = vst [vmem:[%s968] ss:$16 sm:$0x3] %v967
    %s970 = scalar_lea.vmem [#allocation0], 344
    %v971 = vld [vmem:[%s970] sm:$0x3]
    %s972 = scalar_lea.vmem %s1, 77
    %973 = vst [vmem:[%s972] ss:$16 sm:$0x3] %v971
    %s974 = scalar_lea.vmem [#allocation0], 352
    %v975 = vld [vmem:[%s974] sm:$0x3]
    %s976 = scalar_lea.vmem %s1, 70
    %977 = vst [vmem:[%s976] ss:$16 sm:$0x3] %v975
    %s978 = scalar_lea.vmem [#allocation0], 360
    %v979 = vld [vmem:[%s978] sm:$0x3]
    %s980 = scalar_lea.vmem %s1, 78
    %981 = vst [vmem:[%s980] ss:$16 sm:$0x3] %v979
    %s982 = scalar_lea.vmem [#allocation0], 368
    %v983 = vld [vmem:[%s982] sm:$0x3]
    %s984 = scalar_lea.vmem %s1, 71
    %985 = vst [vmem:[%s984] ss:$16 sm:$0x3] %v983
    %s986 = scalar_lea.vmem [#allocation0], 376
    %v987 = vld [vmem:[%s986] sm:$0x3]
    %s988 = scalar_lea.vmem %s1, 79
    %989 = vst [vmem:[%s988] ss:$16 sm:$0x3] %v987
    %s990 = scalar_lea.vmem [#allocation0], 384
    %v991 = vld [vmem:[%s990] sm:$0x3]
    %s992 = scalar_lea.vmem %s1, 96
    %993 = vst [vmem:[%s992] ss:$16 sm:$0x3] %v991
    %s994 = scalar_lea.vmem [#allocation0], 392
    %v995 = vld [vmem:[%s994] sm:$0x3]
    %s996 = scalar_lea.vmem %s1, 104
    %997 = vst [vmem:[%s996] ss:$16 sm:$0x3] %v995
    %s998 = scalar_lea.vmem [#allocation0], 400
    %v999 = vld [vmem:[%s998] sm:$0x3]
    %s1000 = scalar_lea.vmem %s1, 97
    %1001 = vst [vmem:[%s1000] ss:$16 sm:$0x3] %v999
    %s1002 = scalar_lea.vmem [#allocation0], 408
    %v1003 = vld [vmem:[%s1002] sm:$0x3]
    %s1004 = scalar_lea.vmem %s1, 105
    %1005 = vst [vmem:[%s1004] ss:$16 sm:$0x3] %v1003
    %s1006 = scalar_lea.vmem [#allocation0], 416
    %v1007 = vld [vmem:[%s1006] sm:$0x3]
    %s1008 = scalar_lea.vmem %s1, 98
    %1009 = vst [vmem:[%s1008] ss:$16 sm:$0x3] %v1007
    %s1010 = scalar_lea.vmem [#allocation0], 424
    %v1011 = vld [vmem:[%s1010] sm:$0x3]
    %s1012 = scalar_lea.vmem %s1, 106
    %1013 = vst [vmem:[%s1012] ss:$16 sm:$0x3] %v1011
    %s1014 = scalar_lea.vmem [#allocation0], 432
    %v1015 = vld [vmem:[%s1014] sm:$0x3]
    %s1016 = scalar_lea.vmem %s1, 99
    %1017 = vst [vmem:[%s1016] ss:$16 sm:$0x3] %v1015
    %s1018 = scalar_lea.vmem [#allocation0], 440
    %v1019 = vld [vmem:[%s1018] sm:$0x3]
    %s1020 = scalar_lea.vmem %s1, 107
    %1021 = vst [vmem:[%s1020] ss:$16 sm:$0x3] %v1019
    %s1022 = scalar_lea.vmem [#allocation0], 448
    %v1023 = vld [vmem:[%s1022] sm:$0x3]
    %s1024 = scalar_lea.vmem %s1, 100
    %1025 = vst [vmem:[%s1024] ss:$16 sm:$0x3] %v1023
    %s1026 = scalar_lea.vmem [#allocation0], 456
    %v1027 = vld [vmem:[%s1026] sm:$0x3]
    %s1028 = scalar_lea.vmem %s1, 108
    %1029 = vst [vmem:[%s1028] ss:$16 sm:$0x3] %v1027
    %s1030 = scalar_lea.vmem [#allocation0], 464
    %v1031 = vld [vmem:[%s1030] sm:$0x3]
    %s1032 = scalar_lea.vmem %s1, 101
    %1033 = vst [vmem:[%s1032] ss:$16 sm:$0x3] %v1031
    %s1034 = scalar_lea.vmem [#allocation0], 472
    %v1035 = vld [vmem:[%s1034] sm:$0x3]
    %s1036 = scalar_lea.vmem %s1, 109
    %1037 = vst [vmem:[%s1036] ss:$16 sm:$0x3] %v1035
    %s1038 = scalar_lea.vmem [#allocation0], 480
    %v1039 = vld [vmem:[%s1038] sm:$0x3]
    %s1040 = scalar_lea.vmem %s1, 102
    %1041 = vst [vmem:[%s1040] ss:$16 sm:$0x3] %v1039
    %s1042 = scalar_lea.vmem [#allocation0], 488
    %v1043 = vld [vmem:[%s1042] sm:$0x3]
    %s1044 = scalar_lea.vmem %s1, 110
    %1045 = vst [vmem:[%s1044] ss:$16 sm:$0x3] %v1043
    %s1046 = scalar_lea.vmem [#allocation0], 496
    %v1047 = vld [vmem:[%s1046] sm:$0x3]
    %s1048 = scalar_lea.vmem %s1, 103
    %1049 = vst [vmem:[%s1048] ss:$16 sm:$0x3] %v1047
    %s1050 = scalar_lea.vmem [#allocation0], 504
    %v1051 = vld [vmem:[%s1050] sm:$0x3]
    %s1052 = scalar_lea.vmem %s1, 111
    %1053 = vst [vmem:[%s1052] ss:$16 sm:$0x3] %v1051
    %s1054 = scalar_lea.vmem [#allocation0], 512
    %v1055 = vld [vmem:[%s1054] sm:$0x3]
    %s1056 = scalar_lea.vmem %s1, 128
    %1057 = vst [vmem:[%s1056] ss:$16 sm:$0x3] %v1055
    %s1058 = scalar_lea.vmem [#allocation0], 520
    %v1059 = vld [vmem:[%s1058] sm:$0x3]
    %s1060 = scalar_lea.vmem %s1, 136
    %1061 = vst [vmem:[%s1060] ss:$16 sm:$0x3] %v1059
    %s1062 = scalar_lea.vmem [#allocation0], 528
    %v1063 = vld [vmem:[%s1062] sm:$0x3]
    %s1064 = scalar_lea.vmem %s1, 129
    %1065 = vst [vmem:[%s1064] ss:$16 sm:$0x3] %v1063
    %s1066 = scalar_lea.vmem [#allocation0], 536
    %v1067 = vld [vmem:[%s1066] sm:$0x3]
    %s1068 = scalar_lea.vmem %s1, 137
    %1069 = vst [vmem:[%s1068] ss:$16 sm:$0x3] %v1067
    %s1070 = scalar_lea.vmem [#allocation0], 544
    %v1071 = vld [vmem:[%s1070] sm:$0x3]
    %s1072 = scalar_lea.vmem %s1, 130
    %1073 = vst [vmem:[%s1072] ss:$16 sm:$0x3] %v1071
    %s1074 = scalar_lea.vmem [#allocation0], 552
    %v1075 = vld [vmem:[%s1074] sm:$0x3]
    %s1076 = scalar_lea.vmem %s1, 138
    %1077 = vst [vmem:[%s1076] ss:$16 sm:$0x3] %v1075
    %s1078 = scalar_lea.vmem [#allocation0], 560
    %v1079 = vld [vmem:[%s1078] sm:$0x3]
    %s1080 = scalar_lea.vmem %s1, 131
    %1081 = vst [vmem:[%s1080] ss:$16 sm:$0x3] %v1079
    %s1082 = scalar_lea.vmem [#allocation0], 568
    %v1083 = vld [vmem:[%s1082] sm:$0x3]
    %s1084 = scalar_lea.vmem %s1, 139
    %1085 = vst [vmem:[%s1084] ss:$16 sm:$0x3] %v1083
    %s1086 = scalar_lea.vmem [#allocation0], 576
    %v1087 = vld [vmem:[%s1086] sm:$0x3]
    %s1088 = scalar_lea.vmem %s1, 132
    %1089 = vst [vmem:[%s1088] ss:$16 sm:$0x3] %v1087
    %s1090 = scalar_lea.vmem [#allocation0], 584
    %v1091 = vld [vmem:[%s1090] sm:$0x3]
    %s1092 = scalar_lea.vmem %s1, 140
    %1093 = vst [vmem:[%s1092] ss:$16 sm:$0x3] %v1091
    %s1094 = scalar_lea.vmem [#allocation0], 592
    %v1095 = vld [vmem:[%s1094] sm:$0x3]
    %s1096 = scalar_lea.vmem %s1, 133
    %1097 = vst [vmem:[%s1096] ss:$16 sm:$0x3] %v1095
    %s1098 = scalar_lea.vmem [#allocation0], 600
    %v1099 = vld [vmem:[%s1098] sm:$0x3]
    %s1100 = scalar_lea.vmem %s1, 141
    %1101 = vst [vmem:[%s1100] ss:$16 sm:$0x3] %v1099
    %s1102 = scalar_lea.vmem [#allocation0], 608
    %v1103 = vld [vmem:[%s1102] sm:$0x3]
    %s1104 = scalar_lea.vmem %s1, 134
    %1105 = vst [vmem:[%s1104] ss:$16 sm:$0x3] %v1103
    %s1106 = scalar_lea.vmem [#allocation0], 616
    %v1107 = vld [vmem:[%s1106] sm:$0x3]
    %s1108 = scalar_lea.vmem %s1, 142
    %1109 = vst [vmem:[%s1108] ss:$16 sm:$0x3] %v1107
    %s1110 = scalar_lea.vmem [#allocation0], 624
    %v1111 = vld [vmem:[%s1110] sm:$0x3]
    %s1112 = scalar_lea.vmem %s1, 135
    %1113 = vst [vmem:[%s1112] ss:$16 sm:$0x3] %v1111
    %s1114 = scalar_lea.vmem [#allocation0], 632
    %v1115 = vld [vmem:[%s1114] sm:$0x3]
    %s1116 = scalar_lea.vmem %s1, 143
    %1117 = vst [vmem:[%s1116] ss:$16 sm:$0x3] %v1115
    %s1118 = scalar_lea.vmem [#allocation0], 640
    %v1119 = vld [vmem:[%s1118] sm:$0x3]
    %s1120 = scalar_lea.vmem %s1, 160
    %1121 = vst [vmem:[%s1120] ss:$16 sm:$0x3] %v1119
    %s1122 = scalar_lea.vmem [#allocation0], 648
    %v1123 = vld [vmem:[%s1122] sm:$0x3]
    %s1124 = scalar_lea.vmem %s1, 168
    %1125 = vst [vmem:[%s1124] ss:$16 sm:$0x3] %v1123
    %s1126 = scalar_lea.vmem [#allocation0], 656
    %v1127 = vld [vmem:[%s1126] sm:$0x3]
    %s1128 = scalar_lea.vmem %s1, 161
    %1129 = vst [vmem:[%s1128] ss:$16 sm:$0x3] %v1127
    %s1130 = scalar_lea.vmem [#allocation0], 664
    %v1131 = vld [vmem:[%s1130] sm:$0x3]
    %s1132 = scalar_lea.vmem %s1, 169
    %1133 = vst [vmem:[%s1132] ss:$16 sm:$0x3] %v1131
    %s1134 = scalar_lea.vmem [#allocation0], 672
    %v1135 = vld [vmem:[%s1134] sm:$0x3]
    %s1136 = scalar_lea.vmem %s1, 162
    %1137 = vst [vmem:[%s1136] ss:$16 sm:$0x3] %v1135
    %s1138 = scalar_lea.vmem [#allocation0], 680
    %v1139 = vld [vmem:[%s1138] sm:$0x3]
    %s1140 = scalar_lea.vmem %s1, 170
    %1141 = vst [vmem:[%s1140] ss:$16 sm:$0x3] %v1139
    %s1142 = scalar_lea.vmem [#allocation0], 688
    %v1143 = vld [vmem:[%s1142] sm:$0x3]
    %s1144 = scalar_lea.vmem %s1, 163
    %1145 = vst [vmem:[%s1144] ss:$16 sm:$0x3] %v1143
    %s1146 = scalar_lea.vmem [#allocation0], 696
    %v1147 = vld [vmem:[%s1146] sm:$0x3]
    %s1148 = scalar_lea.vmem %s1, 171
    %1149 = vst [vmem:[%s1148] ss:$16 sm:$0x3] %v1147
    %s1150 = scalar_lea.vmem [#allocation0], 704
    %v1151 = vld [vmem:[%s1150] sm:$0x3]
    %s1152 = scalar_lea.vmem %s1, 164
    %1153 = vst [vmem:[%s1152] ss:$16 sm:$0x3] %v1151
    %s1154 = scalar_lea.vmem [#allocation0], 712
    %v1155 = vld [vmem:[%s1154] sm:$0x3]
    %s1156 = scalar_lea.vmem %s1, 172
    %1157 = vst [vmem:[%s1156] ss:$16 sm:$0x3] %v1155
    %s1158 = scalar_lea.vmem [#allocation0], 720
    %v1159 = vld [vmem:[%s1158] sm:$0x3]
    %s1160 = scalar_lea.vmem %s1, 165
    %1161 = vst [vmem:[%s1160] ss:$16 sm:$0x3] %v1159
    %s1162 = scalar_lea.vmem [#allocation0], 728
    %v1163 = vld [vmem:[%s1162] sm:$0x3]
    %s1164 = scalar_lea.vmem %s1, 173
    %1165 = vst [vmem:[%s1164] ss:$16 sm:$0x3] %v1163
    %s1166 = scalar_lea.vmem [#allocation0], 736
    %v1167 = vld [vmem:[%s1166] sm:$0x3]
    %s1168 = scalar_lea.vmem %s1, 166
    %1169 = vst [vmem:[%s1168] ss:$16 sm:$0x3] %v1167
    %s1170 = scalar_lea.vmem [#allocation0], 744
    %v1171 = vld [vmem:[%s1170] sm:$0x3]
    %s1172 = scalar_lea.vmem %s1, 174
    %1173 = vst [vmem:[%s1172] ss:$16 sm:$0x3] %v1171
    %s1174 = scalar_lea.vmem [#allocation0], 752
    %v1175 = vld [vmem:[%s1174] sm:$0x3]
    %s1176 = scalar_lea.vmem %s1, 167
    %1177 = vst [vmem:[%s1176] ss:$16 sm:$0x3] %v1175
    %s1178 = scalar_lea.vmem [#allocation0], 760
    %v1179 = vld [vmem:[%s1178] sm:$0x3]
    %s1180 = scalar_lea.vmem %s1, 175
    %1181 = vst [vmem:[%s1180] ss:$16 sm:$0x3] %v1179
    %s1182 = scalar_lea.vmem [#allocation0], 768
    %v1183 = vld [vmem:[%s1182] sm:$0x3]
    %s1184 = scalar_lea.vmem %s1, 192
    %1185 = vst [vmem:[%s1184] ss:$16 sm:$0x3] %v1183
    %s1186 = scalar_lea.vmem [#allocation0], 776
    %v1187 = vld [vmem:[%s1186] sm:$0x3]
    %s1188 = scalar_lea.vmem %s1, 200
    %1189 = vst [vmem:[%s1188] ss:$16 sm:$0x3] %v1187
    %s1190 = scalar_lea.vmem [#allocation0], 784
    %v1191 = vld [vmem:[%s1190] sm:$0x3]
    %s1192 = scalar_lea.vmem %s1, 193
    %1193 = vst [vmem:[%s1192] ss:$16 sm:$0x3] %v1191
    %s1194 = scalar_lea.vmem [#allocation0], 792
    %v1195 = vld [vmem:[%s1194] sm:$0x3]
    %s1196 = scalar_lea.vmem %s1, 201
    %1197 = vst [vmem:[%s1196] ss:$16 sm:$0x3] %v1195
    %s1198 = scalar_lea.vmem [#allocation0], 800
    %v1199 = vld [vmem:[%s1198] sm:$0x3]
    %s1200 = scalar_lea.vmem %s1, 194
    %1201 = vst [vmem:[%s1200] ss:$16 sm:$0x3] %v1199
    %s1202 = scalar_lea.vmem [#allocation0], 808
    %v1203 = vld [vmem:[%s1202] sm:$0x3]
    %s1204 = scalar_lea.vmem %s1, 202
    %1205 = vst [vmem:[%s1204] ss:$16 sm:$0x3] %v1203
    %s1206 = scalar_lea.vmem [#allocation0], 816
    %v1207 = vld [vmem:[%s1206] sm:$0x3]
    %s1208 = scalar_lea.vmem %s1, 195
    %1209 = vst [vmem:[%s1208] ss:$16 sm:$0x3] %v1207
    %s1210 = scalar_lea.vmem [#allocation0], 824
    %v1211 = vld [vmem:[%s1210] sm:$0x3]
    %s1212 = scalar_lea.vmem %s1, 203
    %1213 = vst [vmem:[%s1212] ss:$16 sm:$0x3] %v1211
    %s1214 = scalar_lea.vmem [#allocation0], 832
    %v1215 = vld [vmem:[%s1214] sm:$0x3]
    %s1216 = scalar_lea.vmem %s1, 196
    %1217 = vst [vmem:[%s1216] ss:$16 sm:$0x3] %v1215
    %s1218 = scalar_lea.vmem [#allocation0], 840
    %v1219 = vld [vmem:[%s1218] sm:$0x3]
    %s1220 = scalar_lea.vmem %s1, 204
    %1221 = vst [vmem:[%s1220] ss:$16 sm:$0x3] %v1219
    %s1222 = scalar_lea.vmem [#allocation0], 848
    %v1223 = vld [vmem:[%s1222] sm:$0x3]
    %s1224 = scalar_lea.vmem %s1, 197
    %1225 = vst [vmem:[%s1224] ss:$16 sm:$0x3] %v1223
    %s1226 = scalar_lea.vmem [#allocation0], 856
    %v1227 = vld [vmem:[%s1226] sm:$0x3]
    %s1228 = scalar_lea.vmem %s1, 205
    %1229 = vst [vmem:[%s1228] ss:$16 sm:$0x3] %v1227
    %s1230 = scalar_lea.vmem [#allocation0], 864
    %v1231 = vld [vmem:[%s1230] sm:$0x3]
    %s1232 = scalar_lea.vmem %s1, 198
    %1233 = vst [vmem:[%s1232] ss:$16 sm:$0x3] %v1231
    %s1234 = scalar_lea.vmem [#allocation0], 872
    %v1235 = vld [vmem:[%s1234] sm:$0x3]
    %s1236 = scalar_lea.vmem %s1, 206
    %1237 = vst [vmem:[%s1236] ss:$16 sm:$0x3] %v1235
    %s1238 = scalar_lea.vmem [#allocation0], 880
    %v1239 = vld [vmem:[%s1238] sm:$0x3]
    %s1240 = scalar_lea.vmem %s1, 199
    %1241 = vst [vmem:[%s1240] ss:$16 sm:$0x3] %v1239
    %s1242 = scalar_lea.vmem [#allocation0], 888
    %v1243 = vld [vmem:[%s1242] sm:$0x3]
    %s1244 = scalar_lea.vmem %s1, 207
    %1245 = vst [vmem:[%s1244] ss:$16 sm:$0x3] %v1243
    %s1246 = scalar_lea.vmem [#allocation0], 896
    %v1247 = vld [vmem:[%s1246] sm:$0x3]
    %s1248 = scalar_lea.vmem %s1, 224
    %1249 = vst [vmem:[%s1248] ss:$16 sm:$0x3] %v1247
    %s1250 = scalar_lea.vmem [#allocation0], 904
    %v1251 = vld [vmem:[%s1250] sm:$0x3]
    %s1252 = scalar_lea.vmem %s1, 232
    %1253 = vst [vmem:[%s1252] ss:$16 sm:$0x3] %v1251
    %s1254 = scalar_lea.vmem [#allocation0], 912
    %v1255 = vld [vmem:[%s1254] sm:$0x3]
    %s1256 = scalar_lea.vmem %s1, 225
    %1257 = vst [vmem:[%s1256] ss:$16 sm:$0x3] %v1255
    %s1258 = scalar_lea.vmem [#allocation0], 920
    %v1259 = vld [vmem:[%s1258] sm:$0x3]
    %s1260 = scalar_lea.vmem %s1, 233
    %1261 = vst [vmem:[%s1260] ss:$16 sm:$0x3] %v1259
    %s1262 = scalar_lea.vmem [#allocation0], 928
    %v1263 = vld [vmem:[%s1262] sm:$0x3]
    %s1264 = scalar_lea.vmem %s1, 226
    %1265 = vst [vmem:[%s1264] ss:$16 sm:$0x3] %v1263
    %s1266 = scalar_lea.vmem [#allocation0], 936
    %v1267 = vld [vmem:[%s1266] sm:$0x3]
    %s1268 = scalar_lea.vmem %s1, 234
    %1269 = vst [vmem:[%s1268] ss:$16 sm:$0x3] %v1267
    %s1270 = scalar_lea.vmem [#allocation0], 944
    %v1271 = vld [vmem:[%s1270] sm:$0x3]
    %s1272 = scalar_lea.vmem %s1, 227
    %1273 = vst [vmem:[%s1272] ss:$16 sm:$0x3] %v1271
    %s1274 = scalar_lea.vmem [#allocation0], 952
    %v1275 = vld [vmem:[%s1274] sm:$0x3]
    %s1276 = scalar_lea.vmem %s1, 235
    %1277 = vst [vmem:[%s1276] ss:$16 sm:$0x3] %v1275
    %s1278 = scalar_lea.vmem [#allocation0], 960
    %v1279 = vld [vmem:[%s1278] sm:$0x3]
    %s1280 = scalar_lea.vmem %s1, 228
    %1281 = vst [vmem:[%s1280] ss:$16 sm:$0x3] %v1279
    %s1282 = scalar_lea.vmem [#allocation0], 968
    %v1283 = vld [vmem:[%s1282] sm:$0x3]
    %s1284 = scalar_lea.vmem %s1, 236
    %1285 = vst [vmem:[%s1284] ss:$16 sm:$0x3] %v1283
    %s1286 = scalar_lea.vmem [#allocation0], 976
    %v1287 = vld [vmem:[%s1286] sm:$0x3]
    %s1288 = scalar_lea.vmem %s1, 229
    %1289 = vst [vmem:[%s1288] ss:$16 sm:$0x3] %v1287
    %s1290 = scalar_lea.vmem [#allocation0], 984
    %v1291 = vld [vmem:[%s1290] sm:$0x3]
    %s1292 = scalar_lea.vmem %s1, 237
    %1293 = vst [vmem:[%s1292] ss:$16 sm:$0x3] %v1291
    %s1294 = scalar_lea.vmem [#allocation0], 992
    %v1295 = vld [vmem:[%s1294] sm:$0x3]
    %s1296 = scalar_lea.vmem %s1, 230
    %1297 = vst [vmem:[%s1296] ss:$16 sm:$0x3] %v1295
    %s1298 = scalar_lea.vmem [#allocation0], 1000
    %v1299 = vld [vmem:[%s1298] sm:$0x3]
    %s1300 = scalar_lea.vmem %s1, 238
    %1301 = vst [vmem:[%s1300] ss:$16 sm:$0x3] %v1299
    %s1302 = scalar_lea.vmem [#allocation0], 1008
    %v1303 = vld [vmem:[%s1302] sm:$0x3]
    %s1304 = scalar_lea.vmem %s1, 231
    %1305 = vst [vmem:[%s1304] ss:$16 sm:$0x3] %v1303
    %s1306 = scalar_lea.vmem [#allocation0], 1016
    %v1307 = vld [vmem:[%s1306] sm:$0x3]
    %s1308 = scalar_lea.vmem %s1, 239
    %1309 = vst [vmem:[%s1308] ss:$16 sm:$0x3] %v1307
    %s1310 = scalar_lea.vmem [#allocation0], 1024
    %v1311 = vld [vmem:[%s1310] sm:$0x3]
    %s1312 = scalar_lea.vmem %s1, 256
    %1313 = vst [vmem:[%s1312] ss:$16 sm:$0x3] %v1311
    %s1314 = scalar_lea.vmem [#allocation0], 1032
    %v1315 = vld [vmem:[%s1314] sm:$0x3]
    %s1316 = scalar_lea.vmem %s1, 264
    %1317 = vst [vmem:[%s1316] ss:$16 sm:$0x3] %v1315
    %s1318 = scalar_lea.vmem [#allocation0], 1040
    %v1319 = vld [vmem:[%s1318] sm:$0x3]
    %s1320 = scalar_lea.vmem %s1, 257
    %1321 = vst [vmem:[%s1320] ss:$16 sm:$0x3] %v1319
    %s1322 = scalar_lea.vmem [#allocation0], 1048
    %v1323 = vld [vmem:[%s1322] sm:$0x3]
    %s1324 = scalar_lea.vmem %s1, 265
    %1325 = vst [vmem:[%s1324] ss:$16 sm:$0x3] %v1323
    %s1326 = scalar_lea.vmem [#allocation0], 1056
    %v1327 = vld [vmem:[%s1326] sm:$0x3]
    %s1328 = scalar_lea.vmem %s1, 258
    %1329 = vst [vmem:[%s1328] ss:$16 sm:$0x3] %v1327
    %s1330 = scalar_lea.vmem [#allocation0], 1064
    %v1331 = vld [vmem:[%s1330] sm:$0x3]
    %s1332 = scalar_lea.vmem %s1, 266
    %1333 = vst [vmem:[%s1332] ss:$16 sm:$0x3] %v1331
    %s1334 = scalar_lea.vmem [#allocation0], 1072
    %v1335 = vld [vmem:[%s1334] sm:$0x3]
    %s1336 = scalar_lea.vmem %s1, 259
    %1337 = vst [vmem:[%s1336] ss:$16 sm:$0x3] %v1335
    %s1338 = scalar_lea.vmem [#allocation0], 1080
    %v1339 = vld [vmem:[%s1338] sm:$0x3]
    %s1340 = scalar_lea.vmem %s1, 267
    %1341 = vst [vmem:[%s1340] ss:$16 sm:$0x3] %v1339
    %s1342 = scalar_lea.vmem [#allocation0], 1088
    %v1343 = vld [vmem:[%s1342] sm:$0x3]
    %s1344 = scalar_lea.vmem %s1, 260
    %1345 = vst [vmem:[%s1344] ss:$16 sm:$0x3] %v1343
    %s1346 = scalar_lea.vmem [#allocation0], 1096
    %v1347 = vld [vmem:[%s1346] sm:$0x3]
    %s1348 = scalar_lea.vmem %s1, 268
    %1349 = vst [vmem:[%s1348] ss:$16 sm:$0x3] %v1347
    %s1350 = scalar_lea.vmem [#allocation0], 1104
    %v1351 = vld [vmem:[%s1350] sm:$0x3]
    %s1352 = scalar_lea.vmem %s1, 261
    %1353 = vst [vmem:[%s1352] ss:$16 sm:$0x3] %v1351
    %s1354 = scalar_lea.vmem [#allocation0], 1112
    %v1355 = vld [vmem:[%s1354] sm:$0x3]
    %s1356 = scalar_lea.vmem %s1, 269
    %1357 = vst [vmem:[%s1356] ss:$16 sm:$0x3] %v1355
    %s1358 = scalar_lea.vmem [#allocation0], 1120
    %v1359 = vld [vmem:[%s1358] sm:$0x3]
    %s1360 = scalar_lea.vmem %s1, 262
    %1361 = vst [vmem:[%s1360] ss:$16 sm:$0x3] %v1359
    %s1362 = scalar_lea.vmem [#allocation0], 1128
    %v1363 = vld [vmem:[%s1362] sm:$0x3]
    %s1364 = scalar_lea.vmem %s1, 270
    %1365 = vst [vmem:[%s1364] ss:$16 sm:$0x3] %v1363
    %s1366 = scalar_lea.vmem [#allocation0], 1136
    %v1367 = vld [vmem:[%s1366] sm:$0x3]
    %s1368 = scalar_lea.vmem %s1, 263
    %1369 = vst [vmem:[%s1368] ss:$16 sm:$0x3] %v1367
    %s1370 = scalar_lea.vmem [#allocation0], 1144
    %v1371 = vld [vmem:[%s1370] sm:$0x3]
    %s1372 = scalar_lea.vmem %s1, 271
    %1373 = vst [vmem:[%s1372] ss:$16 sm:$0x3] %v1371
    %s1374 = scalar_lea.vmem [#allocation0], 1152
    %v1375 = vld [vmem:[%s1374] sm:$0x3]
    %s1376 = scalar_lea.vmem %s1, 288
    %1377 = vst [vmem:[%s1376] ss:$16 sm:$0x3] %v1375
    %s1378 = scalar_lea.vmem [#allocation0], 1160
    %v1379 = vld [vmem:[%s1378] sm:$0x3]
    %s1380 = scalar_lea.vmem %s1, 296
    %1381 = vst [vmem:[%s1380] ss:$16 sm:$0x3] %v1379
    %s1382 = scalar_lea.vmem [#allocation0], 1168
    %v1383 = vld [vmem:[%s1382] sm:$0x3]
    %s1384 = scalar_lea.vmem %s1, 289
    %1385 = vst [vmem:[%s1384] ss:$16 sm:$0x3] %v1383
    %s1386 = scalar_lea.vmem [#allocation0], 1176
    %v1387 = vld [vmem:[%s1386] sm:$0x3]
    %s1388 = scalar_lea.vmem %s1, 297
    %1389 = vst [vmem:[%s1388] ss:$16 sm:$0x3] %v1387
    %s1390 = scalar_lea.vmem [#allocation0], 1184
    %v1391 = vld [vmem:[%s1390] sm:$0x3]
    %s1392 = scalar_lea.vmem %s1, 290
    %1393 = vst [vmem:[%s1392] ss:$16 sm:$0x3] %v1391
    %s1394 = scalar_lea.vmem [#allocation0], 1192
    %v1395 = vld [vmem:[%s1394] sm:$0x3]
    %s1396 = scalar_lea.vmem %s1, 298
    %1397 = vst [vmem:[%s1396] ss:$16 sm:$0x3] %v1395
    %s1398 = scalar_lea.vmem [#allocation0], 1200
    %v1399 = vld [vmem:[%s1398] sm:$0x3]
    %s1400 = scalar_lea.vmem %s1, 291
    %1401 = vst [vmem:[%s1400] ss:$16 sm:$0x3] %v1399
    %s1402 = scalar_lea.vmem [#allocation0], 1208
    %v1403 = vld [vmem:[%s1402] sm:$0x3]
    %s1404 = scalar_lea.vmem %s1, 299
    %1405 = vst [vmem:[%s1404] ss:$16 sm:$0x3] %v1403
    %s1406 = scalar_lea.vmem [#allocation0], 1216
    %v1407 = vld [vmem:[%s1406] sm:$0x3]
    %s1408 = scalar_lea.vmem %s1, 292
    %1409 = vst [vmem:[%s1408] ss:$16 sm:$0x3] %v1407
    %s1410 = scalar_lea.vmem [#allocation0], 1224
    %v1411 = vld [vmem:[%s1410] sm:$0x3]
    %s1412 = scalar_lea.vmem %s1, 300
    %1413 = vst [vmem:[%s1412] ss:$16 sm:$0x3] %v1411
    %s1414 = scalar_lea.vmem [#allocation0], 1232
    %v1415 = vld [vmem:[%s1414] sm:$0x3]
    %s1416 = scalar_lea.vmem %s1, 293
    %1417 = vst [vmem:[%s1416] ss:$16 sm:$0x3] %v1415
    %s1418 = scalar_lea.vmem [#allocation0], 1240
    %v1419 = vld [vmem:[%s1418] sm:$0x3]
    %s1420 = scalar_lea.vmem %s1, 301
    %1421 = vst [vmem:[%s1420] ss:$16 sm:$0x3] %v1419
    %s1422 = scalar_lea.vmem [#allocation0], 1248
    %v1423 = vld [vmem:[%s1422] sm:$0x3]
    %s1424 = scalar_lea.vmem %s1, 294
    %1425 = vst [vmem:[%s1424] ss:$16 sm:$0x3] %v1423
    %s1426 = scalar_lea.vmem [#allocation0], 1256
    %v1427 = vld [vmem:[%s1426] sm:$0x3]
    %s1428 = scalar_lea.vmem %s1, 302
    %1429 = vst [vmem:[%s1428] ss:$16 sm:$0x3] %v1427
    %s1430 = scalar_lea.vmem [#allocation0], 1264
    %v1431 = vld [vmem:[%s1430] sm:$0x3]
    %s1432 = scalar_lea.vmem %s1, 295
    %1433 = vst [vmem:[%s1432] ss:$16 sm:$0x3] %v1431
    %s1434 = scalar_lea.vmem [#allocation0], 1272
    %v1435 = vld [vmem:[%s1434] sm:$0x3]
    %s1436 = scalar_lea.vmem %s1, 303
    %1437 = vst [vmem:[%s1436] ss:$16 sm:$0x3] %v1435

// kernel: extrinsic_forward.1
$region0: #{extrinsic_forward.1}
  #allocation0 [shape = 'u32[]', space=smem, size = 0x4, offset = 0x4, fixed_abs, tag = 'smem constant byte address 0x4 - core index']
  #allocation1 [shape = 'u32[144,128]{1,0:T(1,128)}', space=vmem, size = 0x12000, scoped, tag = 'internal scratch']
  #allocation2 [shape = 'f32[16,512]{1,0:T(8,128)}', space=vmem, size = 0x8000, scoped, tag = 'scratch operand']
  %s0 = inlined_call_operand.vmem [shape: f32[8,512], index: 0, kind: input, shape index: {}]
  %s1 = inlined_call_operand.vmem [shape: f32[9,512], index: 1, kind: input, shape index: {}]
  %s2 = inlined_call_operand.vmem [shape: f32[8,72], index: 2, kind: input, shape index: {}]
  %s3 = inlined_call_operand.vmem [shape: f32[8,1], index: 3, kind: input, shape index: {}]
  %s4 = inlined_call_operand.vmem [shape: f32[16,72], index: 4, kind: input, shape index: {}]
  %s5 = inlined_call_operand.vmem [shape: f32[16,1], index: 5, kind: input, shape index: {}]
  %s6 = inlined_call_operand.vmem [shape: f32[16,144], index: 6, kind: input, shape index: {}]
  %s7 = inlined_call_operand.vmem [shape: f32[16,1], index: 7, kind: input, shape index: {}]
  %s8 = inlined_call_operand.vmem [shape: f32[16,5,512], index: 8, kind: input, shape index: {}]
  %s9 = inlined_call_operand.vmem [shape: f32[5,1], index: 9, kind: input, shape index: {}]
  %s10 = inlined_call_operand.vmem [shape: f32[512,2], index: 10, kind: input, shape index: {}]
  %s11 = inlined_call_operand.vmem [shape: f32[4,2], index: 11, kind: output, shape index: {}]
  %s12 = sld [smem:[#allocation0]]
  $region54: #{extrinsic_forward.1} parent=0
    _
  %s14 = ssub.s32 1, %s12
  %s15 = scalar_select 0, %s14, %s12
  // Predicated region
  $region2: #{extrinsic_forward.1} parent=0 // pred_check
    _
  $region3: #{extrinsic_forward.1} parent=0 // pred_check_branch
    %17 = sbr.rel (0) target = $region5
  $region4: #{extrinsic_forward.1} parent=0 // pred_region
    _
  $region5: #{extrinsic_forward.1} parent=0 // pred_fallthru
    _
  // Predicated region
  $region6: #{extrinsic_forward.1} parent=0 // pred_check
    _
  $region7: #{extrinsic_forward.1} parent=0 // pred_check_branch
    %19 = sbr.rel (0) target = $region9
  $region8: #{extrinsic_forward.1} parent=0 // pred_region
    _
  $region9: #{extrinsic_forward.1} parent=0 // pred_fallthru
    _
  // Predicated region
  $region10: #{extrinsic_forward.1} parent=0 // pred_check
    _
  $region11: #{extrinsic_forward.1} parent=0 // pred_check_branch
    %21 = sbr.rel (0) target = $region13
  $region12: #{extrinsic_forward.1} parent=0 // pred_region
    _
  $region13: #{extrinsic_forward.1} parent=0 // pred_fallthru
    _
  // Predicated region
  $region14: #{extrinsic_forward.1} parent=0 // pred_check
    _
  $region15: #{extrinsic_forward.1} parent=0 // pred_check_branch
    %23 = sbr.rel (0) target = $region17
  $region16: #{extrinsic_forward.1} parent=0 // pred_region
    _
  $region17: #{extrinsic_forward.1} parent=0 // pred_fallthru
    _
  // Predicated region
  $region18: #{extrinsic_forward.1} parent=0 // pred_check
    _
  $region19: #{extrinsic_forward.1} parent=0 // pred_check_branch
    %25 = sbr.rel (0) target = $region21
  $region20: #{extrinsic_forward.1} parent=0 // pred_region
    _
  $region21: #{extrinsic_forward.1} parent=0 // pred_fallthru
    _
  // Predicated region
  $region22: #{extrinsic_forward.1} parent=0 // pred_check
    _
  $region23: #{extrinsic_forward.1} parent=0 // pred_check_branch
    %27 = sbr.rel (0) target = $region25
  $region24: #{extrinsic_forward.1} parent=0 // pred_region
    _
  $region25: #{extrinsic_forward.1} parent=0 // pred_fallthru
    _
  // Predicated region
  $region26: #{extrinsic_forward.1} parent=0 // pred_check
    _
  $region27: #{extrinsic_forward.1} parent=0 // pred_check_branch
    %29 = sbr.rel (0) target = $region29
  $region28: #{extrinsic_forward.1} parent=0 // pred_region
    _
  $region29: #{extrinsic_forward.1} parent=0 // pred_fallthru
    _
  // Predicated region
  $region30: #{extrinsic_forward.1} parent=0 // pred_check
    _
  $region31: #{extrinsic_forward.1} parent=0 // pred_check_branch
    %31 = sbr.rel (0) target = $region33
  $region32: #{extrinsic_forward.1} parent=0 // pred_region
    _
  $region33: #{extrinsic_forward.1} parent=0 // pred_fallthru
    _
  // Predicated region
  $region34: #{extrinsic_forward.1} parent=0 // pred_check
    _
  $region35: #{extrinsic_forward.1} parent=0 // pred_check_branch
    %33 = sbr.rel (0) target = $region37
  $region36: #{extrinsic_forward.1} parent=0 // pred_region
    _
  $region37: #{extrinsic_forward.1} parent=0 // pred_fallthru
    _
  // Predicated region
  $region38: #{extrinsic_forward.1} parent=0 // pred_check
    _
  $region39: #{extrinsic_forward.1} parent=0 // pred_check_branch
    %35 = sbr.rel (0) target = $region41
  $region40: #{extrinsic_forward.1} parent=0 // pred_region
    _
  $region41: #{extrinsic_forward.1} parent=0 // pred_fallthru
    _
  // Predicated region
  $region42: #{extrinsic_forward.1} parent=0 // pred_check
    _
  $region43: #{extrinsic_forward.1} parent=0 // pred_check_branch
    %37 = sbr.rel (0) target = $region45
  $region44: #{extrinsic_forward.1} parent=0 // pred_region
    _
  $region45: #{extrinsic_forward.1} parent=0 // pred_fallthru
    _
  %v38 = vld [vmem:[%s0] sm:$0xff]
  %v39 = vld [vmem:[%s0 + $0x8] sm:$0xff]
  %v40 = vld [vmem:[%s0 + $0x10] sm:$0xff]
  %v41 = vld [vmem:[%s0 + $0x18] sm:$0xff]
  %42 = vrot.lane.b32.xlu0 %v38, 17
  %v43 = vpop.permute.xlu0 %42
  %44 = vrot.lane.b32.xlu0 %v39, 17
  %v45 = vpop.permute.xlu0 %44
  %46 = vrot.lane.b32.xlu0 %v40, 17
  %v47 = vpop.permute.xlu0 %46
  %48 = vrot.lane.b32.xlu0 %v41, 17
  %v49 = vpop.permute.xlu0 %48
  %v50 = vlaneseq
  %v51 = vand.u32 %v50, 127
  %vm52 = vcmp.lt.s32.totalorder %v51, 17
  %v53 = vsel %vm52, %v47, %v49
  %v54 = vsel %vm52, %v45, %v47
  %v55 = vsel %vm52, %v43, %v45
  %v56 = vsel %vm52, %v49, %v43
  %v57 = vld [vmem:[%s1] ss:$8 sm:$0xf]
  %v59 = vlaneseq
  %v60 = vshrl.u32 %v59, 7
  %v61 = vsub.s32 0, %v60
  %v62 = vrot.slane %v57, %v61
  %v63 = vlaneseq
  %v64 = vshrl.u32 %v63, 7
  %v65 = vsub.s32 1, %v64
  %v66 = vrot.slane %v57, %v65
  %v67 = vlaneseq
  %v68 = vshrl.u32 %v67, 7
  %v69 = vsub.s32 2, %v68
  %v70 = vrot.slane %v57, %v69
  %v71 = vlaneseq
  %v72 = vshrl.u32 %v71, 7
  %v73 = vsub.s32 3, %v72
  %v74 = vrot.slane %v57, %v73
  %v79 = vmul.f32 %v56, %v62
  %v80 = vmul.f32 %v55, %v66
  %v81 = vmul.f32 %v54, %v70
  %v82 = vmul.f32 %v53, %v74
  %83 = vrot.lane.b32.xlu0 %v38, 16
  %v84 = vpop.permute.xlu0 %83
  %85 = vrot.lane.b32.xlu0 %v39, 16
  %v86 = vpop.permute.xlu0 %85
  %87 = vrot.lane.b32.xlu0 %v40, 16
  %v88 = vpop.permute.xlu0 %87
  %89 = vrot.lane.b32.xlu0 %v41, 16
  %v90 = vpop.permute.xlu0 %89
  %vm91 = vcmp.lt.s32.totalorder %v51, 16
  %v92 = vsel %vm91, %v88, %v90
  %v93 = vsel %vm91, %v86, %v88
  %v94 = vsel %vm91, %v84, %v86
  %v95 = vsel %vm91, %v90, %v84
  %s96 = scalar_lea.vmem %s1, 1
  %v97 = vld [vmem:[%s96] ss:$8 sm:$0xf]
  %v99 = vlaneseq
  %v100 = vshrl.u32 %v99, 7
  %v101 = vsub.s32 0, %v100
  %v102 = vrot.slane %v97, %v101
  %v103 = vlaneseq
  %v104 = vshrl.u32 %v103, 7
  %v105 = vsub.s32 1, %v104
  %v106 = vrot.slane %v97, %v105
  %v107 = vlaneseq
  %v108 = vshrl.u32 %v107, 7
  %v109 = vsub.s32 2, %v108
  %v110 = vrot.slane %v97, %v109
  %v111 = vlaneseq
  %v112 = vshrl.u32 %v111, 7
  %v113 = vsub.s32 3, %v112
  %v114 = vrot.slane %v97, %v113
  %v119 = vmul.f32 %v95, %v102
  %v120 = vmul.f32 %v94, %v106
  %v121 = vmul.f32 %v93, %v110
  %v122 = vmul.f32 %v92, %v114
  %123 = vrot.lane.b32.xlu0 %v38, 15
  %v124 = vpop.permute.xlu0 %123
  %125 = vrot.lane.b32.xlu0 %v39, 15
  %v126 = vpop.permute.xlu0 %125
  %127 = vrot.lane.b32.xlu0 %v40, 15
  %v128 = vpop.permute.xlu0 %127
  %129 = vrot.lane.b32.xlu0 %v41, 15
  %v130 = vpop.permute.xlu0 %129
  %vm131 = vcmp.lt.s32.totalorder %v51, 15
  %v132 = vsel %vm131, %v128, %v130
  %v133 = vsel %vm131, %v126, %v128
  %v134 = vsel %vm131, %v124, %v126
  %v135 = vsel %vm131, %v130, %v124
  %s136 = scalar_lea.vmem %s1, 2
  %v137 = vld [vmem:[%s136] ss:$8 sm:$0xf]
  %v139 = vlaneseq
  %v140 = vshrl.u32 %v139, 7
  %v141 = vsub.s32 0, %v140
  %v142 = vrot.slane %v137, %v141
  %v143 = vlaneseq
  %v144 = vshrl.u32 %v143, 7
  %v145 = vsub.s32 1, %v144
  %v146 = vrot.slane %v137, %v145
  %v147 = vlaneseq
  %v148 = vshrl.u32 %v147, 7
  %v149 = vsub.s32 2, %v148
  %v150 = vrot.slane %v137, %v149
  %v151 = vlaneseq
  %v152 = vshrl.u32 %v151, 7
  %v153 = vsub.s32 3, %v152
  %v154 = vrot.slane %v137, %v153
  %v159 = vmul.f32 %v135, %v142
  %v160 = vmul.f32 %v134, %v146
  %v161 = vmul.f32 %v133, %v150
  %v162 = vmul.f32 %v132, %v154
  %163 = vrot.lane.b32.xlu0 %v38, 1
  %v164 = vpop.permute.xlu0 %163
  %165 = vrot.lane.b32.xlu0 %v39, 1
  %v166 = vpop.permute.xlu0 %165
  %167 = vrot.lane.b32.xlu0 %v40, 1
  %v168 = vpop.permute.xlu0 %167
  %169 = vrot.lane.b32.xlu0 %v41, 1
  %v170 = vpop.permute.xlu0 %169
  %vm171 = vcmp.lt.s32.totalorder %v51, 1
  %v172 = vsel %vm171, %v168, %v170
  %v173 = vsel %vm171, %v166, %v168
  %v174 = vsel %vm171, %v164, %v166
  %v175 = vsel %vm171, %v170, %v164
  %s176 = scalar_lea.vmem %s1, 3
  %v177 = vld [vmem:[%s176] ss:$8 sm:$0xf]
  %v179 = vlaneseq
  %v180 = vshrl.u32 %v179, 7
  %v181 = vsub.s32 0, %v180
  %v182 = vrot.slane %v177, %v181
  %v183 = vlaneseq
  %v184 = vshrl.u32 %v183, 7
  %v185 = vsub.s32 1, %v184
  %v186 = vrot.slane %v177, %v185
  %v187 = vlaneseq
  %v188 = vshrl.u32 %v187, 7
  %v189 = vsub.s32 2, %v188
  %v190 = vrot.slane %v177, %v189
  %v191 = vlaneseq
  %v192 = vshrl.u32 %v191, 7
  %v193 = vsub.s32 3, %v192
  %v194 = vrot.slane %v177, %v193
  %v199 = vmul.f32 %v175, %v182
  %v200 = vmul.f32 %v174, %v186
  %v201 = vmul.f32 %v173, %v190
  %v202 = vmul.f32 %v172, %v194
  %203 = vrot.lane.b32.xlu0 %v38, 127
  %v204 = vpop.permute.xlu0 %203
  %205 = vrot.lane.b32.xlu0 %v39, 127
  %v206 = vpop.permute.xlu0 %205
  %207 = vrot.lane.b32.xlu0 %v40, 127
  %v208 = vpop.permute.xlu0 %207
  %209 = vrot.lane.b32.xlu0 %v41, 127
  %v210 = vpop.permute.xlu0 %209
  %vm211 = vcmp.lt.s32.totalorder %v51, 127
  %v212 = vsel %vm211, %v208, %v210
  %v213 = vsel %vm211, %v206, %v208
  %v214 = vsel %vm211, %v204, %v206
  %v215 = vsel %vm211, %v210, %v204
  %s216 = scalar_lea.vmem %s1, 5
  %v217 = vld [vmem:[%s216] ss:$8 sm:$0xf]
  %v219 = vlaneseq
  %v220 = vshrl.u32 %v219, 7
  %v221 = vsub.s32 0, %v220
  %v222 = vrot.slane %v217, %v221
  %v223 = vlaneseq
  %v224 = vshrl.u32 %v223, 7
  %v225 = vsub.s32 1, %v224
  %v226 = vrot.slane %v217, %v225
  %v227 = vlaneseq
  %v228 = vshrl.u32 %v227, 7
  %v229 = vsub.s32 2, %v228
  %v230 = vrot.slane %v217, %v229
  %v231 = vlaneseq
  %v232 = vshrl.u32 %v231, 7
  %v233 = vsub.s32 3, %v232
  %v234 = vrot.slane %v217, %v233
  %v239 = vmul.f32 %v214, %v222
  %v240 = vmul.f32 %v213, %v226
  %v241 = vmul.f32 %v212, %v230
  %v242 = vmul.f32 %v215, %v234
  %243 = vrot.lane.b32.xlu0 %v38, 113
  %v244 = vpop.permute.xlu0 %243
  %245 = vrot.lane.b32.xlu0 %v39, 113
  %v246 = vpop.permute.xlu0 %245
  %247 = vrot.lane.b32.xlu0 %v40, 113
  %v248 = vpop.permute.xlu0 %247
  %249 = vrot.lane.b32.xlu0 %v41, 113
  %v250 = vpop.permute.xlu0 %249
  %vm251 = vcmp.lt.s32.totalorder %v51, 113
  %v252 = vsel %vm251, %v248, %v250
  %v253 = vsel %vm251, %v246, %v248
  %v254 = vsel %vm251, %v244, %v246
  %v255 = vsel %vm251, %v250, %v244
  %s256 = scalar_lea.vmem %s1, 6
  %v257 = vld [vmem:[%s256] ss:$8 sm:$0xf]
  %v259 = vlaneseq
  %v260 = vshrl.u32 %v259, 7
  %v261 = vsub.s32 0, %v260
  %v262 = vrot.slane %v257, %v261
  %v263 = vlaneseq
  %v264 = vshrl.u32 %v263, 7
  %v265 = vsub.s32 1, %v264
  %v266 = vrot.slane %v257, %v265
  %v267 = vlaneseq
  %v268 = vshrl.u32 %v267, 7
  %v269 = vsub.s32 2, %v268
  %v270 = vrot.slane %v257, %v269
  %v271 = vlaneseq
  %v272 = vshrl.u32 %v271, 7
  %v273 = vsub.s32 3, %v272
  %v274 = vrot.slane %v257, %v273
  %v279 = vmul.f32 %v254, %v262
  %v280 = vmul.f32 %v253, %v266
  %v281 = vmul.f32 %v252, %v270
  %v282 = vmul.f32 %v255, %v274
  %283 = vrot.lane.b32.xlu0 %v38, 112
  %v284 = vpop.permute.xlu0 %283
  %285 = vrot.lane.b32.xlu0 %v39, 112
  %v286 = vpop.permute.xlu0 %285
  %287 = vrot.lane.b32.xlu0 %v40, 112
  %v288 = vpop.permute.xlu0 %287
  %289 = vrot.lane.b32.xlu0 %v41, 112
  %v290 = vpop.permute.xlu0 %289
  %vm291 = vcmp.lt.s32.totalorder %v51, 112
  %v292 = vsel %vm291, %v288, %v290
  %v293 = vsel %vm291, %v286, %v288
  %v294 = vsel %vm291, %v284, %v286
  %v295 = vsel %vm291, %v290, %v284
  %s296 = scalar_lea.vmem %s1, 7
  %v297 = vld [vmem:[%s296] ss:$8 sm:$0xf]
  %v299 = vlaneseq
  %v300 = vshrl.u32 %v299, 7
  %v301 = vsub.s32 0, %v300
  %v302 = vrot.slane %v297, %v301
  %v303 = vlaneseq
  %v304 = vshrl.u32 %v303, 7
  %v305 = vsub.s32 1, %v304
  %v306 = vrot.slane %v297, %v305
  %v307 = vlaneseq
  %v308 = vshrl.u32 %v307, 7
  %v309 = vsub.s32 2, %v308
  %v310 = vrot.slane %v297, %v309
  %v311 = vlaneseq
  %v312 = vshrl.u32 %v311, 7
  %v313 = vsub.s32 3, %v312
  %v314 = vrot.slane %v297, %v313
  %v319 = vmul.f32 %v294, %v302
  %v320 = vmul.f32 %v293, %v306
  %v321 = vmul.f32 %v292, %v310
  %v322 = vmul.f32 %v295, %v314
  %323 = vrot.lane.b32.xlu0 %v38, 111
  %v324 = vpop.permute.xlu0 %323
  %325 = vrot.lane.b32.xlu0 %v39, 111
  %v326 = vpop.permute.xlu0 %325
  %327 = vrot.lane.b32.xlu0 %v40, 111
  %v328 = vpop.permute.xlu0 %327
  %329 = vrot.lane.b32.xlu0 %v41, 111
  %v330 = vpop.permute.xlu0 %329
  %vm331 = vcmp.lt.s32.totalorder %v51, 111
  %v332 = vsel %vm331, %v328, %v330
  %v333 = vsel %vm331, %v326, %v328
  %v334 = vsel %vm331, %v324, %v326
  %v335 = vsel %vm331, %v330, %v324
  %s336 = scalar_lea.vmem %s1, 32
  %v337 = vld [vmem:[%s336] ss:$8 sm:$0xf]
  %v339 = vlaneseq
  %v340 = vshrl.u32 %v339, 7
  %v341 = vsub.s32 0, %v340
  %v342 = vrot.slane %v337, %v341
  %v343 = vlaneseq
  %v344 = vshrl.u32 %v343, 7
  %v345 = vsub.s32 1, %v344
  %v346 = vrot.slane %v337, %v345
  %v347 = vlaneseq
  %v348 = vshrl.u32 %v347, 7
  %v349 = vsub.s32 2, %v348
  %v350 = vrot.slane %v337, %v349
  %v351 = vlaneseq
  %v352 = vshrl.u32 %v351, 7
  %v353 = vsub.s32 3, %v352
  %v354 = vrot.slane %v337, %v353
  %v359 = vmul.f32 %v334, %v342
  %v360 = vmul.f32 %v333, %v346
  %v361 = vmul.f32 %v332, %v350
  %v362 = vmul.f32 %v335, %v354
  %v363 = vld [vmem:[%s2] sm:$0xff]
  %v364 = vld [vmem:[%s3] sm:$0xff]
  %366 = vset.pattern.permute.xlu0 0
  %367 = vperm.xlu0 %366, %v364
  %v368 = vpop.permute.xlu0 %367
  %vm370 = vcmask 588800
  %v372 = vsel %vm370, %v363, 0
  %374 = vmatprep.subr.mxu0 %v80
  %375 = vmatpush1.msra.mxu0 %v79
  %376 = vmatprep.subr.mxu0 %v120
  %377 = vmatpush1.msra.mxu0 %v119
  %378 = vmatprep.subr.mxu0 %v160
  %379 = vmatpush1.msra.mxu0 %v159
  %380 = vmatprep.subr.mxu0 %v200
  %381 = vmatpush1.msra.mxu0 %v199
  %382 = vmatprep.subr.mxu0 %v39
  %383 = vmatpush1.msra.mxu0 %v38
  %384 = vmatprep.subr.mxu0 %v240
  %385 = vmatpush1.msra.mxu0 %v239
  %386 = vmatprep.subr.mxu0 %v280
  %387 = vmatpush1.msra.mxu0 %v279
  %388 = vmatprep.subr.mxu0 %v320
  %389 = vmatpush1.msra.mxu0 %v319
  %390 = vmatprep.subr.mxu0 %v360
  %391 = vmatpush1.msra.mxu0 %v359
  %392 = vmatprep.subr.mxu0 0.0
  %393 = vmatpush1.msra.mxu0 0.0
  %394 = vmatprep.subr.mxu0 0.0
  %395 = vmatpush1.msra.mxu0 0.0
  %396 = vmatprep.subr.mxu0 0.0
  %397 = vmatpush1.msra.mxu0 0.0
  %398 = vmatprep.subr.mxu0 0.0
  %399 = vmatpush1.msra.mxu0 0.0
  %400 = vmatprep.subr.mxu0 0.0
  %401 = vmatpush1.msra.mxu0 0.0
  %402 = vmatprep.subr.mxu0 0.0
  %403 = vmatpush1.msra.mxu0 0.0
  %404 = vmatprep.subr.mxu0 0.0
  %405 = vmatpush1.msra.mxu0 0.0
  %406 = vmatprep.subr.mxu0 0.0
  %407 = vmatpush1.msra.mxu0 0.0
  %408 = vmatprep.subr.mxu0 0.0
  %409 = vmatpush1.msra.mxu0 0.0
  %410 = vmatprep.subr.mxu0 0.0
  %411 = vmatpush1.msra.mxu0 0.0
  %412 = vmatprep.subr.mxu0 0.0
  %413 = vmatpush1.msra.mxu0 0.0
  %414 = vmatprep.subr.mxu0 0.0
  %415 = vmatpush1.msra.mxu0 0.0
  %416 = vmatprep.subr.mxu0 0.0
  %417 = vmatpush1.msra.mxu0 0.0
  %418 = vmatprep.subr.mxu0 0.0
  %419 = vmatpush1.msra.mxu0 0.0
  %420 = vmatprep.subr.mxu0 0.0
  %421 = vmatpush1.msra.mxu0 0.0
  %422 = vmatprep.subr.mxu0 0.0
  %423 = vmatpush1.msra.mxu0 0.0
  %424 = vmatprep.subr.mxu0 0.0
  %425 = vmatpush1.msra.mxu0 0.0
  %426 = vmatprep.subr.mxu0 0.0
  %427 = vmatpush1.msra.mxu0 0.0
  %428 = vmatprep.subr.mxu0 0.0
  %429 = vmatpush1.msra.mxu0 0.0
  %430 = vmatprep.subr.mxu0 0.0
  %431 = vmatpush1.msra.mxu0 0.0
  %432 = vmatprep.subr.mxu0 0.0
  %433 = vmatpush1.msra.mxu0 0.0
  %434 = vmatprep.subr.mxu0 0.0
  %435 = vmatpush1.msra.mxu0 0.0
  %436 = vmatprep.subr.mxu0 0.0
  %437 = vmatpush1.msra.mxu0 0.0
  %438 = vmatprep.mubr.f32.mxu0 0.0
  %439 = vmatmul.mubr.f32.gmra.mrb[0].mxu0 %v372
  %v440 = vpop.f32.mrb[0].mxu0
  %v441 = vadd.f32 %v368, %v440
  %v442 = vpop.f32.mrb[0].mxu0
  %v443 = vadd.f32 %v368, %v442
  %444 = vdwg.mxu0
  %445 = vmatprep.subr.mxu0 %v82
  %446 = vmatpush1.msra.mxu0 %v81
  %447 = vmatprep.subr.mxu0 %v122
  %448 = vmatpush1.msra.mxu0 %v121
  %449 = vmatprep.subr.mxu0 %v162
  %450 = vmatpush1.msra.mxu0 %v161
  %451 = vmatprep.subr.mxu0 %v202
  %452 = vmatpush1.msra.mxu0 %v201
  %453 = vmatprep.subr.mxu0 %v41
  %454 = vmatpush1.msra.mxu0 %v40
  %455 = vmatprep.subr.mxu0 %v242
  %456 = vmatpush1.msra.mxu0 %v241
  %457 = vmatprep.subr.mxu0 %v282
  %458 = vmatpush1.msra.mxu0 %v281
  %459 = vmatprep.subr.mxu0 %v322
  %460 = vmatpush1.msra.mxu0 %v321
  %461 = vmatprep.subr.mxu0 %v362
  %462 = vmatpush1.msra.mxu0 %v361
  %463 = vmatprep.subr.mxu0 0.0
  %464 = vmatpush1.msra.mxu0 0.0
  %465 = vmatprep.subr.mxu0 0.0
  %466 = vmatpush1.msra.mxu0 0.0
  %467 = vmatprep.subr.mxu0 0.0
  %468 = vmatpush1.msra.mxu0 0.0
  %469 = vmatprep.subr.mxu0 0.0
  %470 = vmatpush1.msra.mxu0 0.0
  %471 = vmatprep.subr.mxu0 0.0
  %472 = vmatpush1.msra.mxu0 0.0
  %473 = vmatprep.subr.mxu0 0.0
  %474 = vmatpush1.msra.mxu0 0.0
  %475 = vmatprep.subr.mxu0 0.0
  %476 = vmatpush1.msra.mxu0 0.0
  %477 = vmatprep.subr.mxu0 0.0
  %478 = vmatpush1.msra.mxu0 0.0
  %479 = vmatprep.subr.mxu0 0.0
  %480 = vmatpush1.msra.mxu0 0.0
  %481 = vmatprep.subr.mxu0 0.0
  %482 = vmatpush1.msra.mxu0 0.0
  %483 = vmatprep.subr.mxu0 0.0
  %484 = vmatpush1.msra.mxu0 0.0
  %485 = vmatprep.subr.mxu0 0.0
  %486 = vmatpush1.msra.mxu0 0.0
  %487 = vmatprep.subr.mxu0 0.0
  %488 = vmatpush1.msra.mxu0 0.0
  %489 = vmatprep.subr.mxu0 0.0
  %490 = vmatpush1.msra.mxu0 0.0
  %491 = vmatprep.subr.mxu0 0.0
  %492 = vmatpush1.msra.mxu0 0.0
  %493 = vmatprep.subr.mxu0 0.0
  %494 = vmatpush1.msra.mxu0 0.0
  %495 = vmatprep.subr.mxu0 0.0
  %496 = vmatpush1.msra.mxu0 0.0
  %497 = vmatprep.subr.mxu0 0.0
  %498 = vmatpush1.msra.mxu0 0.0
  %499 = vmatprep.subr.mxu0 0.0
  %500 = vmatpush1.msra.mxu0 0.0
  %501 = vmatprep.subr.mxu0 0.0
  %502 = vmatpush1.msra.mxu0 0.0
  %503 = vmatprep.subr.mxu0 0.0
  %504 = vmatpush1.msra.mxu0 0.0
  %505 = vmatprep.subr.mxu0 0.0
  %506 = vmatpush1.msra.mxu0 0.0
  %507 = vmatprep.subr.mxu0 0.0
  %508 = vmatpush1.msra.mxu0 0.0
  %509 = vmatprep.mubr.f32.mxu0 0.0
  %510 = vmatmul.mubr.f32.gmra.mrb[0].mxu0 %v372
  %v511 = vpop.f32.mrb[0].mxu0
  %v512 = vadd.f32 %v368, %v511
  %v513 = vpop.f32.mrb[0].mxu0
  %v514 = vadd.f32 %v368, %v513
  %515 = vdwg.mxu0
  %v516 = vmul.f32 %v441, 0.01
  %v517 = vmul.f32 %v443, 0.01
  %v518 = vmul.f32 %v512, 0.01
  %v519 = vmul.f32 %v514, 0.01
  %v520 = vmax.f32 %v441, %v516
  %v521 = vmax.f32 %v443, %v517
  %v522 = vmax.f32 %v512, %v518
  %v523 = vmax.f32 %v514, %v519
  %524 = vrot.lane.b32.xlu0 %v520, 17
  %v525 = vpop.permute.xlu0 %524
  %526 = vrot.lane.b32.xlu0 %v521, 17
  %v527 = vpop.permute.xlu0 %526
  %528 = vrot.lane.b32.xlu0 %v522, 17
  %v529 = vpop.permute.xlu0 %528
  %530 = vrot.lane.b32.xlu0 %v523, 17
  %v531 = vpop.permute.xlu0 %530
  %v532 = vsel %vm52, %v529, %v531
  %v533 = vsel %vm52, %v527, %v529
  %v534 = vsel %vm52, %v525, %v527
  %v535 = vsel %vm52, %v531, %v525
  %v536 = vmul.f32 %v535, %v62
  %v537 = vmul.f32 %v534, %v66
  %v538 = vmul.f32 %v533, %v70
  %v539 = vmul.f32 %v532, %v74
  %540 = vrot.lane.b32.xlu0 %v520, 16
  %v541 = vpop.permute.xlu0 %540
  %542 = vrot.lane.b32.xlu0 %v521, 16
  %v543 = vpop.permute.xlu0 %542
  %544 = vrot.lane.b32.xlu0 %v522, 16
  %v545 = vpop.permute.xlu0 %544
  %546 = vrot.lane.b32.xlu0 %v523, 16
  %v547 = vpop.permute.xlu0 %546
  %v548 = vsel %vm91, %v545, %v547
  %v549 = vsel %vm91, %v543, %v545
  %v550 = vsel %vm91, %v541, %v543
  %v551 = vsel %vm91, %v547, %v541
  %v552 = vmul.f32 %v551, %v102
  %v553 = vmul.f32 %v550, %v106
  %v554 = vmul.f32 %v549, %v110
  %v555 = vmul.f32 %v548, %v114
  %556 = vrot.lane.b32.xlu0 %v520, 15
  %v557 = vpop.permute.xlu0 %556
  %558 = vrot.lane.b32.xlu0 %v521, 15
  %v559 = vpop.permute.xlu0 %558
  %560 = vrot.lane.b32.xlu0 %v522, 15
  %v561 = vpop.permute.xlu0 %560
  %562 = vrot.lane.b32.xlu0 %v523, 15
  %v563 = vpop.permute.xlu0 %562
  %v564 = vsel %vm131, %v561, %v563
  %v565 = vsel %vm131, %v559, %v561
  %v566 = vsel %vm131, %v557, %v559
  %v567 = vsel %vm131, %v563, %v557
  %v568 = vmul.f32 %v567, %v142
  %v569 = vmul.f32 %v566, %v146
  %v570 = vmul.f32 %v565, %v150
  %v571 = vmul.f32 %v564, %v154
  %572 = vrot.lane.b32.xlu0 %v520, 1
  %v573 = vpop.permute.xlu0 %572
  %574 = vrot.lane.b32.xlu0 %v521, 1
  %v575 = vpop.permute.xlu0 %574
  %576 = vrot.lane.b32.xlu0 %v522, 1
  %v577 = vpop.permute.xlu0 %576
  %578 = vrot.lane.b32.xlu0 %v523, 1
  %v579 = vpop.permute.xlu0 %578
  %v580 = vsel %vm171, %v577, %v579
  %v581 = vsel %vm171, %v575, %v577
  %v582 = vsel %vm171, %v573, %v575
  %v583 = vsel %vm171, %v579, %v573
  %v584 = vmul.f32 %v583, %v182
  %v585 = vmul.f32 %v582, %v186
  %v586 = vmul.f32 %v581, %v190
  %v587 = vmul.f32 %v580, %v194
  %588 = vrot.lane.b32.xlu0 %v520, 127
  %v589 = vpop.permute.xlu0 %588
  %590 = vrot.lane.b32.xlu0 %v521, 127
  %v591 = vpop.permute.xlu0 %590
  %592 = vrot.lane.b32.xlu0 %v522, 127
  %v593 = vpop.permute.xlu0 %592
  %594 = vrot.lane.b32.xlu0 %v523, 127
  %v595 = vpop.permute.xlu0 %594
  %v596 = vsel %vm211, %v593, %v595
  %v597 = vsel %vm211, %v591, %v593
  %v598 = vsel %vm211, %v589, %v591
  %v599 = vsel %vm211, %v595, %v589
  %v600 = vmul.f32 %v598, %v222
  %v601 = vmul.f32 %v597, %v226
  %v602 = vmul.f32 %v596, %v230
  %v603 = vmul.f32 %v599, %v234
  %604 = vrot.lane.b32.xlu0 %v520, 113
  %v605 = vpop.permute.xlu0 %604
  %606 = vrot.lane.b32.xlu0 %v521, 113
  %v607 = vpop.permute.xlu0 %606
  %608 = vrot.lane.b32.xlu0 %v522, 113
  %v609 = vpop.permute.xlu0 %608
  %610 = vrot.lane.b32.xlu0 %v523, 113
  %v611 = vpop.permute.xlu0 %610
  %v612 = vsel %vm251, %v609, %v611
  %v613 = vsel %vm251, %v607, %v609
  %v614 = vsel %vm251, %v605, %v607
  %v615 = vsel %vm251, %v611, %v605
  %v616 = vmul.f32 %v614, %v262
  %v617 = vmul.f32 %v613, %v266
  %v618 = vmul.f32 %v612, %v270
  %v619 = vmul.f32 %v615, %v274
  %620 = vrot.lane.b32.xlu0 %v520, 112
  %v621 = vpop.permute.xlu0 %620
  %622 = vrot.lane.b32.xlu0 %v521, 112
  %v623 = vpop.permute.xlu0 %622
  %624 = vrot.lane.b32.xlu0 %v522, 112
  %v625 = vpop.permute.xlu0 %624
  %626 = vrot.lane.b32.xlu0 %v523, 112
  %v627 = vpop.permute.xlu0 %626
  %v628 = vsel %vm291, %v625, %v627
  %v629 = vsel %vm291, %v623, %v625
  %v630 = vsel %vm291, %v621, %v623
  %v631 = vsel %vm291, %v627, %v621
  %v632 = vmul.f32 %v630, %v302
  %v633 = vmul.f32 %v629, %v306
  %v634 = vmul.f32 %v628, %v310
  %v635 = vmul.f32 %v631, %v314
  %636 = vrot.lane.b32.xlu0 %v520, 111
  %v637 = vpop.permute.xlu0 %636
  %638 = vrot.lane.b32.xlu0 %v521, 111
  %v639 = vpop.permute.xlu0 %638
  %640 = vrot.lane.b32.xlu0 %v522, 111
  %v641 = vpop.permute.xlu0 %640
  %642 = vrot.lane.b32.xlu0 %v523, 111
  %v643 = vpop.permute.xlu0 %642
  %v644 = vsel %vm331, %v641, %v643
  %v645 = vsel %vm331, %v639, %v641
  %v646 = vsel %vm331, %v637, %v639
  %v647 = vsel %vm331, %v643, %v637
  %v648 = vmul.f32 %v646, %v342
  %v649 = vmul.f32 %v645, %v346
  %v650 = vmul.f32 %v644, %v350
  %v651 = vmul.f32 %v647, %v354
  %v652 = vld [vmem:[%s4] sm:$0xff]
  %v653 = vld [vmem:[%s4 + $0x8] sm:$0xff]
  %v654 = vld [vmem:[%s5] sm:$0xff]
  %v655 = vld [vmem:[%s5 + $0x8] sm:$0xff]
  %657 = vset.pattern.permute.xlu0 0
  %658 = vperm.xlu0 %657, %v654
  %v659 = vpop.permute.xlu0 %658
  %662 = vset.pattern.permute.xlu0 0
  %663 = vperm.xlu0 %662, %v655
  %v664 = vpop.permute.xlu0 %663
  %v667 = vsel %vm370, %v652, 0
  %v670 = vsel %vm370, %v653, 0
  %672 = vmatprep.subr.mxu0 %v537
  %673 = vmatpush1.msra.mxu0 %v536
  %674 = vmatprep.subr.mxu0 %v553
  %675 = vmatpush1.msra.mxu0 %v552
  %676 = vmatprep.subr.mxu0 %v569
  %677 = vmatpush1.msra.mxu0 %v568
  %678 = vmatprep.subr.mxu0 %v585
  %679 = vmatpush1.msra.mxu0 %v584
  %680 = vmatprep.subr.mxu0 %v521
  %681 = vmatpush1.msra.mxu0 %v520
  %682 = vmatprep.subr.mxu0 %v601
  %683 = vmatpush1.msra.mxu0 %v600
  %684 = vmatprep.subr.mxu0 %v617
  %685 = vmatpush1.msra.mxu0 %v616
  %686 = vmatprep.subr.mxu0 %v633
  %687 = vmatpush1.msra.mxu0 %v632
  %688 = vmatprep.subr.mxu0 %v649
  %689 = vmatpush1.msra.mxu0 %v648
  %690 = vmatprep.subr.mxu0 0.0
  %691 = vmatpush1.msra.mxu0 0.0
  %692 = vmatprep.subr.mxu0 0.0
  %693 = vmatpush1.msra.mxu0 0.0
  %694 = vmatprep.subr.mxu0 0.0
  %695 = vmatpush1.msra.mxu0 0.0
  %696 = vmatprep.subr.mxu0 0.0
  %697 = vmatpush1.msra.mxu0 0.0
  %698 = vmatprep.subr.mxu0 0.0
  %699 = vmatpush1.msra.mxu0 0.0
  %700 = vmatprep.subr.mxu0 0.0
  %701 = vmatpush1.msra.mxu0 0.0
  %702 = vmatprep.subr.mxu0 0.0
  %703 = vmatpush1.msra.mxu0 0.0
  %704 = vmatprep.subr.mxu0 0.0
  %705 = vmatpush1.msra.mxu0 0.0
  %706 = vmatprep.subr.mxu0 0.0
  %707 = vmatpush1.msra.mxu0 0.0
  %708 = vmatprep.subr.mxu0 0.0
  %709 = vmatpush1.msra.mxu0 0.0
  %710 = vmatprep.subr.mxu0 0.0
  %711 = vmatpush1.msra.mxu0 0.0
  %712 = vmatprep.subr.mxu0 0.0
  %713 = vmatpush1.msra.mxu0 0.0
  %714 = vmatprep.subr.mxu0 0.0
  %715 = vmatpush1.msra.mxu0 0.0
  %716 = vmatprep.subr.mxu0 0.0
  %717 = vmatpush1.msra.mxu0 0.0
  %718 = vmatprep.subr.mxu0 0.0
  %719 = vmatpush1.msra.mxu0 0.0
  %720 = vmatprep.subr.mxu0 0.0
  %721 = vmatpush1.msra.mxu0 0.0
  %722 = vmatprep.subr.mxu0 0.0
  %723 = vmatpush1.msra.mxu0 0.0
  %724 = vmatprep.subr.mxu0 0.0
  %725 = vmatpush1.msra.mxu0 0.0
  %726 = vmatprep.subr.mxu0 0.0
  %727 = vmatpush1.msra.mxu0 0.0
  %728 = vmatprep.subr.mxu0 0.0
  %729 = vmatpush1.msra.mxu0 0.0
  %730 = vmatprep.subr.mxu0 0.0
  %731 = vmatpush1.msra.mxu0 0.0
  %732 = vmatprep.subr.mxu0 0.0
  %733 = vmatpush1.msra.mxu0 0.0
  %734 = vmatprep.subr.mxu0 0.0
  %735 = vmatpush1.msra.mxu0 0.0
  %736 = vmatprep.mubr.f32.mxu0 0.0
  %737 = vmatmul.mubr.f32.gmra.mrb[0].mxu0 %v667
  %v738 = vpop.f32.mrb[0].mxu0
  %v739 = vadd.f32 %v659, %v738
  %v740 = vpop.f32.mrb[0].mxu0
  %v741 = vadd.f32 %v659, %v740
  %742 = vmatprep.mubr.f32.mxu0 0.0
  %743 = vmatmul.mubr.f32.gmra.mrb[0].mxu0 %v670
  %v744 = vpop.f32.mrb[0].mxu0
  %v745 = vadd.f32 %v664, %v744
  %v746 = vpop.f32.mrb[0].mxu0
  %v747 = vadd.f32 %v664, %v746
  %748 = vdwg.mxu0
  %749 = vmatprep.subr.mxu0 %v539
  %750 = vmatpush1.msra.mxu0 %v538
  %751 = vmatprep.subr.mxu0 %v555
  %752 = vmatpush1.msra.mxu0 %v554
  %753 = vmatprep.subr.mxu0 %v571
  %754 = vmatpush1.msra.mxu0 %v570
  %755 = vmatprep.subr.mxu0 %v587
  %756 = vmatpush1.msra.mxu0 %v586
  %757 = vmatprep.subr.mxu0 %v523
  %758 = vmatpush1.msra.mxu0 %v522
  %759 = vmatprep.subr.mxu0 %v603
  %760 = vmatpush1.msra.mxu0 %v602
  %761 = vmatprep.subr.mxu0 %v619
  %762 = vmatpush1.msra.mxu0 %v618
  %763 = vmatprep.subr.mxu0 %v635
  %764 = vmatpush1.msra.mxu0 %v634
  %765 = vmatprep.subr.mxu0 %v651
  %766 = vmatpush1.msra.mxu0 %v650
  %767 = vmatprep.subr.mxu0 0.0
  %768 = vmatpush1.msra.mxu0 0.0
  %769 = vmatprep.subr.mxu0 0.0
  %770 = vmatpush1.msra.mxu0 0.0
  %771 = vmatprep.subr.mxu0 0.0
  %772 = vmatpush1.msra.mxu0 0.0
  %773 = vmatprep.subr.mxu0 0.0
  %774 = vmatpush1.msra.mxu0 0.0
  %775 = vmatprep.subr.mxu0 0.0
  %776 = vmatpush1.msra.mxu0 0.0
  %777 = vmatprep.subr.mxu0 0.0
  %778 = vmatpush1.msra.mxu0 0.0
  %779 = vmatprep.subr.mxu0 0.0
  %780 = vmatpush1.msra.mxu0 0.0
  %781 = vmatprep.subr.mxu0 0.0
  %782 = vmatpush1.msra.mxu0 0.0
  %783 = vmatprep.subr.mxu0 0.0
  %784 = vmatpush1.msra.mxu0 0.0
  %785 = vmatprep.subr.mxu0 0.0
  %786 = vmatpush1.msra.mxu0 0.0
  %787 = vmatprep.subr.mxu0 0.0
  %788 = vmatpush1.msra.mxu0 0.0
  %789 = vmatprep.subr.mxu0 0.0
  %790 = vmatpush1.msra.mxu0 0.0
  %791 = vmatprep.subr.mxu0 0.0
  %792 = vmatpush1.msra.mxu0 0.0
  %793 = vmatprep.subr.mxu0 0.0
  %794 = vmatpush1.msra.mxu0 0.0
  %795 = vmatprep.subr.mxu0 0.0
  %796 = vmatpush1.msra.mxu0 0.0
  %797 = vmatprep.subr.mxu0 0.0
  %798 = vmatpush1.msra.mxu0 0.0
  %799 = vmatprep.subr.mxu0 0.0
  %800 = vmatpush1.msra.mxu0 0.0
  %801 = vmatprep.subr.mxu0 0.0
  %802 = vmatpush1.msra.mxu0 0.0
  %803 = vmatprep.subr.mxu0 0.0
  %804 = vmatpush1.msra.mxu0 0.0
  %805 = vmatprep.subr.mxu0 0.0
  %806 = vmatpush1.msra.mxu0 0.0
  %807 = vmatprep.subr.mxu0 0.0
  %808 = vmatpush1.msra.mxu0 0.0
  %809 = vmatprep.subr.mxu0 0.0
  %810 = vmatpush1.msra.mxu0 0.0
  %811 = vmatprep.subr.mxu0 0.0
  %812 = vmatpush1.msra.mxu0 0.0
  %813 = vmatprep.mubr.f32.mxu0 0.0
  %814 = vmatmul.mubr.f32.gmra.mrb[0].mxu0 %v667
  %v815 = vpop.f32.mrb[0].mxu0
  %v816 = vadd.f32 %v659, %v815
  %v817 = vpop.f32.mrb[0].mxu0
  %v818 = vadd.f32 %v659, %v817
  %819 = vmatprep.mubr.f32.mxu0 0.0
  %820 = vmatmul.mubr.f32.gmra.mrb[0].mxu0 %v670
  %v821 = vpop.f32.mrb[0].mxu0
  %v822 = vadd.f32 %v664, %v821
  %v823 = vpop.f32.mrb[0].mxu0
  %v824 = vadd.f32 %v664, %v823
  %825 = vdwg.mxu0
  %v826 = vmul.f32 %v739, 0.01
  %v827 = vmul.f32 %v741, 0.01
  %v828 = vmul.f32 %v816, 0.01
  %v829 = vmul.f32 %v818, 0.01
  %v830 = vmul.f32 %v745, 0.01
  %v831 = vmul.f32 %v747, 0.01
  %v832 = vmul.f32 %v822, 0.01
  %v833 = vmul.f32 %v824, 0.01
  %v834 = vmax.f32 %v739, %v826
  %v835 = vmax.f32 %v741, %v827
  %v836 = vmax.f32 %v816, %v828
  %v837 = vmax.f32 %v818, %v829
  %v838 = vmax.f32 %v745, %v830
  %v839 = vmax.f32 %v747, %v831
  %v840 = vmax.f32 %v822, %v832
  %v841 = vmax.f32 %v824, %v833
  %842 = vrot.lane.b32.xlu0 %v834, 17
  %v843 = vpop.permute.xlu0 %842
  %844 = vrot.lane.b32.xlu0 %v838, 17
  %v845 = vpop.permute.xlu0 %844
  %846 = vrot.lane.b32.xlu0 %v835, 17
  %v847 = vpop.permute.xlu0 %846
  %848 = vrot.lane.b32.xlu0 %v839, 17
  %v849 = vpop.permute.xlu0 %848
  %850 = vrot.lane.b32.xlu0 %v836, 17
  %v851 = vpop.permute.xlu0 %850
  %852 = vrot.lane.b32.xlu0 %v840, 17
  %v853 = vpop.permute.xlu0 %852
  %854 = vrot.lane.b32.xlu0 %v837, 17
  %v855 = vpop.permute.xlu0 %854
  %856 = vrot.lane.b32.xlu0 %v841, 17
  %v857 = vpop.permute.xlu0 %856
  %v858 = vsel %vm52, %v851, %v855
  %v859 = vsel %vm52, %v853, %v857
  %v860 = vsel %vm52, %v847, %v851
  %v861 = vsel %vm52, %v849, %v853
  %v862 = vsel %vm52, %v843, %v847
  %v863 = vsel %vm52, %v845, %v849
  %v864 = vsel %vm52, %v855, %v843
  %v865 = vsel %vm52, %v857, %v845
  %v866 = vmul.f32 %v864, %v62
  %v867 = vmul.f32 %v862, %v66
  %v868 = vmul.f32 %v860, %v70
  %v869 = vmul.f32 %v858, %v74
  %v870 = vmul.f32 %v865, %v62
  %v871 = vmul.f32 %v863, %v66
  %v872 = vmul.f32 %v861, %v70
  %v873 = vmul.f32 %v859, %v74
  %874 = vrot.lane.b32.xlu0 %v834, 16
  %v875 = vpop.permute.xlu0 %874
  %876 = vrot.lane.b32.xlu0 %v838, 16
  %v877 = vpop.permute.xlu0 %876
  %878 = vrot.lane.b32.xlu0 %v835, 16
  %v879 = vpop.permute.xlu0 %878
  %880 = vrot.lane.b32.xlu0 %v839, 16
  %v881 = vpop.permute.xlu0 %880
  %882 = vrot.lane.b32.xlu0 %v836, 16
  %v883 = vpop.permute.xlu0 %882
  %884 = vrot.lane.b32.xlu0 %v840, 16
  %v885 = vpop.permute.xlu0 %884
  %886 = vrot.lane.b32.xlu0 %v837, 16
  %v887 = vpop.permute.xlu0 %886
  %888 = vrot.lane.b32.xlu0 %v841, 16
  %v889 = vpop.permute.xlu0 %888
  %v890 = vsel %vm91, %v883, %v887
  %v891 = vsel %vm91, %v885, %v889
  %v892 = vsel %vm91, %v879, %v883
  %v893 = vsel %vm91, %v881, %v885
  %v894 = vsel %vm91, %v875, %v879
  %v895 = vsel %vm91, %v877, %v881
  %v896 = vsel %vm91, %v887, %v875
  %v897 = vsel %vm91, %v889, %v877
  %v898 = vmul.f32 %v896, %v102
  %v899 = vmul.f32 %v894, %v106
  %v900 = vmul.f32 %v892, %v110
  %v901 = vmul.f32 %v890, %v114
  %v902 = vmul.f32 %v897, %v102
  %v903 = vmul.f32 %v895, %v106
  %v904 = vmul.f32 %v893, %v110
  %v905 = vmul.f32 %v891, %v114
  %906 = vrot.lane.b32.xlu0 %v834, 15
  %v907 = vpop.permute.xlu0 %906
  %908 = vrot.lane.b32.xlu0 %v838, 15
  %v909 = vpop.permute.xlu0 %908
  %910 = vrot.lane.b32.xlu0 %v835, 15
  %v911 = vpop.permute.xlu0 %910
  %912 = vrot.lane.b32.xlu0 %v839, 15
  %v913 = vpop.permute.xlu0 %912
  %914 = vrot.lane.b32.xlu0 %v836, 15
  %v915 = vpop.permute.xlu0 %914
  %916 = vrot.lane.b32.xlu0 %v840, 15
  %v917 = vpop.permute.xlu0 %916
  %918 = vrot.lane.b32.xlu0 %v837, 15
  %v919 = vpop.permute.xlu0 %918
  %920 = vrot.lane.b32.xlu0 %v841, 15
  %v921 = vpop.permute.xlu0 %920
  %v922 = vsel %vm131, %v915, %v919
  %v923 = vsel %vm131, %v917, %v921
  %v924 = vsel %vm131, %v911, %v915
  %v925 = vsel %vm131, %v913, %v917
  %v926 = vsel %vm131, %v907, %v911
  %v927 = vsel %vm131, %v909, %v913
  %v928 = vsel %vm131, %v919, %v907
  %v929 = vsel %vm131, %v921, %v909
  %v930 = vmul.f32 %v928, %v142
  %v931 = vmul.f32 %v926, %v146
  %v932 = vmul.f32 %v924, %v150
  %v933 = vmul.f32 %v922, %v154
  %v934 = vmul.f32 %v929, %v142
  %v935 = vmul.f32 %v927, %v146
  %v936 = vmul.f32 %v925, %v150
  %v937 = vmul.f32 %v923, %v154
  %938 = vrot.lane.b32.xlu0 %v834, 1
  %v939 = vpop.permute.xlu0 %938
  %940 = vrot.lane.b32.xlu0 %v838, 1
  %v941 = vpop.permute.xlu0 %940
  %942 = vrot.lane.b32.xlu0 %v835, 1
  %v943 = vpop.permute.xlu0 %942
  %944 = vrot.lane.b32.xlu0 %v839, 1
  %v945 = vpop.permute.xlu0 %944
  %946 = vrot.lane.b32.xlu0 %v836, 1
  %v947 = vpop.permute.xlu0 %946
  %948 = vrot.lane.b32.xlu0 %v840, 1
  %v949 = vpop.permute.xlu0 %948
  %950 = vrot.lane.b32.xlu0 %v837, 1
  %v951 = vpop.permute.xlu0 %950
  %952 = vrot.lane.b32.xlu0 %v841, 1
  %v953 = vpop.permute.xlu0 %952
  %v954 = vsel %vm171, %v947, %v951
  %v955 = vsel %vm171, %v949, %v953
  %v956 = vsel %vm171, %v943, %v947
  %v957 = vsel %vm171, %v945, %v949
  %v958 = vsel %vm171, %v939, %v943
  %v959 = vsel %vm171, %v941, %v945
  %v960 = vsel %vm171, %v951, %v939
  %v961 = vsel %vm171, %v953, %v941
  %v962 = vmul.f32 %v960, %v182
  %v963 = vmul.f32 %v958, %v186
  %v964 = vmul.f32 %v956, %v190
  %v965 = vmul.f32 %v954, %v194
  %v966 = vmul.f32 %v961, %v182
  %v967 = vmul.f32 %v959, %v186
  %v968 = vmul.f32 %v957, %v190
  %v969 = vmul.f32 %v955, %v194
  %970 = vrot.lane.b32.xlu0 %v834, 127
  %v971 = vpop.permute.xlu0 %970
  %972 = vrot.lane.b32.xlu0 %v838, 127
  %v973 = vpop.permute.xlu0 %972
  %974 = vrot.lane.b32.xlu0 %v835, 127
  %v975 = vpop.permute.xlu0 %974
  %976 = vrot.lane.b32.xlu0 %v839, 127
  %v977 = vpop.permute.xlu0 %976
  %978 = vrot.lane.b32.xlu0 %v836, 127
  %v979 = vpop.permute.xlu0 %978
  %980 = vrot.lane.b32.xlu0 %v840, 127
  %v981 = vpop.permute.xlu0 %980
  %982 = vrot.lane.b32.xlu0 %v837, 127
  %v983 = vpop.permute.xlu0 %982
  %984 = vrot.lane.b32.xlu0 %v841, 127
  %v985 = vpop.permute.xlu0 %984
  %v986 = vsel %vm211, %v979, %v983
  %v987 = vsel %vm211, %v981, %v985
  %v988 = vsel %vm211, %v975, %v979
  %v989 = vsel %vm211, %v977, %v981
  %v990 = vsel %vm211, %v971, %v975
  %v991 = vsel %vm211, %v973, %v977
  %v992 = vsel %vm211, %v983, %v971
  %v993 = vsel %vm211, %v985, %v973
  %v994 = vmul.f32 %v990, %v222
  %v995 = vmul.f32 %v988, %v226
  %v996 = vmul.f32 %v986, %v230
  %v997 = vmul.f32 %v992, %v234
  %v998 = vmul.f32 %v991, %v222
  %v999 = vmul.f32 %v989, %v226
  %v1000 = vmul.f32 %v987, %v230
  %v1001 = vmul.f32 %v993, %v234
  %1002 = vrot.lane.b32.xlu0 %v834, 113
  %v1003 = vpop.permute.xlu0 %1002
  %1004 = vrot.lane.b32.xlu0 %v838, 113
  %v1005 = vpop.permute.xlu0 %1004
  %1006 = vrot.lane.b32.xlu0 %v835, 113
  %v1007 = vpop.permute.xlu0 %1006
  %1008 = vrot.lane.b32.xlu0 %v839, 113
  %v1009 = vpop.permute.xlu0 %1008
  %1010 = vrot.lane.b32.xlu0 %v836, 113
  %v1011 = vpop.permute.xlu0 %1010
  %1012 = vrot.lane.b32.xlu0 %v840, 113
  %v1013 = vpop.permute.xlu0 %1012
  %1014 = vrot.lane.b32.xlu0 %v837, 113
  %v1015 = vpop.permute.xlu0 %1014
  %1016 = vrot.lane.b32.xlu0 %v841, 113
  %v1017 = vpop.permute.xlu0 %1016
  %v1018 = vsel %vm251, %v1011, %v1015
  %v1019 = vsel %vm251, %v1013, %v1017
  %v1020 = vsel %vm251, %v1007, %v1011
  %v1021 = vsel %vm251, %v1009, %v1013
  %v1022 = vsel %vm251, %v1003, %v1007
  %v1023 = vsel %vm251, %v1005, %v1009
  %v1024 = vsel %vm251, %v1015, %v1003
  %v1025 = vsel %vm251, %v1017, %v1005
  %v1026 = vmul.f32 %v1022, %v262
  %v1027 = vmul.f32 %v1020, %v266
  %v1028 = vmul.f32 %v1018, %v270
  %v1029 = vmul.f32 %v1024, %v274
  %v1030 = vmul.f32 %v1023, %v262
  %v1031 = vmul.f32 %v1021, %v266
  %v1032 = vmul.f32 %v1019, %v270
  %v1033 = vmul.f32 %v1025, %v274
  %1034 = vrot.lane.b32.xlu0 %v834, 112
  %v1035 = vpop.permute.xlu0 %1034
  %1036 = vrot.lane.b32.xlu0 %v838, 112
  %v1037 = vpop.permute.xlu0 %1036
  %1038 = vrot.lane.b32.xlu0 %v835, 112
  %v1039 = vpop.permute.xlu0 %1038
  %1040 = vrot.lane.b32.xlu0 %v839, 112
  %v1041 = vpop.permute.xlu0 %1040
  %1042 = vrot.lane.b32.xlu0 %v836, 112
  %v1043 = vpop.permute.xlu0 %1042
  %1044 = vrot.lane.b32.xlu0 %v840, 112
  %v1045 = vpop.permute.xlu0 %1044
  %1046 = vrot.lane.b32.xlu0 %v837, 112
  %v1047 = vpop.permute.xlu0 %1046
  %1048 = vrot.lane.b32.xlu0 %v841, 112
  %v1049 = vpop.permute.xlu0 %1048
  %v1050 = vsel %vm291, %v1043, %v1047
  %v1051 = vsel %vm291, %v1045, %v1049
  %v1052 = vsel %vm291, %v1039, %v1043
  %v1053 = vsel %vm291, %v1041, %v1045
  %v1054 = vsel %vm291, %v1035, %v1039
  %v1055 = vsel %vm291, %v1037, %v1041
  %v1056 = vsel %vm291, %v1047, %v1035
  %v1057 = vsel %vm291, %v1049, %v1037
  %v1058 = vmul.f32 %v1054, %v302
  %v1059 = vmul.f32 %v1052, %v306
  %v1060 = vmul.f32 %v1050, %v310
  %v1061 = vmul.f32 %v1056, %v314
  %v1062 = vmul.f32 %v1055, %v302
  %v1063 = vmul.f32 %v1053, %v306
  %v1064 = vmul.f32 %v1051, %v310
  %v1065 = vmul.f32 %v1057, %v314
  %1066 = vrot.lane.b32.xlu0 %v834, 111
  %v1067 = vpop.permute.xlu0 %1066
  %1068 = vrot.lane.b32.xlu0 %v838, 111
  %v1069 = vpop.permute.xlu0 %1068
  %1070 = vrot.lane.b32.xlu0 %v835, 111
  %v1071 = vpop.permute.xlu0 %1070
  %1072 = vrot.lane.b32.xlu0 %v839, 111
  %v1073 = vpop.permute.xlu0 %1072
  %1074 = vrot.lane.b32.xlu0 %v836, 111
  %v1075 = vpop.permute.xlu0 %1074
  %1076 = vrot.lane.b32.xlu0 %v840, 111
  %v1077 = vpop.permute.xlu0 %1076
  %1078 = vrot.lane.b32.xlu0 %v837, 111
  %v1079 = vpop.permute.xlu0 %1078
  %1080 = vrot.lane.b32.xlu0 %v841, 111
  %v1081 = vpop.permute.xlu0 %1080
  %v1082 = vsel %vm331, %v1075, %v1079
  %v1083 = vsel %vm331, %v1077, %v1081
  %v1084 = vsel %vm331, %v1071, %v1075
  %v1085 = vsel %vm331, %v1073, %v1077
  %v1086 = vsel %vm331, %v1067, %v1071
  %v1087 = vsel %vm331, %v1069, %v1073
  %v1088 = vsel %vm331, %v1079, %v1067
  %v1089 = vsel %vm331, %v1081, %v1069
  %v1090 = vmul.f32 %v1086, %v342
  %v1091 = vmul.f32 %v1084, %v346
  %v1092 = vmul.f32 %v1082, %v350
  %v1093 = vmul.f32 %v1088, %v354
  %v1094 = vmul.f32 %v1087, %v342
  %v1095 = vmul.f32 %v1085, %v346
  %v1096 = vmul.f32 %v1083, %v350
  %v1097 = vmul.f32 %v1089, %v354
  %v1098 = vld [vmem:[%s6] sm:$0xff]
  %v1099 = vld [vmem:[%s6 + $0x8] sm:$0xff]
  %v1100 = vld [vmem:[%s6 + $0x10] sm:$0xff]
  %v1101 = vld [vmem:[%s6 + $0x18] sm:$0xff]
  %v1102 = vld [vmem:[%s7] sm:$0xff]
  %v1103 = vld [vmem:[%s7 + $0x8] sm:$0xff]
  %1105 = vset.pattern.permute.xlu0 0
  %1106 = vperm.xlu0 %1105, %v1102
  %v1107 = vpop.permute.xlu0 %1106
  %1110 = vset.pattern.permute.xlu0 0
  %1111 = vperm.xlu0 %1110, %v1103
  %v1112 = vpop.permute.xlu0 %1111
  %vm1114 = vcmask 130048
  %v1116 = vsel %vm1114, %v1099, 0
  %v1119 = vsel %vm1114, %v1101, 0
  %1121 = vmatprep.subr.mxu0 %v867
  %1122 = vmatpush1.msra.mxu0 %v866
  %1123 = vmatprep.subr.mxu0 %v871
  %1124 = vmatpush1.msra.mxu0 %v870
  %1125 = vmatprep.subr.mxu0 %v899
  %1126 = vmatpush1.msra.mxu0 %v898
  %1127 = vmatprep.subr.mxu0 %v903
  %1128 = vmatpush1.msra.mxu0 %v902
  %1129 = vmatprep.subr.mxu0 %v931
  %1130 = vmatpush1.msra.mxu0 %v930
  %1131 = vmatprep.subr.mxu0 %v935
  %1132 = vmatpush1.msra.mxu0 %v934
  %1133 = vmatprep.subr.mxu0 %v963
  %1134 = vmatpush1.msra.mxu0 %v962
  %1135 = vmatprep.subr.mxu0 %v967
  %1136 = vmatpush1.msra.mxu0 %v966
  %1137 = vmatprep.subr.mxu0 %v835
  %1138 = vmatpush1.msra.mxu0 %v834
  %1139 = vmatprep.subr.mxu0 %v839
  %1140 = vmatpush1.msra.mxu0 %v838
  %1141 = vmatprep.subr.mxu0 %v995
  %1142 = vmatpush1.msra.mxu0 %v994
  %1143 = vmatprep.subr.mxu0 %v999
  %1144 = vmatpush1.msra.mxu0 %v998
  %1145 = vmatprep.subr.mxu0 %v1027
  %1146 = vmatpush1.msra.mxu0 %v1026
  %1147 = vmatprep.subr.mxu0 %v1031
  %1148 = vmatpush1.msra.mxu0 %v1030
  %1149 = vmatprep.subr.mxu0 %v1059
  %1150 = vmatpush1.msra.mxu0 %v1058
  %1151 = vmatprep.subr.mxu0 %v1063
  %1152 = vmatpush1.msra.mxu0 %v1062
  %1153 = vmatprep.subr.mxu0 %v1091
  %1154 = vmatpush1.msra.mxu0 %v1090
  %1155 = vmatprep.subr.mxu0 %v1095
  %1156 = vmatpush1.msra.mxu0 %v1094
  %1157 = vmatprep.subr.mxu0 0.0
  %1158 = vmatpush1.msra.mxu0 0.0
  %1159 = vmatprep.subr.mxu0 0.0
  %1160 = vmatpush1.msra.mxu0 0.0
  %1161 = vmatprep.subr.mxu0 0.0
  %1162 = vmatpush1.msra.mxu0 0.0
  %1163 = vmatprep.subr.mxu0 0.0
  %1164 = vmatpush1.msra.mxu0 0.0
  %1165 = vmatprep.subr.mxu0 0.0
  %1166 = vmatpush1.msra.mxu0 0.0
  %1167 = vmatprep.subr.mxu0 0.0
  %1168 = vmatpush1.msra.mxu0 0.0
  %1169 = vmatprep.subr.mxu0 0.0
  %1170 = vmatpush1.msra.mxu0 0.0
  %1171 = vmatprep.subr.mxu0 0.0
  %1172 = vmatpush1.msra.mxu0 0.0
  %1173 = vmatprep.subr.mxu0 0.0
  %1174 = vmatpush1.msra.mxu0 0.0
  %1175 = vmatprep.subr.mxu0 0.0
  %1176 = vmatpush1.msra.mxu0 0.0
  %1177 = vmatprep.subr.mxu0 0.0
  %1178 = vmatpush1.msra.mxu0 0.0
  %1179 = vmatprep.subr.mxu0 0.0
  %1180 = vmatpush1.msra.mxu0 0.0
  %1181 = vmatprep.subr.mxu0 0.0
  %1182 = vmatpush1.msra.mxu0 0.0
  %1183 = vmatprep.subr.mxu0 0.0
  %1184 = vmatpush1.msra.mxu0 0.0
  %1185 = vmatprep.mubr.f32.mxu0 %v1116
  %1186 = vmatmul.mubr.f32.gmra.mrb[0].mxu0 %v1098
  %v1187 = vpop.f32.mrb[0].mxu0
  %v1188 = vadd.f32 %v1107, %v1187
  %v1189 = vpop.f32.mrb[0].mxu0
  %v1190 = vadd.f32 %v1107, %v1189
  %1191 = vmatprep.mubr.f32.mxu0 %v1119
  %1192 = vmatmul.mubr.f32.gmra.mrb[0].mxu0 %v1100
  %v1193 = vpop.f32.mrb[0].mxu0
  %v1194 = vadd.f32 %v1112, %v1193
  %v1195 = vpop.f32.mrb[0].mxu0
  %v1196 = vadd.f32 %v1112, %v1195
  %1197 = vdwg.mxu0
  %1198 = vmatprep.subr.mxu0 %v869
  %1199 = vmatpush1.msra.mxu0 %v868
  %1200 = vmatprep.subr.mxu0 %v873
  %1201 = vmatpush1.msra.mxu0 %v872
  %1202 = vmatprep.subr.mxu0 %v901
  %1203 = vmatpush1.msra.mxu0 %v900
  %1204 = vmatprep.subr.mxu0 %v905
  %1205 = vmatpush1.msra.mxu0 %v904
  %1206 = vmatprep.subr.mxu0 %v933
  %1207 = vmatpush1.msra.mxu0 %v932
  %1208 = vmatprep.subr.mxu0 %v937
  %1209 = vmatpush1.msra.mxu0 %v936
  %1210 = vmatprep.subr.mxu0 %v965
  %1211 = vmatpush1.msra.mxu0 %v964
  %1212 = vmatprep.subr.mxu0 %v969
  %1213 = vmatpush1.msra.mxu0 %v968
  %1214 = vmatprep.subr.mxu0 %v837
  %1215 = vmatpush1.msra.mxu0 %v836
  %1216 = vmatprep.subr.mxu0 %v841
  %1217 = vmatpush1.msra.mxu0 %v840
  %1218 = vmatprep.subr.mxu0 %v997
  %1219 = vmatpush1.msra.mxu0 %v996
  %1220 = vmatprep.subr.mxu0 %v1001
  %1221 = vmatpush1.msra.mxu0 %v1000
  %1222 = vmatprep.subr.mxu0 %v1029
  %1223 = vmatpush1.msra.mxu0 %v1028
  %1224 = vmatprep.subr.mxu0 %v1033
  %1225 = vmatpush1.msra.mxu0 %v1032
  %1226 = vmatprep.subr.mxu0 %v1061
  %1227 = vmatpush1.msra.mxu0 %v1060
  %1228 = vmatprep.subr.mxu0 %v1065
  %1229 = vmatpush1.msra.mxu0 %v1064
  %1230 = vmatprep.subr.mxu0 %v1093
  %1231 = vmatpush1.msra.mxu0 %v1092
  %1232 = vmatprep.subr.mxu0 %v1097
  %1233 = vmatpush1.msra.mxu0 %v1096
  %1234 = vmatprep.subr.mxu0 0.0
  %1235 = vmatpush1.msra.mxu0 0.0
  %1236 = vmatprep.subr.mxu0 0.0
  %1237 = vmatpush1.msra.mxu0 0.0
  %1238 = vmatprep.subr.mxu0 0.0
  %1239 = vmatpush1.msra.mxu0 0.0
  %1240 = vmatprep.subr.mxu0 0.0
  %1241 = vmatpush1.msra.mxu0 0.0
  %1242 = vmatprep.subr.mxu0 0.0
  %1243 = vmatpush1.msra.mxu0 0.0
  %1244 = vmatprep.subr.mxu0 0.0
  %1245 = vmatpush1.msra.mxu0 0.0
  %1246 = vmatprep.subr.mxu0 0.0
  %1247 = vmatpush1.msra.mxu0 0.0
  %1248 = vmatprep.subr.mxu0 0.0
  %1249 = vmatpush1.msra.mxu0 0.0
  %1250 = vmatprep.subr.mxu0 0.0
  %1251 = vmatpush1.msra.mxu0 0.0
  %1252 = vmatprep.subr.mxu0 0.0
  %1253 = vmatpush1.msra.mxu0 0.0
  %1254 = vmatprep.subr.mxu0 0.0
  %1255 = vmatpush1.msra.mxu0 0.0
  %1256 = vmatprep.subr.mxu0 0.0
  %1257 = vmatpush1.msra.mxu0 0.0
  %1258 = vmatprep.subr.mxu0 0.0
  %1259 = vmatpush1.msra.mxu0 0.0
  %1260 = vmatprep.subr.mxu0 0.0
  %1261 = vmatpush1.msra.mxu0 0.0
  %1262 = vmatprep.mubr.f32.mxu0 %v1116
  %1263 = vmatmul.mubr.f32.gmra.mrb[0].mxu0 %v1098
  %v1264 = vpop.f32.mrb[0].mxu0
  %v1265 = vadd.f32 %v1107, %v1264
  %v1266 = vpop.f32.mrb[0].mxu0
  %v1267 = vadd.f32 %v1107, %v1266
  %1268 = vmatprep.mubr.f32.mxu0 %v1119
  %1269 = vmatmul.mubr.f32.gmra.mrb[0].mxu0 %v1100
  %v1270 = vpop.f32.mrb[0].mxu0
  %v1271 = vadd.f32 %v1112, %v1270
  %v1272 = vpop.f32.mrb[0].mxu0
  %v1273 = vadd.f32 %v1112, %v1272
  %1274 = vdwg.mxu0
  %v1275 = vmul.f32 %v1188, 0.01
  %v1276 = vmul.f32 %v1190, 0.01
  %v1277 = vmul.f32 %v1265, 0.01
  %v1278 = vmul.f32 %v1267, 0.01
  %v1279 = vmul.f32 %v1194, 0.01
  %v1280 = vmul.f32 %v1196, 0.01
  %v1281 = vmul.f32 %v1271, 0.01
  %v1282 = vmul.f32 %v1273, 0.01
  %v1283 = vmax.f32 %v1188, %v1275
  %v1284 = vmax.f32 %v1190, %v1276
  %v1285 = vmax.f32 %v1265, %v1277
  %v1286 = vmax.f32 %v1267, %v1278
  %v1287 = vmax.f32 %v1194, %v1279
  %v1288 = vmax.f32 %v1196, %v1280
  %v1289 = vmax.f32 %v1271, %v1281
  %v1290 = vmax.f32 %v1273, %v1282
  %1291 = vst [vmem:[#allocation2] sm:$0xff] %v1283
  %1292 = vst [vmem:[#allocation2 + $0x8] sm:$0xff] %v1284
  %1293 = vst [vmem:[#allocation2 + $0x10] sm:$0xff] %v1285
  %1294 = vst [vmem:[#allocation2 + $0x18] sm:$0xff] %v1286
  %1295 = vst [vmem:[#allocation2 + $0x20] sm:$0xff] %v1287
  %1296 = vst [vmem:[#allocation2 + $0x28] sm:$0xff] %v1288
  %1297 = vst [vmem:[#allocation2 + $0x30] sm:$0xff] %v1289
  %1298 = vst [vmem:[#allocation2 + $0x38] sm:$0xff] %v1290
  %v1299 = vld [vmem:[%s8] sm:$0x1f]
  %v1300 = vld [vmem:[%s8 + $0x8] sm:$0x1f]
  %v1301 = vld [vmem:[%s8 + $0x10] sm:$0x1f]
  %v1302 = vld [vmem:[%s8 + $0x18] sm:$0x1f]
  %v1303 = vld [vmem:[#allocation2] ss:$8 sm:$0xf]
  %v1305 = vlaneseq
  %v1306 = vshrl.u32 %v1305, 7
  %v1307 = vsub.s32 0, %v1306
  %v1308 = vrot.slane %v1303, %v1307
  %v1309 = vlaneseq
  %v1310 = vshrl.u32 %v1309, 7
  %v1311 = vsub.s32 1, %v1310
  %v1312 = vrot.slane %v1303, %v1311
  %v1313 = vlaneseq
  %v1314 = vshrl.u32 %v1313, 7
  %v1315 = vsub.s32 2, %v1314
  %v1316 = vrot.slane %v1303, %v1315
  %v1317 = vlaneseq
  %v1318 = vshrl.u32 %v1317, 7
  %v1319 = vsub.s32 3, %v1318
  %v1320 = vrot.slane %v1303, %v1319
  %v1325 = vmul.f32 %v1299, %v1308
  %v1326 = vmul.f32 %v1300, %v1312
  %v1327 = vmul.f32 %v1301, %v1316
  %v1328 = vmul.f32 %v1302, %v1320
  %v1329 = vadd.f32 %v1325, 0.0
  %v1330 = vadd.f32 %v1326, 0.0
  %v1331 = vadd.f32 %v1327, 0.0
  %v1332 = vadd.f32 %v1328, 0.0
  %s1333 = scalar_lea.vmem %s8, 32
  %v1334 = vld [vmem:[%s1333] sm:$0x1f]
  %v1335 = vld [vmem:[%s1333 + $0x8] sm:$0x1f]
  %v1336 = vld [vmem:[%s1333 + $0x10] sm:$0x1f]
  %v1337 = vld [vmem:[%s1333 + $0x18] sm:$0x1f]
  %s1338 = scalar_lea.vmem [#allocation2], 1
  %v1339 = vld [vmem:[%s1338] ss:$8 sm:$0xf]
  %v1341 = vlaneseq
  %v1342 = vshrl.u32 %v1341, 7
  %v1343 = vsub.s32 0, %v1342
  %v1344 = vrot.slane %v1339, %v1343
  %v1345 = vlaneseq
  %v1346 = vshrl.u32 %v1345, 7
  %v1347 = vsub.s32 1, %v1346
  %v1348 = vrot.slane %v1339, %v1347
  %v1349 = vlaneseq
  %v1350 = vshrl.u32 %v1349, 7
  %v1351 = vsub.s32 2, %v1350
  %v1352 = vrot.slane %v1339, %v1351
  %v1353 = vlaneseq
  %v1354 = vshrl.u32 %v1353, 7
  %v1355 = vsub.s32 3, %v1354
  %v1356 = vrot.slane %v1339, %v1355
  %v1361 = vmul.f32 %v1334, %v1344
  %v1362 = vmul.f32 %v1335, %v1348
  %v1363 = vmul.f32 %v1336, %v1352
  %v1364 = vmul.f32 %v1337, %v1356
  %v1365 = vadd.f32 %v1329, %v1361
  %v1366 = vadd.f32 %v1330, %v1362
  %v1367 = vadd.f32 %v1331, %v1363
  %v1368 = vadd.f32 %v1332, %v1364
  %s1369 = scalar_lea.vmem %s8, 64
  %v1370 = vld [vmem:[%s1369] sm:$0x1f]
  %v1371 = vld [vmem:[%s1369 + $0x8] sm:$0x1f]
  %v1372 = vld [vmem:[%s1369 + $0x10] sm:$0x1f]
  %v1373 = vld [vmem:[%s1369 + $0x18] sm:$0x1f]
  %s1374 = scalar_lea.vmem [#allocation2], 2
  %v1375 = vld [vmem:[%s1374] ss:$8 sm:$0xf]
  %v1377 = vlaneseq
  %v1378 = vshrl.u32 %v1377, 7
  %v1379 = vsub.s32 0, %v1378
  %v1380 = vrot.slane %v1375, %v1379
  %v1381 = vlaneseq
  %v1382 = vshrl.u32 %v1381, 7
  %v1383 = vsub.s32 1, %v1382
  %v1384 = vrot.slane %v1375, %v1383
  %v1385 = vlaneseq
  %v1386 = vshrl.u32 %v1385, 7
  %v1387 = vsub.s32 2, %v1386
  %v1388 = vrot.slane %v1375, %v1387
  %v1389 = vlaneseq
  %v1390 = vshrl.u32 %v1389, 7
  %v1391 = vsub.s32 3, %v1390
  %v1392 = vrot.slane %v1375, %v1391
  %v1397 = vmul.f32 %v1370, %v1380
  %v1398 = vmul.f32 %v1371, %v1384
  %v1399 = vmul.f32 %v1372, %v1388
  %v1400 = vmul.f32 %v1373, %v1392
  %v1401 = vadd.f32 %v1365, %v1397
  %v1402 = vadd.f32 %v1366, %v1398
  %v1403 = vadd.f32 %v1367, %v1399
  %v1404 = vadd.f32 %v1368, %v1400
  %s1405 = scalar_lea.vmem %s8, 96
  %v1406 = vld [vmem:[%s1405] sm:$0x1f]
  %v1407 = vld [vmem:[%s1405 + $0x8] sm:$0x1f]
  %v1408 = vld [vmem:[%s1405 + $0x10] sm:$0x1f]
  %v1409 = vld [vmem:[%s1405 + $0x18] sm:$0x1f]
  %s1410 = scalar_lea.vmem [#allocation2], 3
  %v1411 = vld [vmem:[%s1410] ss:$8 sm:$0xf]
  %v1413 = vlaneseq
  %v1414 = vshrl.u32 %v1413, 7
  %v1415 = vsub.s32 0, %v1414
  %v1416 = vrot.slane %v1411, %v1415
  %v1417 = vlaneseq
  %v1418 = vshrl.u32 %v1417, 7
  %v1419 = vsub.s32 1, %v1418
  %v1420 = vrot.slane %v1411, %v1419
  %v1421 = vlaneseq
  %v1422 = vshrl.u32 %v1421, 7
  %v1423 = vsub.s32 2, %v1422
  %v1424 = vrot.slane %v1411, %v1423
  %v1425 = vlaneseq
  %v1426 = vshrl.u32 %v1425, 7
  %v1427 = vsub.s32 3, %v1426
  %v1428 = vrot.slane %v1411, %v1427
  %v1433 = vmul.f32 %v1406, %v1416
  %v1434 = vmul.f32 %v1407, %v1420
  %v1435 = vmul.f32 %v1408, %v1424
  %v1436 = vmul.f32 %v1409, %v1428
  %v1437 = vadd.f32 %v1401, %v1433
  %v1438 = vadd.f32 %v1402, %v1434
  %v1439 = vadd.f32 %v1403, %v1435
  %v1440 = vadd.f32 %v1404, %v1436
  %s1441 = scalar_lea.vmem %s8, 128
  %v1442 = vld [vmem:[%s1441] sm:$0x1f]
  %v1443 = vld [vmem:[%s1441 + $0x8] sm:$0x1f]
  %v1444 = vld [vmem:[%s1441 + $0x10] sm:$0x1f]
  %v1445 = vld [vmem:[%s1441 + $0x18] sm:$0x1f]
  %s1446 = scalar_lea.vmem [#allocation2], 4
  %v1447 = vld [vmem:[%s1446] ss:$8 sm:$0xf]
  %v1449 = vlaneseq
  %v1450 = vshrl.u32 %v1449, 7
  %v1451 = vsub.s32 0, %v1450
  %v1452 = vrot.slane %v1447, %v1451
  %v1453 = vlaneseq
  %v1454 = vshrl.u32 %v1453, 7
  %v1455 = vsub.s32 1, %v1454
  %v1456 = vrot.slane %v1447, %v1455
  %v1457 = vlaneseq
  %v1458 = vshrl.u32 %v1457, 7
  %v1459 = vsub.s32 2, %v1458
  %v1460 = vrot.slane %v1447, %v1459
  %v1461 = vlaneseq
  %v1462 = vshrl.u32 %v1461, 7
  %v1463 = vsub.s32 3, %v1462
  %v1464 = vrot.slane %v1447, %v1463
  %v1469 = vmul.f32 %v1442, %v1452
  %v1470 = vmul.f32 %v1443, %v1456
  %v1471 = vmul.f32 %v1444, %v1460
  %v1472 = vmul.f32 %v1445, %v1464
  %v1473 = vadd.f32 %v1437, %v1469
  %v1474 = vadd.f32 %v1438, %v1470
  %v1475 = vadd.f32 %v1439, %v1471
  %v1476 = vadd.f32 %v1440, %v1472
  %s1477 = scalar_lea.vmem %s8, 160
  %v1478 = vld [vmem:[%s1477] sm:$0x1f]
  %v1479 = vld [vmem:[%s1477 + $0x8] sm:$0x1f]
  %v1480 = vld [vmem:[%s1477 + $0x10] sm:$0x1f]
  %v1481 = vld [vmem:[%s1477 + $0x18] sm:$0x1f]
  %s1482 = scalar_lea.vmem [#allocation2], 5
  %v1483 = vld [vmem:[%s1482] ss:$8 sm:$0xf]
  %v1485 = vlaneseq
  %v1486 = vshrl.u32 %v1485, 7
  %v1487 = vsub.s32 0, %v1486
  %v1488 = vrot.slane %v1483, %v1487
  %v1489 = vlaneseq
  %v1490 = vshrl.u32 %v1489, 7
  %v1491 = vsub.s32 1, %v1490
  %v1492 = vrot.slane %v1483, %v1491
  %v1493 = vlaneseq
  %v1494 = vshrl.u32 %v1493, 7
  %v1495 = vsub.s32 2, %v1494
  %v1496 = vrot.slane %v1483, %v1495
  %v1497 = vlaneseq
  %v1498 = vshrl.u32 %v1497, 7
  %v1499 = vsub.s32 3, %v1498
  %v1500 = vrot.slane %v1483, %v1499
  %v1505 = vmul.f32 %v1478, %v1488
  %v1506 = vmul.f32 %v1479, %v1492
  %v1507 = vmul.f32 %v1480, %v1496
  %v1508 = vmul.f32 %v1481, %v1500
  %v1509 = vadd.f32 %v1473, %v1505
  %v1510 = vadd.f32 %v1474, %v1506
  %v1511 = vadd.f32 %v1475, %v1507
  %v1512 = vadd.f32 %v1476, %v1508
  %s1513 = scalar_lea.vmem %s8, 192
  %v1514 = vld [vmem:[%s1513] sm:$0x1f]
  %v1515 = vld [vmem:[%s1513 + $0x8] sm:$0x1f]
  %v1516 = vld [vmem:[%s1513 + $0x10] sm:$0x1f]
  %v1517 = vld [vmem:[%s1513 + $0x18] sm:$0x1f]
  %s1518 = scalar_lea.vmem [#allocation2], 6
  %v1519 = vld [vmem:[%s1518] ss:$8 sm:$0xf]
  %v1521 = vlaneseq
  %v1522 = vshrl.u32 %v1521, 7
  %v1523 = vsub.s32 0, %v1522
  %v1524 = vrot.slane %v1519, %v1523
  %v1525 = vlaneseq
  %v1526 = vshrl.u32 %v1525, 7
  %v1527 = vsub.s32 1, %v1526
  %v1528 = vrot.slane %v1519, %v1527
  %v1529 = vlaneseq
  %v1530 = vshrl.u32 %v1529, 7
  %v1531 = vsub.s32 2, %v1530
  %v1532 = vrot.slane %v1519, %v1531
  %v1533 = vlaneseq
  %v1534 = vshrl.u32 %v1533, 7
  %v1535 = vsub.s32 3, %v1534
  %v1536 = vrot.slane %v1519, %v1535
  %v1541 = vmul.f32 %v1514, %v1524
  %v1542 = vmul.f32 %v1515, %v1528
  %v1543 = vmul.f32 %v1516, %v1532
  %v1544 = vmul.f32 %v1517, %v1536
  %v1545 = vadd.f32 %v1509, %v1541
  %v1546 = vadd.f32 %v1510, %v1542
  %v1547 = vadd.f32 %v1511, %v1543
  %v1548 = vadd.f32 %v1512, %v1544
  %s1549 = scalar_lea.vmem %s8, 224
  %v1550 = vld [vmem:[%s1549] sm:$0x1f]
  %v1551 = vld [vmem:[%s1549 + $0x8] sm:$0x1f]
  %v1552 = vld [vmem:[%s1549 + $0x10] sm:$0x1f]
  %v1553 = vld [vmem:[%s1549 + $0x18] sm:$0x1f]
  %s1554 = scalar_lea.vmem [#allocation2], 7
  %v1555 = vld [vmem:[%s1554] ss:$8 sm:$0xf]
  %v1557 = vlaneseq
  %v1558 = vshrl.u32 %v1557, 7
  %v1559 = vsub.s32 0, %v1558
  %v1560 = vrot.slane %v1555, %v1559
  %v1561 = vlaneseq
  %v1562 = vshrl.u32 %v1561, 7
  %v1563 = vsub.s32 1, %v1562
  %v1564 = vrot.slane %v1555, %v1563
  %v1565 = vlaneseq
  %v1566 = vshrl.u32 %v1565, 7
  %v1567 = vsub.s32 2, %v1566
  %v1568 = vrot.slane %v1555, %v1567
  %v1569 = vlaneseq
  %v1570 = vshrl.u32 %v1569, 7
  %v1571 = vsub.s32 3, %v1570
  %v1572 = vrot.slane %v1555, %v1571
  %v1577 = vmul.f32 %v1550, %v1560
  %v1578 = vmul.f32 %v1551, %v1564
  %v1579 = vmul.f32 %v1552, %v1568
  %v1580 = vmul.f32 %v1553, %v1572
  %v1581 = vadd.f32 %v1545, %v1577
  %v1582 = vadd.f32 %v1546, %v1578
  %v1583 = vadd.f32 %v1547, %v1579
  %v1584 = vadd.f32 %v1548, %v1580
  %s1585 = scalar_lea.vmem %s8, 256
  %v1586 = vld [vmem:[%s1585] sm:$0x1f]
  %v1587 = vld [vmem:[%s1585 + $0x8] sm:$0x1f]
  %v1588 = vld [vmem:[%s1585 + $0x10] sm:$0x1f]
  %v1589 = vld [vmem:[%s1585 + $0x18] sm:$0x1f]
  %s1590 = scalar_lea.vmem [#allocation2], 32
  %v1591 = vld [vmem:[%s1590] ss:$8 sm:$0xf]
  %v1593 = vlaneseq
  %v1594 = vshrl.u32 %v1593, 7
  %v1595 = vsub.s32 0, %v1594
  %v1596 = vrot.slane %v1591, %v1595
  %v1597 = vlaneseq
  %v1598 = vshrl.u32 %v1597, 7
  %v1599 = vsub.s32 1, %v1598
  %v1600 = vrot.slane %v1591, %v1599
  %v1601 = vlaneseq
  %v1602 = vshrl.u32 %v1601, 7
  %v1603 = vsub.s32 2, %v1602
  %v1604 = vrot.slane %v1591, %v1603
  %v1605 = vlaneseq
  %v1606 = vshrl.u32 %v1605, 7
  %v1607 = vsub.s32 3, %v1606
  %v1608 = vrot.slane %v1591, %v1607
  %v1613 = vmul.f32 %v1586, %v1596
  %v1614 = vmul.f32 %v1587, %v1600
  %v1615 = vmul.f32 %v1588, %v1604
  %v1616 = vmul.f32 %v1589, %v1608
  %v1617 = vadd.f32 %v1581, %v1613
  %v1618 = vadd.f32 %v1582, %v1614
  %v1619 = vadd.f32 %v1583, %v1615
  %v1620 = vadd.f32 %v1584, %v1616
  %s1621 = scalar_lea.vmem %s8, 288
  %v1622 = vld [vmem:[%s1621] sm:$0x1f]
  %v1623 = vld [vmem:[%s1621 + $0x8] sm:$0x1f]
  %v1624 = vld [vmem:[%s1621 + $0x10] sm:$0x1f]
  %v1625 = vld [vmem:[%s1621 + $0x18] sm:$0x1f]
  %s1626 = scalar_lea.vmem [#allocation2], 33
  %v1627 = vld [vmem:[%s1626] ss:$8 sm:$0xf]
  %v1629 = vlaneseq
  %v1630 = vshrl.u32 %v1629, 7
  %v1631 = vsub.s32 0, %v1630
  %v1632 = vrot.slane %v1627, %v1631
  %v1633 = vlaneseq
  %v1634 = vshrl.u32 %v1633, 7
  %v1635 = vsub.s32 1, %v1634
  %v1636 = vrot.slane %v1627, %v1635
  %v1637 = vlaneseq
  %v1638 = vshrl.u32 %v1637, 7
  %v1639 = vsub.s32 2, %v1638
  %v1640 = vrot.slane %v1627, %v1639
  %v1641 = vlaneseq
  %v1642 = vshrl.u32 %v1641, 7
  %v1643 = vsub.s32 3, %v1642
  %v1644 = vrot.slane %v1627, %v1643
  %v1649 = vmul.f32 %v1622, %v1632
  %v1650 = vmul.f32 %v1623, %v1636
  %v1651 = vmul.f32 %v1624, %v1640
  %v1652 = vmul.f32 %v1625, %v1644
  %v1653 = vadd.f32 %v1617, %v1649
  %v1654 = vadd.f32 %v1618, %v1650
  %v1655 = vadd.f32 %v1619, %v1651
  %v1656 = vadd.f32 %v1620, %v1652
  %s1657 = scalar_lea.vmem %s8, 320
  %v1658 = vld [vmem:[%s1657] sm:$0x1f]
  %v1659 = vld [vmem:[%s1657 + $0x8] sm:$0x1f]
  %v1660 = vld [vmem:[%s1657 + $0x10] sm:$0x1f]
  %v1661 = vld [vmem:[%s1657 + $0x18] sm:$0x1f]
  %s1662 = scalar_lea.vmem [#allocation2], 34
  %v1663 = vld [vmem:[%s1662] ss:$8 sm:$0xf]
  %v1665 = vlaneseq
  %v1666 = vshrl.u32 %v1665, 7
  %v1667 = vsub.s32 0, %v1666
  %v1668 = vrot.slane %v1663, %v1667
  %v1669 = vlaneseq
  %v1670 = vshrl.u32 %v1669, 7
  %v1671 = vsub.s32 1, %v1670
  %v1672 = vrot.slane %v1663, %v1671
  %v1673 = vlaneseq
  %v1674 = vshrl.u32 %v1673, 7
  %v1675 = vsub.s32 2, %v1674
  %v1676 = vrot.slane %v1663, %v1675
  %v1677 = vlaneseq
  %v1678 = vshrl.u32 %v1677, 7
  %v1679 = vsub.s32 3, %v1678
  %v1680 = vrot.slane %v1663, %v1679
  %v1685 = vmul.f32 %v1658, %v1668
  %v1686 = vmul.f32 %v1659, %v1672
  %v1687 = vmul.f32 %v1660, %v1676
  %v1688 = vmul.f32 %v1661, %v1680
  %v1689 = vadd.f32 %v1653, %v1685
  %v1690 = vadd.f32 %v1654, %v1686
  %v1691 = vadd.f32 %v1655, %v1687
  %v1692 = vadd.f32 %v1656, %v1688
  %s1693 = scalar_lea.vmem %s8, 352
  %v1694 = vld [vmem:[%s1693] sm:$0x1f]
  %v1695 = vld [vmem:[%s1693 + $0x8] sm:$0x1f]
  %v1696 = vld [vmem:[%s1693 + $0x10] sm:$0x1f]
  %v1697 = vld [vmem:[%s1693 + $0x18] sm:$0x1f]
  %s1698 = scalar_lea.vmem [#allocation2], 35
  %v1699 = vld [vmem:[%s1698] ss:$8 sm:$0xf]
  %v1701 = vlaneseq
  %v1702 = vshrl.u32 %v1701, 7
  %v1703 = vsub.s32 0, %v1702
  %v1704 = vrot.slane %v1699, %v1703
  %v1705 = vlaneseq
  %v1706 = vshrl.u32 %v1705, 7
  %v1707 = vsub.s32 1, %v1706
  %v1708 = vrot.slane %v1699, %v1707
  %v1709 = vlaneseq
  %v1710 = vshrl.u32 %v1709, 7
  %v1711 = vsub.s32 2, %v1710
  %v1712 = vrot.slane %v1699, %v1711
  %v1713 = vlaneseq
  %v1714 = vshrl.u32 %v1713, 7
  %v1715 = vsub.s32 3, %v1714
  %v1716 = vrot.slane %v1699, %v1715
  %v1721 = vmul.f32 %v1694, %v1704
  %v1722 = vmul.f32 %v1695, %v1708
  %v1723 = vmul.f32 %v1696, %v1712
  %v1724 = vmul.f32 %v1697, %v1716
  %v1725 = vadd.f32 %v1689, %v1721
  %v1726 = vadd.f32 %v1690, %v1722
  %v1727 = vadd.f32 %v1691, %v1723
  %v1728 = vadd.f32 %v1692, %v1724
  %s1729 = scalar_lea.vmem %s8, 384
  %v1730 = vld [vmem:[%s1729] sm:$0x1f]
  %v1731 = vld [vmem:[%s1729 + $0x8] sm:$0x1f]
  %v1732 = vld [vmem:[%s1729 + $0x10] sm:$0x1f]
  %v1733 = vld [vmem:[%s1729 + $0x18] sm:$0x1f]
  %s1734 = scalar_lea.vmem [#allocation2], 36
  %v1735 = vld [vmem:[%s1734] ss:$8 sm:$0xf]
  %v1737 = vlaneseq
  %v1738 = vshrl.u32 %v1737, 7
  %v1739 = vsub.s32 0, %v1738
  %v1740 = vrot.slane %v1735, %v1739
  %v1741 = vlaneseq
  %v1742 = vshrl.u32 %v1741, 7
  %v1743 = vsub.s32 1, %v1742
  %v1744 = vrot.slane %v1735, %v1743
  %v1745 = vlaneseq
  %v1746 = vshrl.u32 %v1745, 7
  %v1747 = vsub.s32 2, %v1746
  %v1748 = vrot.slane %v1735, %v1747
  %v1749 = vlaneseq
  %v1750 = vshrl.u32 %v1749, 7
  %v1751 = vsub.s32 3, %v1750
  %v1752 = vrot.slane %v1735, %v1751
  %v1757 = vmul.f32 %v1730, %v1740
  %v1758 = vmul.f32 %v1731, %v1744
  %v1759 = vmul.f32 %v1732, %v1748
  %v1760 = vmul.f32 %v1733, %v1752
  %v1761 = vadd.f32 %v1725, %v1757
  %v1762 = vadd.f32 %v1726, %v1758
  %v1763 = vadd.f32 %v1727, %v1759
  %v1764 = vadd.f32 %v1728, %v1760
  %s1765 = scalar_lea.vmem %s8, 416
  %v1766 = vld [vmem:[%s1765] sm:$0x1f]
  %v1767 = vld [vmem:[%s1765 + $0x8] sm:$0x1f]
  %v1768 = vld [vmem:[%s1765 + $0x10] sm:$0x1f]
  %v1769 = vld [vmem:[%s1765 + $0x18] sm:$0x1f]
  %s1770 = scalar_lea.vmem [#allocation2], 37
  %v1771 = vld [vmem:[%s1770] ss:$8 sm:$0xf]
  %v1773 = vlaneseq
  %v1774 = vshrl.u32 %v1773, 7
  %v1775 = vsub.s32 0, %v1774
  %v1776 = vrot.slane %v1771, %v1775
  %v1777 = vlaneseq
  %v1778 = vshrl.u32 %v1777, 7
  %v1779 = vsub.s32 1, %v1778
  %v1780 = vrot.slane %v1771, %v1779
  %v1781 = vlaneseq
  %v1782 = vshrl.u32 %v1781, 7
  %v1783 = vsub.s32 2, %v1782
  %v1784 = vrot.slane %v1771, %v1783
  %v1785 = vlaneseq
  %v1786 = vshrl.u32 %v1785, 7
  %v1787 = vsub.s32 3, %v1786
  %v1788 = vrot.slane %v1771, %v1787
  %v1793 = vmul.f32 %v1766, %v1776
  %v1794 = vmul.f32 %v1767, %v1780
  %v1795 = vmul.f32 %v1768, %v1784
  %v1796 = vmul.f32 %v1769, %v1788
  %v1797 = vadd.f32 %v1761, %v1793
  %v1798 = vadd.f32 %v1762, %v1794
  %v1799 = vadd.f32 %v1763, %v1795
  %v1800 = vadd.f32 %v1764, %v1796
  %s1801 = scalar_lea.vmem %s8, 448
  %v1802 = vld [vmem:[%s1801] sm:$0x1f]
  %v1803 = vld [vmem:[%s1801 + $0x8] sm:$0x1f]
  %v1804 = vld [vmem:[%s1801 + $0x10] sm:$0x1f]
  %v1805 = vld [vmem:[%s1801 + $0x18] sm:$0x1f]
  %s1806 = scalar_lea.vmem [#allocation2], 38
  %v1807 = vld [vmem:[%s1806] ss:$8 sm:$0xf]
  %v1809 = vlaneseq
  %v1810 = vshrl.u32 %v1809, 7
  %v1811 = vsub.s32 0, %v1810
  %v1812 = vrot.slane %v1807, %v1811
  %v1813 = vlaneseq
  %v1814 = vshrl.u32 %v1813, 7
  %v1815 = vsub.s32 1, %v1814
  %v1816 = vrot.slane %v1807, %v1815
  %v1817 = vlaneseq
  %v1818 = vshrl.u32 %v1817, 7
  %v1819 = vsub.s32 2, %v1818
  %v1820 = vrot.slane %v1807, %v1819
  %v1821 = vlaneseq
  %v1822 = vshrl.u32 %v1821, 7
  %v1823 = vsub.s32 3, %v1822
  %v1824 = vrot.slane %v1807, %v1823
  %v1829 = vmul.f32 %v1802, %v1812
  %v1830 = vmul.f32 %v1803, %v1816
  %v1831 = vmul.f32 %v1804, %v1820
  %v1832 = vmul.f32 %v1805, %v1824
  %v1833 = vadd.f32 %v1797, %v1829
  %v1834 = vadd.f32 %v1798, %v1830
  %v1835 = vadd.f32 %v1799, %v1831
  %v1836 = vadd.f32 %v1800, %v1832
  %s1837 = scalar_lea.vmem %s8, 480
  %v1838 = vld [vmem:[%s1837] sm:$0x1f]
  %v1839 = vld [vmem:[%s1837 + $0x8] sm:$0x1f]
  %v1840 = vld [vmem:[%s1837 + $0x10] sm:$0x1f]
  %v1841 = vld [vmem:[%s1837 + $0x18] sm:$0x1f]
  %s1842 = scalar_lea.vmem [#allocation2], 39
  %v1843 = vld [vmem:[%s1842] ss:$8 sm:$0xf]
  %v1845 = vlaneseq
  %v1846 = vshrl.u32 %v1845, 7
  %v1847 = vsub.s32 0, %v1846
  %v1848 = vrot.slane %v1843, %v1847
  %v1849 = vlaneseq
  %v1850 = vshrl.u32 %v1849, 7
  %v1851 = vsub.s32 1, %v1850
  %v1852 = vrot.slane %v1843, %v1851
  %v1853 = vlaneseq
  %v1854 = vshrl.u32 %v1853, 7
  %v1855 = vsub.s32 2, %v1854
  %v1856 = vrot.slane %v1843, %v1855
  %v1857 = vlaneseq
  %v1858 = vshrl.u32 %v1857, 7
  %v1859 = vsub.s32 3, %v1858
  %v1860 = vrot.slane %v1843, %v1859
  %v1865 = vmul.f32 %v1838, %v1848
  %v1866 = vmul.f32 %v1839, %v1852
  %v1867 = vmul.f32 %v1840, %v1856
  %v1868 = vmul.f32 %v1841, %v1860
  %v1869 = vadd.f32 %v1833, %v1865
  %v1870 = vadd.f32 %v1834, %v1866
  %v1871 = vadd.f32 %v1835, %v1867
  %v1872 = vadd.f32 %v1836, %v1868
  %v1873 = vld [vmem:[%s10] sm:$0xff]
  %v1874 = vld [vmem:[%s10 + $0x8] sm:$0xff]
  %v1875 = vld [vmem:[%s10 + $0x10] sm:$0xff]
  %v1876 = vld [vmem:[%s10 + $0x18] sm:$0xff]
  %v1877 = vld [vmem:[%s10 + $0x20] sm:$0xff]
  %v1878 = vld [vmem:[%s10 + $0x28] sm:$0xff]
  %v1879 = vld [vmem:[%s10 + $0x30] sm:$0xff]
  %v1880 = vld [vmem:[%s10 + $0x38] sm:$0xff]
  %v1881 = vld [vmem:[%s10 + $0x40] sm:$0xff]
  %v1882 = vld [vmem:[%s10 + $0x48] sm:$0xff]
  %v1883 = vld [vmem:[%s10 + $0x50] sm:$0xff]
  %v1884 = vld [vmem:[%s10 + $0x58] sm:$0xff]
  %v1885 = vld [vmem:[%s10 + $0x60] sm:$0xff]
  %v1886 = vld [vmem:[%s10 + $0x68] sm:$0xff]
  %v1887 = vld [vmem:[%s10 + $0x70] sm:$0xff]
  %v1888 = vld [vmem:[%s10 + $0x78] sm:$0xff]
  %v1889 = vld [vmem:[%s10 + $0x80] sm:$0xff]
  %v1890 = vld [vmem:[%s10 + $0x88] sm:$0xff]
  %v1891 = vld [vmem:[%s10 + $0x90] sm:$0xff]
  %v1892 = vld [vmem:[%s10 + $0x98] sm:$0xff]
  %v1893 = vld [vmem:[%s10 + $0xa0] sm:$0xff]
  %v1894 = vld [vmem:[%s10 + $0xa8] sm:$0xff]
  %v1895 = vld [vmem:[%s10 + $0xb0] sm:$0xff]
  %v1896 = vld [vmem:[%s10 + $0xb8] sm:$0xff]
  %v1897 = vld [vmem:[%s10 + $0xc0] sm:$0xff]
  %v1898 = vld [vmem:[%s10 + $0xc8] sm:$0xff]
  %v1899 = vld [vmem:[%s10 + $0xd0] sm:$0xff]
  %v1900 = vld [vmem:[%s10 + $0xd8] sm:$0xff]
  %v1901 = vld [vmem:[%s10 + $0xe0] sm:$0xff]
  %v1902 = vld [vmem:[%s10 + $0xe8] sm:$0xff]
  %v1903 = vld [vmem:[%s10 + $0xf0] sm:$0xff]
  %v1904 = vld [vmem:[%s10 + $0xf8] sm:$0xff]
  %v1905 = vld [vmem:[%s10 + $0x100] sm:$0xff]
  %v1906 = vld [vmem:[%s10 + $0x108] sm:$0xff]
  %v1907 = vld [vmem:[%s10 + $0x110] sm:$0xff]
  %v1908 = vld [vmem:[%s10 + $0x118] sm:$0xff]
  %v1909 = vld [vmem:[%s10 + $0x120] sm:$0xff]
  %v1910 = vld [vmem:[%s10 + $0x128] sm:$0xff]
  %v1911 = vld [vmem:[%s10 + $0x130] sm:$0xff]
  %v1912 = vld [vmem:[%s10 + $0x138] sm:$0xff]
  %v1913 = vld [vmem:[%s10 + $0x140] sm:$0xff]
  %v1914 = vld [vmem:[%s10 + $0x148] sm:$0xff]
  %v1915 = vld [vmem:[%s10 + $0x150] sm:$0xff]
  %v1916 = vld [vmem:[%s10 + $0x158] sm:$0xff]
  %v1917 = vld [vmem:[%s10 + $0x160] sm:$0xff]
  %v1918 = vld [vmem:[%s10 + $0x168] sm:$0xff]
  %v1919 = vld [vmem:[%s10 + $0x170] sm:$0xff]
  %v1920 = vld [vmem:[%s10 + $0x178] sm:$0xff]
  %v1921 = vld [vmem:[%s10 + $0x180] sm:$0xff]
  %v1922 = vld [vmem:[%s10 + $0x188] sm:$0xff]
  %v1923 = vld [vmem:[%s10 + $0x190] sm:$0xff]
  %v1924 = vld [vmem:[%s10 + $0x198] sm:$0xff]
  %v1925 = vld [vmem:[%s10 + $0x1a0] sm:$0xff]
  %v1926 = vld [vmem:[%s10 + $0x1a8] sm:$0xff]
  %v1927 = vld [vmem:[%s10 + $0x1b0] sm:$0xff]
  %v1928 = vld [vmem:[%s10 + $0x1b8] sm:$0xff]
  %v1929 = vld [vmem:[%s10 + $0x1c0] sm:$0xff]
  %v1930 = vld [vmem:[%s10 + $0x1c8] sm:$0xff]
  %v1931 = vld [vmem:[%s10 + $0x1d0] sm:$0xff]
  %v1932 = vld [vmem:[%s10 + $0x1d8] sm:$0xff]
  %v1933 = vld [vmem:[%s10 + $0x1e0] sm:$0xff]
  %v1934 = vld [vmem:[%s10 + $0x1e8] sm:$0xff]
  %v1935 = vld [vmem:[%s10 + $0x1f0] sm:$0xff]
  %v1936 = vld [vmem:[%s10 + $0x1f8] sm:$0xff]
  %v1937 = vld [vmem:[%s9] sm:$0x1f]
  %1939 = vset.pattern.permute.xlu0 0
  %1940 = vperm.xlu0 %1939, %v1937
  %v1941 = vpop.permute.xlu0 %1940
  %1943 = vmatprep.subr.mxu0 0.0
  %1944 = vmatpush1.msra.mxu0 %v1873
  %1945 = vmatprep.subr.mxu0 0.0
  %1946 = vmatpush1.msra.mxu0 %v1874
  %1947 = vmatprep.subr.mxu0 0.0
  %1948 = vmatpush1.msra.mxu0 %v1875
  %1949 = vmatprep.subr.mxu0 0.0
  %1950 = vmatpush1.msra.mxu0 %v1876
  %1951 = vmatprep.subr.mxu0 0.0
  %1952 = vmatpush1.msra.mxu0 %v1877
  %1953 = vmatprep.subr.mxu0 0.0
  %1954 = vmatpush1.msra.mxu0 %v1878
  %1955 = vmatprep.subr.mxu0 0.0
  %1956 = vmatpush1.msra.mxu0 %v1879
  %1957 = vmatprep.subr.mxu0 0.0
  %1958 = vmatpush1.msra.mxu0 %v1880
  %1959 = vmatprep.subr.mxu0 0.0
  %1960 = vmatpush1.msra.mxu0 %v1881
  %1961 = vmatprep.subr.mxu0 0.0
  %1962 = vmatpush1.msra.mxu0 %v1882
  %1963 = vmatprep.subr.mxu0 0.0
  %1964 = vmatpush1.msra.mxu0 %v1883
  %1965 = vmatprep.subr.mxu0 0.0
  %1966 = vmatpush1.msra.mxu0 %v1884
  %1967 = vmatprep.subr.mxu0 0.0
  %1968 = vmatpush1.msra.mxu0 %v1885
  %1969 = vmatprep.subr.mxu0 0.0
  %1970 = vmatpush1.msra.mxu0 %v1886
  %1971 = vmatprep.subr.mxu0 0.0
  %1972 = vmatpush1.msra.mxu0 %v1887
  %1973 = vmatprep.subr.mxu0 0.0
  %1974 = vmatpush1.msra.mxu0 %v1888
  %1975 = vmatprep.subr.mxu0 0.0
  %1976 = vmatpush1.msra.mxu0 %v1889
  %1977 = vmatprep.subr.mxu0 0.0
  %1978 = vmatpush1.msra.mxu0 %v1890
  %1979 = vmatprep.subr.mxu0 0.0
  %1980 = vmatpush1.msra.mxu0 %v1891
  %1981 = vmatprep.subr.mxu0 0.0
  %1982 = vmatpush1.msra.mxu0 %v1892
  %1983 = vmatprep.subr.mxu0 0.0
  %1984 = vmatpush1.msra.mxu0 %v1893
  %1985 = vmatprep.subr.mxu0 0.0
  %1986 = vmatpush1.msra.mxu0 %v1894
  %1987 = vmatprep.subr.mxu0 0.0
  %1988 = vmatpush1.msra.mxu0 %v1895
  %1989 = vmatprep.subr.mxu0 0.0
  %1990 = vmatpush1.msra.mxu0 %v1896
  %1991 = vmatprep.subr.mxu0 0.0
  %1992 = vmatpush1.msra.mxu0 %v1897
  %1993 = vmatprep.subr.mxu0 0.0
  %1994 = vmatpush1.msra.mxu0 %v1898
  %1995 = vmatprep.subr.mxu0 0.0
  %1996 = vmatpush1.msra.mxu0 %v1899
  %1997 = vmatprep.subr.mxu0 0.0
  %1998 = vmatpush1.msra.mxu0 %v1900
  %1999 = vmatprep.subr.mxu0 0.0
  %2000 = vmatpush1.msra.mxu0 %v1901
  %2001 = vmatprep.subr.mxu0 0.0
  %2002 = vmatpush1.msra.mxu0 %v1902
  %2003 = vmatprep.subr.mxu0 0.0
  %2004 = vmatpush1.msra.mxu0 %v1903
  %2005 = vmatprep.subr.mxu0 0.0
  %2006 = vmatpush1.msra.mxu0 %v1904
  %2007 = vmatprep.mubr.f32.mxu0 %v1870
  %2008 = vmatmul.mubr.f32.gmra.mrb[0].mxu0 %v1869
  %v2009 = vpop.f32.mrb[0].mxu0
  %v2010 = vadd.f32 %v1941, %v2009
  %v2011 = vpop.f32.mrb[0].mxu0
  %2012 = vdwg.mxu0
  %2013 = vmatprep.subr.mxu0 0.0
  %2014 = vmatpush1.msra.mxu0 %v1905
  %2015 = vmatprep.subr.mxu0 0.0
  %2016 = vmatpush1.msra.mxu0 %v1906
  %2017 = vmatprep.subr.mxu0 0.0
  %2018 = vmatpush1.msra.mxu0 %v1907
  %2019 = vmatprep.subr.mxu0 0.0
  %2020 = vmatpush1.msra.mxu0 %v1908
  %2021 = vmatprep.subr.mxu0 0.0
  %2022 = vmatpush1.msra.mxu0 %v1909
  %2023 = vmatprep.subr.mxu0 0.0
  %2024 = vmatpush1.msra.mxu0 %v1910
  %2025 = vmatprep.subr.mxu0 0.0
  %2026 = vmatpush1.msra.mxu0 %v1911
  %2027 = vmatprep.subr.mxu0 0.0
  %2028 = vmatpush1.msra.mxu0 %v1912
  %2029 = vmatprep.subr.mxu0 0.0
  %2030 = vmatpush1.msra.mxu0 %v1913
  %2031 = vmatprep.subr.mxu0 0.0
  %2032 = vmatpush1.msra.mxu0 %v1914
  %2033 = vmatprep.subr.mxu0 0.0
  %2034 = vmatpush1.msra.mxu0 %v1915
  %2035 = vmatprep.subr.mxu0 0.0
  %2036 = vmatpush1.msra.mxu0 %v1916
  %2037 = vmatprep.subr.mxu0 0.0
  %2038 = vmatpush1.msra.mxu0 %v1917
  %2039 = vmatprep.subr.mxu0 0.0
  %2040 = vmatpush1.msra.mxu0 %v1918
  %2041 = vmatprep.subr.mxu0 0.0
  %2042 = vmatpush1.msra.mxu0 %v1919
  %2043 = vmatprep.subr.mxu0 0.0
  %2044 = vmatpush1.msra.mxu0 %v1920
  %2045 = vmatprep.subr.mxu0 0.0
  %2046 = vmatpush1.msra.mxu0 %v1921
  %2047 = vmatprep.subr.mxu0 0.0
  %2048 = vmatpush1.msra.mxu0 %v1922
  %2049 = vmatprep.subr.mxu0 0.0
  %2050 = vmatpush1.msra.mxu0 %v1923
  %2051 = vmatprep.subr.mxu0 0.0
  %2052 = vmatpush1.msra.mxu0 %v1924
  %2053 = vmatprep.subr.mxu0 0.0
  %2054 = vmatpush1.msra.mxu0 %v1925
  %2055 = vmatprep.subr.mxu0 0.0
  %2056 = vmatpush1.msra.mxu0 %v1926
  %2057 = vmatprep.subr.mxu0 0.0
  %2058 = vmatpush1.msra.mxu0 %v1927
  %2059 = vmatprep.subr.mxu0 0.0
  %2060 = vmatpush1.msra.mxu0 %v1928
  %2061 = vmatprep.subr.mxu0 0.0
  %2062 = vmatpush1.msra.mxu0 %v1929
  %2063 = vmatprep.subr.mxu0 0.0
  %2064 = vmatpush1.msra.mxu0 %v1930
  %2065 = vmatprep.subr.mxu0 0.0
  %2066 = vmatpush1.msra.mxu0 %v1931
  %2067 = vmatprep.subr.mxu0 0.0
  %2068 = vmatpush1.msra.mxu0 %v1932
  %2069 = vmatprep.subr.mxu0 0.0
  %2070 = vmatpush1.msra.mxu0 %v1933
  %2071 = vmatprep.subr.mxu0 0.0
  %2072 = vmatpush1.msra.mxu0 %v1934
  %2073 = vmatprep.subr.mxu0 0.0
  %2074 = vmatpush1.msra.mxu0 %v1935
  %2075 = vmatprep.subr.mxu0 0.0
  %2076 = vmatpush1.msra.mxu0 %v1936
  %2077 = vmatprep.mubr.f32.mxu0 %v1872
  %2078 = vmatmul.mubr.f32.gmra.mrb[0].mxu0 %v1871
  %v2079 = vpop.f32.mrb[0].mxu0
  %v2080 = vadd.f32 %v2010, %v2079
  %v2081 = vpop.f32.mrb[0].mxu0
  %2082 = vdwg.mxu0
  %vm2083 = vcmask 11264
  %v2084 = vsel %vm2083, %v2080, 0.0
  %2085 = vadd.xlane.f32.xlu0 %v2084
  %v2086 = vpop.xlane.xlu0 %2085
  %v2087 = vrot.slane %v2086, 4
  %v2088 = vadd.f32 %v2086, %v2087
  %v2089 = vrot.slane %v2088, 2
  %v2090 = vadd.f32 %v2088, %v2089
  %v2091 = vrot.slane %v2090, 1
  %v2092 = vadd.f32 %v2090, %v2091
  %s2093 = vtos %v2092
  %v2094 = vrcp.pop 8.0
  %s2095 = vtos %v2094
  %s2096 = smul.f32 %s2093, %s2095
  %v2097 = vlaneseq
  %v2098 = vshrl.u32 %v2097, 7
  %v2099 = vsub.s32 4, %v2098
  %v2100 = vrot.slane %v2080, %v2099
  %v2101 = vadd.f32 %v2100, %v2080
  %v2102 = vstv %s2096
  %v2103 = vsub.f32 %v2101, %v2102
  %2104 = vst.msk [vmem:[%s11] sm:$0xf] %vm2083, %v2103
  // Predicated region
  $region46: #{extrinsic_forward.1} parent=0 // pred_check
    _
  $region47: #{extrinsic_forward.1} parent=0 // pred_check_branch
    %2106 = sbr.rel (0) target = $region49
  $region48: #{extrinsic_forward.1} parent=0 // pred_region
    _
  $region49: #{extrinsic_forward.1} parent=0 // pred_fallthru
    _
  // Predicated region
  $region50: #{extrinsic_forward.1} parent=0 // pred_check
    _
  $region51: #{extrinsic_forward.1} parent=0 // pred_check_branch
    %2108 = sbr.rel (0) target = $region53
  $region52: #{extrinsic_forward.1} parent=0 // pred_region
    _
  $region53: #{extrinsic_forward.1} parent=0 // pred_fallthru
    _

</llo_original>
